<compile_context>
chip_gen: v6e
topology: v6e:2x2x1
jax: 0.10.0
libtpu: 0.0.40
codegen_flags: <defaults>
</compile_context>

<pallas_src>
import functools

import jax
import jax.numpy as jnp
import numpy as np
from jax import lax
from jax.experimental import pallas as pl
from jax.experimental.pallas import tpu as pltpu

EPS = 1e-5  # nn.BatchNorm2d default


# --------------------------- generation-aware knobs ------------------------- #

@functools.lru_cache(maxsize=1)
def _hw_config():
    kind = ""
    try:
        kind = jax.devices()[0].device_kind.lower()
    except Exception:
        pass
    if "v5 lite" in kind or "v5e" in kind or "v5lite" in kind:
        # v5e: 128-wide MXU, 1 vst slot, no bf16 VALU -> smaller acc tiles.
        return {"tn_cap": 128, "target_rows": 256, "vmem": 100 * 1024 * 1024}
    if "v6" in kind:
        return {"tn_cap": 256, "target_rows": 512, "vmem": 100 * 1024 * 1024}
    # v7x (64 MiB physical VMEM) and anything unrecognized: conservative limit.
    return {"tn_cap": 256, "target_rows": 512, "vmem": 48 * 1024 * 1024}


def _pick_tn(cout, cap):
    """Cout tile: a divisor of cout, multiple of 128 when tiling, else full."""
    if cout <= cap:
        return cout
    for t in (256, 128):
        if t <= cap and cout % t == 0:
            return t
    return cout  # fall back to full Cout (keeps (8,128) layout legality)


def _pick_ti(n, rows, target_rows):
    """Images folded into one M block (rows = oh*ow per image)."""
    if rows % 8 != 0:
        return n                      # full batch per block -> full-dim block
    best = 1
    for ti in range(1, n + 1):
        if n % ti == 0 and ti * rows <= target_rows and n // ti >= min(2, n):
            best = ti
    return best


def _pick_tm(m, target):
    for t in range(min(m, target), 0, -1):
        if m % t == 0 and (t % 8 == 0 or t == m):
            return t
    return m


# ------------------------------ Pallas kernels ------------------------------ #

def _conv_kernel(*refs, ti, rows, cin, tn, stride, oh, ow,
                 with_res, with_stats, out_dtype):
    """Tap-fused 3x3 conv (3 MXU dots with K=3*Cin) over pre-activated phases.

    refs (in order):
      ph_ref   : (ti, n_ph, ph_h, ph_w, cin) bf16   padded/activated phases
      w_ref    : (ncb*3, 3*cin, tn) bf16            VMEM-resident weights
      [res]    : (ti*rows, tn)                       residual (if with_res)
      out      : (ti*rows, tn) out_dtype
      [psum]   : (1, 1, tn) f32   partial BN2 sum    (if with_stats)
      [psqs]   : (1, 1, tn) f32   partial BN2 sum^2  (if with_stats)
      tap_ref  : (3, ti*rows, 3*cin) bf16 VMEM scratch
    """
    it = iter(refs)
    ph_ref = next(it)
    w_ref = next(it)
    res_ref = next(it) if with_res else None
    out_ref = next(it)
    psum_ref = next(it) if with_stats else None
    psqs_ref = next(it) if with_stats else None
    tap_ref = next(it)

    k = pl.program_id(1)              # Cout tile ("arbitrary", innermost)
    rows_blk = ti * rows

    # Build the three (rows_blk, 3*cin) tap matrices once per image block and
    # reuse them for every Cout tile (hoisted out of the k loop).
    @pl.when(k == 0)
    def _build_taps():
        for im in range(ti):
            for ki in range(3):
                for kj in range(3):
                    p = (ki % stride) * stride + (kj % stride)
                    dh = ki // stride
                    dw = kj // stride
                    win = ph_ref[im, p, dh:dh + oh, dw:dw + ow, :]
                    tap_ref[ki,
                            im * rows:(im + 1) * rows,
                            kj * cin:(kj + 1) * cin] = win.reshape(rows, cin)

    # 3 dots with K = 3*cin (instead of 9 dots with K = cin): bf16 MXU, f32 acc.
    acc = jnp.zeros((rows_blk, tn), jnp.float32)
    for ki in range(3):
        acc = acc + jnp.dot(tap_ref[ki], w_ref[k * 3 + ki],
                            preferred_element_type=jnp.float32)

    if with_res:
        acc = acc + res_ref[...].astype(jnp.float32)   # residual added once

    y = acc.astype(out_dtype)
    out_ref[...] = y

    if with_stats:
        # BN2 partial statistics of the *rounded* output (the exact tensor
        # conv2 will normalize) -> no extra HBM pass, no stats/data mismatch.
        yf = y.astype(jnp.float32)
        psum_ref[...] = jnp.sum(yf, axis=0).reshape(1, 1, tn)
        psqs_ref[...] = jnp.sum(yf * yf, axis=0).reshape(1, 1, tn)


def _shortcut_kernel(a_ref, w_ref, o_ref):
    # 1x1 conv (stride handled by caller-side subsampling) on the already
    # BN1-activated input: plain bf16 MXU matmul, f32 out.
    o_ref[...] = jnp.dot(a_ref[...], w_ref[...],
                         preferred_element_type=jnp.float32)


# ----------------------------- kernel wrappers ------------------------------ #

def conv3x3(phases, w_k3, *, stride, n, oh, ow, cin, cout,
            residual=None, with_stats=False, out_dtype=jnp.float32):
    """3x3 conv over pre-activated phase images [+ residual] [+ BN stats].

    phases  : (n, stride*stride, ph_h, ph_w, cin) bf16, padded & activated
    w_k3    : (3, 3*cin, cout) bf16, tap-row-major weights
    residual: optional (n*oh*ow, cout), added after the last tap
    Returns (out,) or (out, psum, psqs).
    """
    cfg = _hw_config()
    rows = oh * ow
    ti = _pick_ti(n, rows, cfg["target_rows"])
    tn = _pick_tn(cout, cfg["tn_cap"])
    nib = n // ti
    ncb = cout // tn
    rows_blk = ti * rows
    n_ph = stride * stride
    ph_h, ph_w = phases.shape[2], phases.shape[3]
    k3 = 3 * cin
    m = n * rows

    # Weights laid out so the Cout tile is a *leading* index: (ncb*3, 3*cin, tn)
    # -> one constant-index resident block, dynamic leading-dim slice in-kernel.
    w_res = (w_k3.reshape(3, k3, ncb, tn)
             .transpose(2, 0, 1, 3)
             .reshape(ncb * 3, k3, tn)).astype(jnp.bfloat16)

    kernel = functools.partial(
        _conv_kernel, ti=ti, rows=rows, cin=cin, tn=tn, stride=stride,
        oh=oh, ow=ow, with_res=residual is not None, with_stats=with_stats,
        out_dtype=out_dtype)

    in_specs = [
        pl.BlockSpec((ti, n_ph, ph_h, ph_w, cin), lambda i, k: (i, 0, 0, 0, 0)),
        pl.BlockSpec((ncb * 3, k3, tn), lambda i, k: (0, 0, 0)),   # resident
    ]
    inputs = [phases, w_res]
    if residual is not None:
        in_specs.append(pl.BlockSpec((rows_blk, tn), lambda i, k: (i, k)))
        inputs.append(residual)

    out_shape = [jax.ShapeDtypeStruct((m, cout), out_dtype)]
    out_specs = [pl.BlockSpec((rows_blk, tn), lambda i, k: (i, k))]
    if with_stats:
        out_shape += [jax.ShapeDtypeStruct((nib, 1, cout), jnp.float32)] * 2
        out_specs += [pl.BlockSpec((1, 1, tn), lambda i, k: (i, 0, k))] * 2

    return pl.pallas_call(
        kernel,
        out_shape=tuple(out_shape),
        grid_spec=pltpu.PrefetchScalarGridSpec(
            num_scalar_prefetch=0,
            grid=(nib, ncb),
            in_specs=in_specs,
            out_specs=tuple(out_specs),
            scratch_shapes=[pltpu.VMEM((3, rows_blk, k3), jnp.bfloat16)]),
        compiler_params=pltpu.CompilerParams(
            dimension_semantics=("parallel", "arbitrary"),
            vmem_limit_bytes=cfg["vmem"]),
    )(*inputs)


def shortcut_1x1(a2d, wsc, *, n, oh, ow, cin, cout):
    """a2d: (n*oh*ow, cin) bf16 already BN1-activated & spatially subsampled."""
    cfg = _hw_config()
    m = n * oh * ow
    tn = _pick_tn(cout, cfg["tn_cap"])
    tm = _pick_tm(m, cfg["target_rows"])
    return pl.pallas_call(
        _shortcut_kernel,
        out_shape=jax.ShapeDtypeStruct((m, cout), jnp.float32),
        grid_spec=pltpu.PrefetchScalarGridSpec(
            num_scalar_prefetch=0,
            grid=(m // tm, cout // tn),
            in_specs=[pl.BlockSpec((tm, cin), lambda i, k: (i, 0)),
                      pl.BlockSpec((cin, tn), lambda i, k: (0, k))],
            out_specs=pl.BlockSpec((tm, tn), lambda i, k: (i, k))),
        compiler_params=pltpu.CompilerParams(
            dimension_semantics=("parallel", "arbitrary"),
            vmem_limit_bytes=cfg["vmem"]),
    )(a2d, wsc.astype(jnp.bfloat16))


# ------------------------------- JAX glue ----------------------------------- #

def _make_phases(a_nhwc, stride):
    """Pad spatially by 1 and split into stride*stride unit-stride phases.

    Returns (n, stride*stride, oh + 2//stride, ow + 2//stride, c) in bf16.
    Total bytes ~ padded input (no im2col duplication); XLA fuses the caller's
    BN affine + ReLU into this pass, so there is no extra HBM round trip."""
    n, h, w, c = a_nhwc.shape
    oh = (h - 1) // stride + 1
    ow = (w - 1) // stride + 1
    ph_h = oh + 2 // stride
    ph_w = ow + 2 // stride
    up = jnp.pad(a_nhwc.astype(jnp.bfloat16), ((0, 0), (1, 1), (1, 1), (0, 0)))
    phases = []
    for rh in range(stride):
        for rw in range(stride):
            p = up[:, rh::stride, rw::stride, :]
            p = p[:, :ph_h, :ph_w, :]
            pad_h = ph_h - p.shape[1]
            pad_w = ph_w - p.shape[2]
            if pad_h or pad_w:
                p = jnp.pad(p, ((0, 0), (0, pad_h), (0, pad_w), (0, 0)))
            phases.append(p)
    return jnp.stack(phases, axis=1), oh, ow       # (n, s*s, ph_h, ph_w, c)


def prepare_params(params):
    """One-time weight preprocessing (hoisted out of the forward): layout + bf16."""
    def conv_k3(w):  # (Cout, Cin, 3, 3) -> (3, 3*Cin, Cout) bf16, tap-row-major
        cout, cin = w.shape[0], w.shape[1]
        return (jnp.transpose(w, (2, 3, 1, 0))       # (kh, kw, Cin, Cout)
                .reshape(3, 3 * cin, cout).astype(jnp.bfloat16))

    prep = {
        "gamma1": params["gamma1"].astype(jnp.float32),
        "beta1": params["beta1"].astype(jnp.float32),
        "gamma2": params["gamma2"].astype(jnp.float32),
        "beta2": params["beta2"].astype(jnp.float32),
        "w1k": conv_k3(params["w1"]),
        "w2k": conv_k3(params["w2"]),
    }
    if "wsc" in params:
        cout, cin = params["wsc"].shape[:2]
        prep["wsc"] = params["wsc"].reshape(cout, cin).T.astype(jnp.bfloat16)
    return prep


# --------------------------- BasicBlock forward ----------------------------- #

def basic_block_forward(x_nchw, prep, *, stride, equal_in_out, drop_rate=0.0):
    x = jnp.transpose(x_nchw, (0, 2, 3, 1)).astype(jnp.float32)      # NHWC
    n, h, w, cin = x.shape
    cout = prep["w1k"].shape[-1]

    # ---- BN1 (training-mode batch stats) + ReLU, applied directly (no
    #      shift/scale-fold division); fused by XLA into the phase build.
    mean1 = jnp.mean(x, axis=(0, 1, 2))
    var1 = jnp.var(x, axis=(0, 1, 2))
    scale1 = prep["gamma1"] * lax.rsqrt(var1 + EPS)
    shift1 = prep["beta1"] - mean1 * scale1
    a1 = jnp.maximum(x * scale1 + shift1, 0.0)

    # ---- conv1: 3x3/stride, fused BN2 partial stats -------------------------
    ph1, oh, ow = _make_phases(a1, stride)
    y1, psum, psqs = conv3x3(
        ph1, prep["w1k"], stride=stride, n=n, oh=oh, ow=ow, cin=cin, cout=cout,
        residual=None, with_stats=True, out_dtype=jnp.bfloat16)
    m1 = n * oh * ow

    # ---- BN2 statistics from the fused per-block partial sums ---------------
    s1 = jnp.sum(psum, axis=(0, 1))
    s2 = jnp.sum(psqs, axis=(0, 1))
    mean2 = s1 / m1
    var2 = jnp.maximum(s2 / m1 - mean2 * mean2, 0.0)
    scale2 = prep["gamma2"] * lax.rsqrt(var2 + EPS)
    shift2 = prep["beta2"] - mean2 * scale2

    # TODO(synk): F.dropout for drop_rate > 0 not implemented (module default 0.0).

    # ---- shortcut branch -----------------------------------------------------
    if equal_in_out:
        assert stride == 1, "identity shortcut requires stride == 1"
        res = x.reshape(m1, cout)                      # raw input (pre-BN), f32
    else:
        a1_sub = a1[:, ::stride, ::stride, :].reshape(m1, cin).astype(jnp.bfloat16)
        res = shortcut_1x1(a1_sub, prep["wsc"],
                           n=n, oh=oh, ow=ow, cin=cin, cout=cout)

    # ---- conv2: 3x3/1, BN2 affine+ReLU fused into the phase build, residual
    #      added inside the kernel --------------------------------------------
    a2 = jnp.maximum(
        y1.astype(jnp.float32).reshape(n, oh, ow, cout) * scale2 + shift2, 0.0)
    ph2, _, _ = _make_phases(a2, 1)
    out, = conv3x3(
        ph2, prep["w2k"], stride=1, n=n, oh=oh, ow=ow, cin=cout, cout=cout,
        residual=res, with_stats=False, out_dtype=jnp.float32)

    out = out.reshape(n, oh, ow, cout)
    return jnp.transpose(out, (0, 3, 1, 2))            # back to NCHW


# ------------------------- pure-JAX reference check ------------------------- #

def reference_forward(x_nchw, params, stride, equal_in_out):
    x = jnp.transpose(x_nchw, (0, 2, 3, 1)).astype(jnp.float32)

    def bn_relu(y, gamma, beta):
        mean = jnp.mean(y, axis=(0, 1, 2))
        var = jnp.var(y, axis=(0, 1, 2))
        return jnp.maximum((y - mean) / jnp.sqrt(var + EPS) * gamma + beta, 0.0)

    def conv(y, w_oihw, s):
        kh = w_oihw.shape[2]
        wk = jnp.transpose(w_oihw, (2, 3, 1, 0))  # HWIO
        pad = ((1, 1), (1, 1)) if kh == 3 else ((0, 0), (0, 0))
        return lax.conv_general_dilated(
            y, wk, (s, s), pad, dimension_numbers=("NHWC", "HWIO", "NHWC"),
            precision=lax.Precision.HIGHEST)

    xa = bn_relu(x, params["gamma1"], params["beta1"])
    out = conv(xa, params["w1"], stride)
    out = bn_relu(out, params["gamma2"], params["beta2"])
    out = conv(out, params["w2"], 1)
    short = x if equal_in_out else conv(xa, params["wsc"], stride)
    return jnp.transpose(out + short, (0, 3, 1, 2))


# ---------------------------------- main ------------------------------------ #

if __name__ == "__main__":
    def run_case(key, in_planes, out_planes, stride, n=2, hw=16):
        equal_in_out = in_planes == out_planes
        k = jax.random.split(key, 8)
        params = {
            "gamma1": 1.0 + 0.1 * jax.random.normal(k[0], (in_planes,), jnp.float32),
            "beta1": 0.1 * jax.random.normal(k[1], (in_planes,), jnp.float32),
            "w1": 0.1 * jax.random.normal(k[2], (out_planes, in_planes, 3, 3), jnp.float32),
            "gamma2": 1.0 + 0.1 * jax.random.normal(k[3], (out_planes,), jnp.float32),
            "beta2": 0.1 * jax.random.normal(k[4], (out_planes,), jnp.float32),
            "w2": 0.1 * jax.random.normal(k[5], (out_planes, out_planes, 3, 3), jnp.float32),
        }
        if not equal_in_out:
            params["wsc"] = 0.1 * jax.random.normal(
                k[6], (out_planes, in_planes, 1, 1), jnp.float32)
        x = jax.random.normal(k[7], (n, in_planes, hw, hw), jnp.float32)  # NCHW

        prep = prepare_params(params)        # hoisted out of the jitted forward
        fwd = jax.jit(functools.partial(basic_block_forward,
                                        stride=stride, equal_in_out=equal_in_out))
        out = fwd(x, prep)
        jax.block_until_ready(out)

        ref = reference_forward(x, params, stride, equal_in_out)
        # bf16 MXU operands (f32 accumulation) -> modest tolerance vs f32 reference.
        np.testing.assert_allclose(np.asarray(out), np.asarray(ref),
                                   rtol=2e-2, atol=2e-2)
        oh = (hw - 1) // stride + 1
        assert out.shape == (n, out_planes, oh, oh)

    key = jax.random.PRNGKey(0)
    k1, k2 = jax.random.split(key)
    # Down-sampling block: in != out, stride 2 (exercises convShortcut path).
    run_case(k1, in_planes=4, out_planes=8, stride=2)
    # Identity block: in == out, stride 1 (identity shortcut path).
    run_case(k2, in_planes=8, out_planes=8, stride=1)

    print("KERNEL_OK")
</pallas_src>

<mosaic_0001>
module attributes {stable_mosaic.version = 11 : i64} {
  func.func @_shortcut_kernel(%arg0: i32, %arg1: i32, %arg2: memref<128x4xbf16, #tpu.memory_space<vmem>>, %arg3: memref<4x8xbf16, #tpu.memory_space<vmem>>, %arg4: memref<128x8xf32, #tpu.memory_space<vmem>>) attributes {dimension_semantics = [#tpu.dimension_semantics<parallel>, #tpu.dimension_semantics<arbitrary>], iteration_bounds = array<i64: 1, 1>, scalar_prefetch = 0 : i64, scratch_operands = 0 : i64, tpu.core_type = #tpu.core_type<tc>, window_params = [{transform_indices = @transform_0, window_bounds = array<i64: 128, 4>}, {transform_indices = @transform_1, window_bounds = array<i64: 4, 8>}, {transform_indices = @transform_2, window_bounds = array<i64: 128, 8>}]} {
    %c0 = arith.constant 0 : index
    %c0_0 = arith.constant 0 : index
    %0 = vector.load %arg2[%c0, %c0_0] : memref<128x4xbf16, #tpu.memory_space<vmem>>, vector<128x4xbf16>
    %c0_1 = arith.constant 0 : index
    %c0_2 = arith.constant 0 : index
    %1 = vector.load %arg3[%c0_1, %c0_2] : memref<4x8xbf16, #tpu.memory_space<vmem>>, vector<4x8xbf16>
    %cst = arith.constant dense<0.000000e+00> : vector<128x8xf32>
    %2 = tpu.matmul %0, %1, %cst {dimension_numbers = #tpu.dot_dimension_numbers<[1], [0], [0], [1], [0, 0, 1, 1], [], []>} : vector<128x4xbf16>, vector<4x8xbf16>, vector<128x8xf32> -> vector<128x8xf32>
    %c0_3 = arith.constant 0 : index
    %c0_4 = arith.constant 0 : index
    %3 = vector.load %arg4[%c0_3, %c0_4] : memref<128x8xf32, #tpu.memory_space<vmem>>, vector<128x8xf32>
    tpu.vector_store %arg4[%c0_3, %c0_4], %2 {strides = array<i32>} : memref<128x8xf32, #tpu.memory_space<vmem>>, vector<128x8xf32>,
    return
  }
  func.func @transform_0(%arg0: i32, %arg1: i32) -> (i32, i32) {
    %c0_i32 = arith.constant 0 : i32
    %c0_i32_0 = arith.constant 0 : i32
    return %arg0, %c0_i32 : i32, i32
  }
  func.func @transform_1(%arg0: i32, %arg1: i32) -> (i32, i32) {
    %c0_i32 = arith.constant 0 : i32
    %c0_i32_0 = arith.constant 0 : i32
    return %c0_i32, %arg1 : i32, i32
  }
  func.func @transform_2(%arg0: i32, %arg1: i32) -> (i32, i32) {
    %c0_i32 = arith.constant 0 : i32
    return %arg0, %arg1 : i32, i32
  }
}

module attributes {stable_mosaic.version = 11 : i64} {
  func.func @_conv_kernel(%arg0: i32, %arg1: i32, %arg2: memref<1x4x9x9x4xbf16, #tpu.memory_space<vmem>>, %arg3: memref<3x12x8xbf16, #tpu.memory_space<vmem>>, %arg4: memref<64x8xbf16, #tpu.memory_space<vmem>>, %arg5: memref<1x1x8xf32, #tpu.memory_space<vmem>>, %arg6: memref<1x1x8xf32, #tpu.memory_space<vmem>>, %arg7: memref<3x64x12xbf16, #tpu.memory_space<vmem>>) attributes {dimension_semantics = [#tpu.dimension_semantics<parallel>, #tpu.dimension_semantics<arbitrary>], iteration_bounds = array<i64: 2, 1>, scalar_prefetch = 0 : i64, scratch_operands = 1 : i64, tpu.core_type = #tpu.core_type<tc>, window_params = [{transform_indices = @transform_0, window_bounds = array<i64: 1, 4, 9, 9, 4>}, {pipeline_mode = #tpu.pipeline_mode<synchronous>, transform_indices = @transform_1, window_bounds = array<i64: 3, 12, 8>}, {transform_indices = @transform_2, window_bounds = array<i64: 64, 8>}, {transform_indices = @transform_3, window_bounds = array<i64: 1, 1, 8>}, {transform_indices = @transform_4, window_bounds = array<i64: 1, 1, 8>}]} {
    %c0_i32 = arith.constant 0 : i32
    %0 = arith.cmpi eq, %arg1, %c0_i32 : i32
    %1 = arith.extui %0 : i1 to i32
    %c0_i32_0 = arith.constant 0 : i32
    %2 = arith.cmpi ne, %1, %c0_i32_0 : i32
    scf.if %2 {
      %c0_29 = arith.constant 0 : index
      %c0_30 = arith.constant 0 : index
      %c0_31 = arith.constant 0 : index
      %c0_32 = arith.constant 0 : index
      %c0_33 = arith.constant 0 : index
      %41 = vector.load %arg2[%c0_29, %c0_30, %c0_31, %c0_32, %c0_33] : memref<1x4x9x9x4xbf16, #tpu.memory_space<vmem>>, vector<1x1x8x8x4xbf16>
      %42 = vector.shape_cast %41 : vector<1x1x8x8x4xbf16> to vector<8x8x4xbf16>
      %43 = vector.shape_cast %42 : vector<8x8x4xbf16> to vector<64x4xbf16>
      %c0_34 = arith.constant 0 : index
      %c0_35 = arith.constant 0 : index
      %c0_36 = arith.constant 0 : index
      %44 = vector.load %arg7[%c0_34, %c0_35, %c0_36] : memref<3x64x12xbf16, #tpu.memory_space<vmem>>, vector<1x64x4xbf16>
      %45 = vector.shape_cast %44 : vector<1x64x4xbf16> to vector<64x4xbf16>
      %46 = vector.shape_cast %43 : vector<64x4xbf16> to vector<1x64x4xbf16>
      tpu.vector_store %arg7[%c0_34, %c0_35, %c0_36], %46 {strides = array<i32>} : memref<3x64x12xbf16, #tpu.memory_space<vmem>>, vector<1x64x4xbf16>,
      %c0_37 = arith.constant 0 : index
      %c1_38 = arith.constant 1 : index
      %c0_39 = arith.constant 0 : index
      %c0_40 = arith.constant 0 : index
      %c0_41 = arith.constant 0 : index
      %47 = vector.load %arg2[%c0_37, %c1_38, %c0_39, %c0_40, %c0_41] : memref<1x4x9x9x4xbf16, #tpu.memory_space<vmem>>, vector<1x1x8x8x4xbf16>
      %48 = vector.shape_cast %47 : vector<1x1x8x8x4xbf16> to vector<8x8x4xbf16>
      %49 = vector.shape_cast %48 : vector<8x8x4xbf16> to vector<64x4xbf16>
      %c0_42 = arith.constant 0 : index
      %c0_43 = arith.constant 0 : index
      %c4 = arith.constant 4 : index
      %50 = vector.load %arg7[%c0_42, %c0_43, %c4] : memref<3x64x12xbf16, #tpu.memory_space<vmem>>, vector<1x64x4xbf16>
      %51 = vector.shape_cast %50 : vector<1x64x4xbf16> to vector<64x4xbf16>
      %52 = vector.shape_cast %49 : vector<64x4xbf16> to vector<1x64x4xbf16>
      tpu.vector_store %arg7[%c0_42, %c0_43, %c4], %52 {strides = array<i32>} : memref<3x64x12xbf16, #tpu.memory_space<vmem>>, vector<1x64x4xbf16>,
      %c0_44 = arith.constant 0 : index
      %c0_45 = arith.constant 0 : index
      %c0_46 = arith.constant 0 : index
      %c1_47 = arith.constant 1 : index
      %c0_48 = arith.constant 0 : index
      %53 = vector.load %arg2[%c0_44, %c0_45, %c0_46, %c1_47, %c0_48] : memref<1x4x9x9x4xbf16, #tpu.memory_space<vmem>>, vector<1x1x8x8x4xbf16>
      %54 = vector.shape_cast %53 : vector<1x1x8x8x4xbf16> to vector<8x8x4xbf16>
      %55 = vector.shape_cast %54 : vector<8x8x4xbf16> to vector<64x4xbf16>
      %c0_49 = arith.constant 0 : index
      %c0_50 = arith.constant 0 : index
      %c8 = arith.constant 8 : index
      %56 = vector.load %arg7[%c0_49, %c0_50, %c8] : memref<3x64x12xbf16, #tpu.memory_space<vmem>>, vector<1x64x4xbf16>
      %57 = vector.shape_cast %56 : vector<1x64x4xbf16> to vector<64x4xbf16>
      %58 = vector.shape_cast %55 : vector<64x4xbf16> to vector<1x64x4xbf16>
      tpu.vector_store %arg7[%c0_49, %c0_50, %c8], %58 {strides = array<i32>} : memref<3x64x12xbf16, #tpu.memory_space<vmem>>, vector<1x64x4xbf16>,
      %c0_51 = arith.constant 0 : index
      %c2_52 = arith.constant 2 : index
      %c0_53 = arith.constant 0 : index
      %c0_54 = arith.constant 0 : index
      %c0_55 = arith.constant 0 : index
      %59 = vector.load %arg2[%c0_51, %c2_52, %c0_53, %c0_54, %c0_55] : memref<1x4x9x9x4xbf16, #tpu.memory_space<vmem>>, vector<1x1x8x8x4xbf16>
      %60 = vector.shape_cast %59 : vector<1x1x8x8x4xbf16> to vector<8x8x4xbf16>
      %61 = vector.shape_cast %60 : vector<8x8x4xbf16> to vector<64x4xbf16>
      %c1_56 = arith.constant 1 : index
      %c0_57 = arith.constant 0 : index
      %c0_58 = arith.constant 0 : index
      %62 = vector.load %arg7[%c1_56, %c0_57, %c0_58] : memref<3x64x12xbf16, #tpu.memory_space<vmem>>, vector<1x64x4xbf16>
      %63 = vector.shape_cast %62 : vector<1x64x4xbf16> to vector<64x4xbf16>
      %64 = vector.shape_cast %61 : vector<64x4xbf16> to vector<1x64x4xbf16>
      tpu.vector_store %arg7[%c1_56, %c0_57, %c0_58], %64 {strides = array<i32>} : memref<3x64x12xbf16, #tpu.memory_space<vmem>>, vector<1x64x4xbf16>,
      %c0_59 = arith.constant 0 : index
      %c3 = arith.constant 3 : index
      %c0_60 = arith.constant 0 : index
      %c0_61 = arith.constant 0 : index
      %c0_62 = arith.constant 0 : index
      %65 = vector.load %arg2[%c0_59, %c3, %c0_60, %c0_61, %c0_62] : memref<1x4x9x9x4xbf16, #tpu.memory_space<vmem>>, vector<1x1x8x8x4xbf16>
      %66 = vector.shape_cast %65 : vector<1x1x8x8x4xbf16> to vector<8x8x4xbf16>
      %67 = vector.shape_cast %66 : vector<8x8x4xbf16> to vector<64x4xbf16>
      %c1_63 = arith.constant 1 : index
      %c0_64 = arith.constant 0 : index
      %c4_65 = arith.constant 4 : index
      %68 = vector.load %arg7[%c1_63, %c0_64, %c4_65] : memref<3x64x12xbf16, #tpu.memory_space<vmem>>, vector<1x64x4xbf16>
      %69 = vector.shape_cast %68 : vector<1x64x4xbf16> to vector<64x4xbf16>
      %70 = vector.shape_cast %67 : vector<64x4xbf16> to vector<1x64x4xbf16>
      tpu.vector_store %arg7[%c1_63, %c0_64, %c4_65], %70 {strides = array<i32>} : memref<3x64x12xbf16, #tpu.memory_space<vmem>>, vector<1x64x4xbf16>,
      %c0_66 = arith.constant 0 : index
      %c2_67 = arith.constant 2 : index
      %c0_68 = arith.constant 0 : index
      %c1_69 = arith.constant 1 : index
      %c0_70 = arith.constant 0 : index
      %71 = vector.load %arg2[%c0_66, %c2_67, %c0_68, %c1_69, %c0_70] : memref<1x4x9x9x4xbf16, #tpu.memory_space<vmem>>, vector<1x1x8x8x4xbf16>
      %72 = vector.shape_cast %71 : vector<1x1x8x8x4xbf16> to vector<8x8x4xbf16>
      %73 = vector.shape_cast %72 : vector<8x8x4xbf16> to vector<64x4xbf16>
      %c1_71 = arith.constant 1 : index
      %c0_72 = arith.constant 0 : index
      %c8_73 = arith.constant 8 : index
      %74 = vector.load %arg7[%c1_71, %c0_72, %c8_73] : memref<3x64x12xbf16, #tpu.memory_space<vmem>>, vector<1x64x4xbf16>
      %75 = vector.shape_cast %74 : vector<1x64x4xbf16> to vector<64x4xbf16>
      %76 = vector.shape_cast %73 : vector<64x4xbf16> to vector<1x64x4xbf16>
      tpu.vector_store %arg7[%c1_71, %c0_72, %c8_73], %76 {strides = array<i32>} : memref<3x64x12xbf16, #tpu.memory_space<vmem>>, vector<1x64x4xbf16>,
      %c0_74 = arith.constant 0 : index
      %c0_75 = arith.constant 0 : index
      %c1_76 = arith.constant 1 : index
      %c0_77 = arith.constant 0 : index
      %c0_78 = arith.constant 0 : index
      %77 = vector.load %arg2[%c0_74, %c0_75, %c1_76, %c0_77, %c0_78] : memref<1x4x9x9x4xbf16, #tpu.memory_space<vmem>>, vector<1x1x8x8x4xbf16>
      %78 = vector.shape_cast %77 : vector<1x1x8x8x4xbf16> to vector<8x8x4xbf16>
      %79 = vector.shape_cast %78 : vector<8x8x4xbf16> to vector<64x4xbf16>
      %c2_79 = arith.constant 2 : index
      %c0_80 = arith.constant 0 : index
      %c0_81 = arith.constant 0 : index
      %80 = vector.load %arg7[%c2_79, %c0_80, %c0_81] : memref<3x64x12xbf16, #tpu.memory_space<vmem>>, vector<1x64x4xbf16>
      %81 = vector.shape_cast %80 : vector<1x64x4xbf16> to vector<64x4xbf16>
      %82 = vector.shape_cast %79 : vector<64x4xbf16> to vector<1x64x4xbf16>
      tpu.vector_store %arg7[%c2_79, %c0_80, %c0_81], %82 {strides = array<i32>} : memref<3x64x12xbf16, #tpu.memory_space<vmem>>, vector<1x64x4xbf16>,
      %c0_82 = arith.constant 0 : index
      %c1_83 = arith.constant 1 : index
      %c1_84 = arith.constant 1 : index
      %c0_85 = arith.constant 0 : index
      %c0_86 = arith.constant 0 : index
      %83 = vector.load %arg2[%c0_82, %c1_83, %c1_84, %c0_85, %c0_86] : memref<1x4x9x9x4xbf16, #tpu.memory_space<vmem>>, vector<1x1x8x8x4xbf16>
      %84 = vector.shape_cast %83 : vector<1x1x8x8x4xbf16> to vector<8x8x4xbf16>
      %85 = vector.shape_cast %84 : vector<8x8x4xbf16> to vector<64x4xbf16>
      %c2_87 = arith.constant 2 : index
      %c0_88 = arith.constant 0 : index
      %c4_89 = arith.constant 4 : index
      %86 = vector.load %arg7[%c2_87, %c0_88, %c4_89] : memref<3x64x12xbf16, #tpu.memory_space<vmem>>, vector<1x64x4xbf16>
      %87 = vector.shape_cast %86 : vector<1x64x4xbf16> to vector<64x4xbf16>
      %88 = vector.shape_cast %85 : vector<64x4xbf16> to vector<1x64x4xbf16>
      tpu.vector_store %arg7[%c2_87, %c0_88, %c4_89], %88 {strides = array<i32>} : memref<3x64x12xbf16, #tpu.memory_space<vmem>>, vector<1x64x4xbf16>,
      %c0_90 = arith.constant 0 : index
      %c0_91 = arith.constant 0 : index
      %c1_92 = arith.constant 1 : index
      %c1_93 = arith.constant 1 : index
      %c0_94 = arith.constant 0 : index
      %89 = vector.load %arg2[%c0_90, %c0_91, %c1_92, %c1_93, %c0_94] : memref<1x4x9x9x4xbf16, #tpu.memory_space<vmem>>, vector<1x1x8x8x4xbf16>
      %90 = vector.shape_cast %89 : vector<1x1x8x8x4xbf16> to vector<8x8x4xbf16>
      %91 = vector.shape_cast %90 : vector<8x8x4xbf16> to vector<64x4xbf16>
      %c2_95 = arith.constant 2 : index
      %c0_96 = arith.constant 0 : index
      %c8_97 = arith.constant 8 : index
      %92 = vector.load %arg7[%c2_95, %c0_96, %c8_97] : memref<3x64x12xbf16, #tpu.memory_space<vmem>>, vector<1x64x4xbf16>
      %93 = vector.shape_cast %92 : vector<1x64x4xbf16> to vector<64x4xbf16>
      %94 = vector.shape_cast %91 : vector<64x4xbf16> to vector<1x64x4xbf16>
      tpu.vector_store %arg7[%c2_95, %c0_96, %c8_97], %94 {strides = array<i32>} : memref<3x64x12xbf16, #tpu.memory_space<vmem>>, vector<1x64x4xbf16>,
    } else {
    }
    %cst = arith.constant 0.000000e+00 : f32
    %3 = vector.broadcast %cst : f32 to vector<64x8xf32>
    %c0 = arith.constant 0 : index
    %c0_1 = arith.constant 0 : index
    %c0_2 = arith.constant 0 : index
    %4 = vector.load %arg7[%c0, %c0_1, %c0_2] : memref<3x64x12xbf16, #tpu.memory_space<vmem>>, vector<1x64x12xbf16>
    %5 = vector.shape_cast %4 : vector<1x64x12xbf16> to vector<64x12xbf16>
    %c3_i32 = arith.constant 3 : i32
    %6 = arith.muli %arg1, %c3_i32 : i32
    %c0_i32_3 = arith.constant 0 : i32
    %7 = arith.addi %6, %c0_i32_3 : i32
    %8 = arith.index_cast %7 : i32 to index
    %c0_4 = arith.constant 0 : index
    %c0_5 = arith.constant 0 : index
    %9 = vector.load %arg3[%8, %c0_4, %c0_5] : memref<3x12x8xbf16, #tpu.memory_space<vmem>>, vector<1x12x8xbf16>
    %10 = vector.shape_cast %9 : vector<1x12x8xbf16> to vector<12x8xbf16>
    %cst_6 = arith.constant dense<0.000000e+00> : vector<64x8xf32>
    %11 = tpu.matmul %5, %10, %cst_6 {dimension_numbers = #tpu.dot_dimension_numbers<[1], [0], [0], [1], [0, 0, 1, 1], [], []>} : vector<64x12xbf16>, vector<12x8xbf16>, vector<64x8xf32> -> vector<64x8xf32>
    %12 = arith.addf %3, %11 : vector<64x8xf32>
    %c1 = arith.constant 1 : index
    %c0_7 = arith.constant 0 : index
    %c0_8 = arith.constant 0 : index
    %13 = vector.load %arg7[%c1, %c0_7, %c0_8] : memref<3x64x12xbf16, #tpu.memory_space<vmem>>, vector<1x64x12xbf16>
    %14 = vector.shape_cast %13 : vector<1x64x12xbf16> to vector<64x12xbf16>
    %c3_i32_9 = arith.constant 3 : i32
    %15 = arith.muli %arg1, %c3_i32_9 : i32
    %c1_i32 = arith.constant 1 : i32
    %16 = arith.addi %15, %c1_i32 : i32
    %17 = arith.index_cast %16 : i32 to index
    %c0_10 = arith.constant 0 : index
    %c0_11 = arith.constant 0 : index
    %18 = vector.load %arg3[%17, %c0_10, %c0_11] : memref<3x12x8xbf16, #tpu.memory_space<vmem>>, vector<1x12x8xbf16>
    %19 = vector.shape_cast %18 : vector<1x12x8xbf16> to vector<12x8xbf16>
    %cst_12 = arith.constant dense<0.000000e+00> : vector<64x8xf32>
    %20 = tpu.matmul %14, %19, %cst_12 {dimension_numbers = #tpu.dot_dimension_numbers<[1], [0], [0], [1], [0, 0, 1, 1], [], []>} : vector<64x12xbf16>, vector<12x8xbf16>, vector<64x8xf32> -> vector<64x8xf32>
    %21 = arith.addf %12, %20 : vector<64x8xf32>
    %c2 = arith.constant 2 : index
    %c0_13 = arith.constant 0 : index
    %c0_14 = arith.constant 0 : index
    %22 = vector.load %arg7[%c2, %c0_13, %c0_14] : memref<3x64x12xbf16, #tpu.memory_space<vmem>>, vector<1x64x12xbf16>
    %23 = vector.shape_cast %22 : vector<1x64x12xbf16> to vector<64x12xbf16>
    %c3_i32_15 = arith.constant 3 : i32
    %24 = arith.muli %arg1, %c3_i32_15 : i32
    %c2_i32 = arith.constant 2 : i32
    %25 = arith.addi %24, %c2_i32 : i32
    %26 = arith.index_cast %25 : i32 to index
    %c0_16 = arith.constant 0 : index
    %c0_17 = arith.constant 0 : index
    %27 = vector.load %arg3[%26, %c0_16, %c0_17] : memref<3x12x8xbf16, #tpu.memory_space<vmem>>, vector<1x12x8xbf16>
    %28 = vector.shape_cast %27 : vector<1x12x8xbf16> to vector<12x8xbf16>
    %cst_18 = arith.constant dense<0.000000e+00> : vector<64x8xf32>
    %29 = tpu.matmul %23, %28, %cst_18 {dimension_numbers = #tpu.dot_dimension_numbers<[1], [0], [0], [1], [0, 0, 1, 1], [], []>} : vector<64x12xbf16>, vector<12x8xbf16>, vector<64x8xf32> -> vector<64x8xf32>
    %30 = arith.addf %21, %29 : vector<64x8xf32>
    %31 = arith.truncf %30 : vector<64x8xf32> to vector<64x8xbf16>
    %c0_19 = arith.constant 0 : index
    %c0_20 = arith.constant 0 : index
    %32 = vector.load %arg4[%c0_19, %c0_20] : memref<64x8xbf16, #tpu.memory_space<vmem>>, vector<64x8xbf16>
    tpu.vector_store %arg4[%c0_19, %c0_20], %31 {strides = array<i32>} : memref<64x8xbf16, #tpu.memory_space<vmem>>, vector<64x8xbf16>,
    %33 = arith.extf %31 : vector<64x8xbf16> to vector<64x8xf32>
    %cst_21 = arith.constant dense<0.000000e+00> : vector<8xf32>
    %34 = vector.multi_reduction <add>, %33, %cst_21 [0] : vector<64x8xf32> to vector<8xf32>
    %35 = vector.shape_cast %34 : vector<8xf32> to vector<1x1x8xf32>
    %c0_22 = arith.constant 0 : index
    %c0_23 = arith.constant 0 : index
    %c0_24 = arith.constant 0 : index
    %36 = vector.load %arg5[%c0_22, %c0_23, %c0_24] : memref<1x1x8xf32, #tpu.memory_space<vmem>>, vector<1x1x8xf32>
    tpu.vector_store %arg5[%c0_22, %c0_23, %c0_24], %35 {strides = array<i32>} : memref<1x1x8xf32, #tpu.memory_space<vmem>>, vector<1x1x8xf32>,
    %37 = arith.mulf %33, %33 : vector<64x8xf32>
    %cst_25 = arith.constant dense<0.000000e+00> : vector<8xf32>
    %38 = vector.multi_reduction <add>, %37, %cst_25 [0] : vector<64x8xf32> to vector<8xf32>
    %39 = vector.shape_cast %38 : vector<8xf32> to vector<1x1x8xf32>
    %c0_26 = arith.constant 0 : index
    %c0_27 = arith.constant 0 : index
    %c0_28 = arith.constant 0 : index
    %40 = vector.load %arg6[%c0_26, %c0_27, %c0_28] : memref<1x1x8xf32, #tpu.memory_space<vmem>>, vector<1x1x8xf32>
    tpu.vector_store %arg6[%c0_26, %c0_27, %c0_28], %39 {strides = array<i32>} : memref<1x1x8xf32, #tpu.memory_space<vmem>>, vector<1x1x8xf32>,
    return
  }
  func.func @transform_0(%arg0: i32, %arg1: i32) -> (i32, i32, i32, i32, i32) {
    %c0_i32 = arith.constant 0 : i32
    %c0_i32_0 = arith.constant 0 : i32
    %c0_i32_1 = arith.constant 0 : i32
    %c0_i32_2 = arith.constant 0 : i32
    %c0_i32_3 = arith.constant 0 : i32
    return %arg0, %c0_i32, %c0_i32_0, %c0_i32_1, %c0_i32_2 : i32, i32, i32, i32, i32
  }
  func.func @transform_1(%arg0: i32, %arg1: i32) -> (i32, i32, i32) {
    %c0_i32 = arith.constant 0 : i32
    %c0_i32_0 = arith.constant 0 : i32
    %c0_i32_1 = arith.constant 0 : i32
    %c0_i32_2 = arith.constant 0 : i32
    return %c0_i32, %c0_i32_0, %c0_i32_1 : i32, i32, i32
  }
  func.func @transform_2(%arg0: i32, %arg1: i32) -> (i32, i32) {
    %c0_i32 = arith.constant 0 : i32
    return %arg0, %arg1 : i32, i32
  }
  func.func @transform_3(%arg0: i32, %arg1: i32) -> (i32, i32, i32) {
    %c0_i32 = arith.constant 0 : i32
    %c0_i32_0 = arith.constant 0 : i32
    return %arg0, %c0_i32, %arg1 : i32, i32, i32
  }
  func.func @transform_4(%arg0: i32, %arg1: i32) -> (i32, i32, i32) {
    %c0_i32 = arith.constant 0 : i32
    %c0_i32_0 = arith.constant 0 : i32
    return %arg0, %c0_i32, %arg1 : i32, i32, i32
  }
}

module attributes {stable_mosaic.version = 11 : i64} {
  func.func @_conv_kernel(%arg0: i32, %arg1: i32, %arg2: memref<1x1x10x10x8xbf16, #tpu.memory_space<vmem>>, %arg3: memref<3x24x8xbf16, #tpu.memory_space<vmem>>, %arg4: memref<64x8xf32, #tpu.memory_space<vmem>>, %arg5: memref<64x8xf32, #tpu.memory_space<vmem>>, %arg6: memref<3x64x24xbf16, #tpu.memory_space<vmem>>) attributes {dimension_semantics = [#tpu.dimension_semantics<parallel>, #tpu.dimension_semantics<arbitrary>], iteration_bounds = array<i64: 2, 1>, scalar_prefetch = 0 : i64, scratch_operands = 1 : i64, tpu.core_type = #tpu.core_type<tc>, window_params = [{transform_indices = @transform_0, window_bounds = array<i64: 1, 1, 10, 10, 8>}, {pipeline_mode = #tpu.pipeline_mode<synchronous>, transform_indices = @transform_1, window_bounds = array<i64: 3, 24, 8>}, {transform_indices = @transform_2, window_bounds = array<i64: 64, 8>}, {transform_indices = @transform_3, window_bounds = array<i64: 64, 8>}]} {
    %c0_i32 = arith.constant 0 : i32
    %0 = arith.cmpi eq, %arg1, %c0_i32 : i32
    %1 = arith.extui %0 : i1 to i32
    %c0_i32_0 = arith.constant 0 : i32
    %2 = arith.cmpi ne, %1, %c0_i32_0 : i32
    scf.if %2 {
      %c0_23 = arith.constant 0 : index
      %c0_24 = arith.constant 0 : index
      %c0_25 = arith.constant 0 : index
      %c0_26 = arith.constant 0 : index
      %c0_27 = arith.constant 0 : index
      %34 = vector.load %arg2[%c0_23, %c0_24, %c0_25, %c0_26, %c0_27] : memref<1x1x10x10x8xbf16, #tpu.memory_space<vmem>>, vector<1x1x8x8x8xbf16>
      %35 = vector.shape_cast %34 : vector<1x1x8x8x8xbf16> to vector<8x8x8xbf16>
      %36 = vector.shape_cast %35 : vector<8x8x8xbf16> to vector<64x8xbf16>
      %c0_28 = arith.constant 0 : index
      %c0_29 = arith.constant 0 : index
      %c0_30 = arith.constant 0 : index
      %37 = vector.load %arg6[%c0_28, %c0_29, %c0_30] : memref<3x64x24xbf16, #tpu.memory_space<vmem>>, vector<1x64x8xbf16>
      %38 = vector.shape_cast %37 : vector<1x64x8xbf16> to vector<64x8xbf16>
      %39 = vector.shape_cast %36 : vector<64x8xbf16> to vector<1x64x8xbf16>
      tpu.vector_store %arg6[%c0_28, %c0_29, %c0_30], %39 {strides = array<i32>} : memref<3x64x24xbf16, #tpu.memory_space<vmem>>, vector<1x64x8xbf16>,
      %c0_31 = arith.constant 0 : index
      %c0_32 = arith.constant 0 : index
      %c0_33 = arith.constant 0 : index
      %c1_34 = arith.constant 1 : index
      %c0_35 = arith.constant 0 : index
      %40 = vector.load %arg2[%c0_31, %c0_32, %c0_33, %c1_34, %c0_35] : memref<1x1x10x10x8xbf16, #tpu.memory_space<vmem>>, vector<1x1x8x8x8xbf16>
      %41 = vector.shape_cast %40 : vector<1x1x8x8x8xbf16> to vector<8x8x8xbf16>
      %42 = vector.shape_cast %41 : vector<8x8x8xbf16> to vector<64x8xbf16>
      %c0_36 = arith.constant 0 : index
      %c0_37 = arith.constant 0 : index
      %c8 = arith.constant 8 : index
      %43 = vector.load %arg6[%c0_36, %c0_37, %c8] : memref<3x64x24xbf16, #tpu.memory_space<vmem>>, vector<1x64x8xbf16>
      %44 = vector.shape_cast %43 : vector<1x64x8xbf16> to vector<64x8xbf16>
      %45 = vector.shape_cast %42 : vector<64x8xbf16> to vector<1x64x8xbf16>
      tpu.vector_store %arg6[%c0_36, %c0_37, %c8], %45 {strides = array<i32>} : memref<3x64x24xbf16, #tpu.memory_space<vmem>>, vector<1x64x8xbf16>,
      %c0_38 = arith.constant 0 : index
      %c0_39 = arith.constant 0 : index
      %c0_40 = arith.constant 0 : index
      %c2_41 = arith.constant 2 : index
      %c0_42 = arith.constant 0 : index
      %46 = vector.load %arg2[%c0_38, %c0_39, %c0_40, %c2_41, %c0_42] : memref<1x1x10x10x8xbf16, #tpu.memory_space<vmem>>, vector<1x1x8x8x8xbf16>
      %47 = vector.shape_cast %46 : vector<1x1x8x8x8xbf16> to vector<8x8x8xbf16>
      %48 = vector.shape_cast %47 : vector<8x8x8xbf16> to vector<64x8xbf16>
      %c0_43 = arith.constant 0 : index
      %c0_44 = arith.constant 0 : index
      %c16 = arith.constant 16 : index
      %49 = vector.load %arg6[%c0_43, %c0_44, %c16] : memref<3x64x24xbf16, #tpu.memory_space<vmem>>, vector<1x64x8xbf16>
      %50 = vector.shape_cast %49 : vector<1x64x8xbf16> to vector<64x8xbf16>
      %51 = vector.shape_cast %48 : vector<64x8xbf16> to vector<1x64x8xbf16>
      tpu.vector_store %arg6[%c0_43, %c0_44, %c16], %51 {strides = array<i32>} : memref<3x64x24xbf16, #tpu.memory_space<vmem>>, vector<1x64x8xbf16>,
      %c0_45 = arith.constant 0 : index
      %c0_46 = arith.constant 0 : index
      %c1_47 = arith.constant 1 : index
      %c0_48 = arith.constant 0 : index
      %c0_49 = arith.constant 0 : index
      %52 = vector.load %arg2[%c0_45, %c0_46, %c1_47, %c0_48, %c0_49] : memref<1x1x10x10x8xbf16, #tpu.memory_space<vmem>>, vector<1x1x8x8x8xbf16>
      %53 = vector.shape_cast %52 : vector<1x1x8x8x8xbf16> to vector<8x8x8xbf16>
      %54 = vector.shape_cast %53 : vector<8x8x8xbf16> to vector<64x8xbf16>
      %c1_50 = arith.constant 1 : index
      %c0_51 = arith.constant 0 : index
      %c0_52 = arith.constant 0 : index
      %55 = vector.load %arg6[%c1_50, %c0_51, %c0_52] : memref<3x64x24xbf16, #tpu.memory_space<vmem>>, vector<1x64x8xbf16>
      %56 = vector.shape_cast %55 : vector<1x64x8xbf16> to vector<64x8xbf16>
      %57 = vector.shape_cast %54 : vector<64x8xbf16> to vector<1x64x8xbf16>
      tpu.vector_store %arg6[%c1_50, %c0_51, %c0_52], %57 {strides = array<i32>} : memref<3x64x24xbf16, #tpu.memory_space<vmem>>, vector<1x64x8xbf16>,
      %c0_53 = arith.constant 0 : index
      %c0_54 = arith.constant 0 : index
      %c1_55 = arith.constant 1 : index
      %c1_56 = arith.constant 1 : index
      %c0_57 = arith.constant 0 : index
      %58 = vector.load %arg2[%c0_53, %c0_54, %c1_55, %c1_56, %c0_57] : memref<1x1x10x10x8xbf16, #tpu.memory_space<vmem>>, vector<1x1x8x8x8xbf16>
      %59 = vector.shape_cast %58 : vector<1x1x8x8x8xbf16> to vector<8x8x8xbf16>
      %60 = vector.shape_cast %59 : vector<8x8x8xbf16> to vector<64x8xbf16>
      %c1_58 = arith.constant 1 : index
      %c0_59 = arith.constant 0 : index
      %c8_60 = arith.constant 8 : index
      %61 = vector.load %arg6[%c1_58, %c0_59, %c8_60] : memref<3x64x24xbf16, #tpu.memory_space<vmem>>, vector<1x64x8xbf16>
      %62 = vector.shape_cast %61 : vector<1x64x8xbf16> to vector<64x8xbf16>
      %63 = vector.shape_cast %60 : vector<64x8xbf16> to vector<1x64x8xbf16>
      tpu.vector_store %arg6[%c1_58, %c0_59, %c8_60], %63 {strides = array<i32>} : memref<3x64x24xbf16, #tpu.memory_space<vmem>>, vector<1x64x8xbf16>,
      %c0_61 = arith.constant 0 : index
      %c0_62 = arith.constant 0 : index
      %c1_63 = arith.constant 1 : index
      %c2_64 = arith.constant 2 : index
      %c0_65 = arith.constant 0 : index
      %64 = vector.load %arg2[%c0_61, %c0_62, %c1_63, %c2_64, %c0_65] : memref<1x1x10x10x8xbf16, #tpu.memory_space<vmem>>, vector<1x1x8x8x8xbf16>
      %65 = vector.shape_cast %64 : vector<1x1x8x8x8xbf16> to vector<8x8x8xbf16>
      %66 = vector.shape_cast %65 : vector<8x8x8xbf16> to vector<64x8xbf16>
      %c1_66 = arith.constant 1 : index
      %c0_67 = arith.constant 0 : index
      %c16_68 = arith.constant 16 : index
      %67 = vector.load %arg6[%c1_66, %c0_67, %c16_68] : memref<3x64x24xbf16, #tpu.memory_space<vmem>>, vector<1x64x8xbf16>
      %68 = vector.shape_cast %67 : vector<1x64x8xbf16> to vector<64x8xbf16>
      %69 = vector.shape_cast %66 : vector<64x8xbf16> to vector<1x64x8xbf16>
      tpu.vector_store %arg6[%c1_66, %c0_67, %c16_68], %69 {strides = array<i32>} : memref<3x64x24xbf16, #tpu.memory_space<vmem>>, vector<1x64x8xbf16>,
      %c0_69 = arith.constant 0 : index
      %c0_70 = arith.constant 0 : index
      %c2_71 = arith.constant 2 : index
      %c0_72 = arith.constant 0 : index
      %c0_73 = arith.constant 0 : index
      %70 = vector.load %arg2[%c0_69, %c0_70, %c2_71, %c0_72, %c0_73] : memref<1x1x10x10x8xbf16, #tpu.memory_space<vmem>>, vector<1x1x8x8x8xbf16>
      %71 = vector.shape_cast %70 : vector<1x1x8x8x8xbf16> to vector<8x8x8xbf16>
      %72 = vector.shape_cast %71 : vector<8x8x8xbf16> to vector<64x8xbf16>
      %c2_74 = arith.constant 2 : index
      %c0_75 = arith.constant 0 : index
      %c0_76 = arith.constant 0 : index
      %73 = vector.load %arg6[%c2_74, %c0_75, %c0_76] : memref<3x64x24xbf16, #tpu.memory_space<vmem>>, vector<1x64x8xbf16>
      %74 = vector.shape_cast %73 : vector<1x64x8xbf16> to vector<64x8xbf16>
      %75 = vector.shape_cast %72 : vector<64x8xbf16> to vector<1x64x8xbf16>
      tpu.vector_store %arg6[%c2_74, %c0_75, %c0_76], %75 {strides = array<i32>} : memref<3x64x24xbf16, #tpu.memory_space<vmem>>, vector<1x64x8xbf16>,
      %c0_77 = arith.constant 0 : index
      %c0_78 = arith.constant 0 : index
      %c2_79 = arith.constant 2 : index
      %c1_80 = arith.constant 1 : index
      %c0_81 = arith.constant 0 : index
      %76 = vector.load %arg2[%c0_77, %c0_78, %c2_79, %c1_80, %c0_81] : memref<1x1x10x10x8xbf16, #tpu.memory_space<vmem>>, vector<1x1x8x8x8xbf16>
      %77 = vector.shape_cast %76 : vector<1x1x8x8x8xbf16> to vector<8x8x8xbf16>
      %78 = vector.shape_cast %77 : vector<8x8x8xbf16> to vector<64x8xbf16>
      %c2_82 = arith.constant 2 : index
      %c0_83 = arith.constant 0 : index
      %c8_84 = arith.constant 8 : index
      %79 = vector.load %arg6[%c2_82, %c0_83, %c8_84] : memref<3x64x24xbf16, #tpu.memory_space<vmem>>, vector<1x64x8xbf16>
      %80 = vector.shape_cast %79 : vector<1x64x8xbf16> to vector<64x8xbf16>
      %81 = vector.shape_cast %78 : vector<64x8xbf16> to vector<1x64x8xbf16>
      tpu.vector_store %arg6[%c2_82, %c0_83, %c8_84], %81 {strides = array<i32>} : memref<3x64x24xbf16, #tpu.memory_space<vmem>>, vector<1x64x8xbf16>,
      %c0_85 = arith.constant 0 : index
      %c0_86 = arith.constant 0 : index
      %c2_87 = arith.constant 2 : index
      %c2_88 = arith.constant 2 : index
      %c0_89 = arith.constant 0 : index
      %82 = vector.load %arg2[%c0_85, %c0_86, %c2_87, %c2_88, %c0_89] : memref<1x1x10x10x8xbf16, #tpu.memory_space<vmem>>, vector<1x1x8x8x8xbf16>
      %83 = vector.shape_cast %82 : vector<1x1x8x8x8xbf16> to vector<8x8x8xbf16>
      %84 = vector.shape_cast %83 : vector<8x8x8xbf16> to vector<64x8xbf16>
      %c2_90 = arith.constant 2 : index
      %c0_91 = arith.constant 0 : index
      %c16_92 = arith.constant 16 : index
      %85 = vector.load %arg6[%c2_90, %c0_91, %c16_92] : memref<3x64x24xbf16, #tpu.memory_space<vmem>>, vector<1x64x8xbf16>
      %86 = vector.shape_cast %85 : vector<1x64x8xbf16> to vector<64x8xbf16>
      %87 = vector.shape_cast %84 : vector<64x8xbf16> to vector<1x64x8xbf16>
      tpu.vector_store %arg6[%c2_90, %c0_91, %c16_92], %87 {strides = array<i32>} : memref<3x64x24xbf16, #tpu.memory_space<vmem>>, vector<1x64x8xbf16>,
    } else {
    }
    %cst = arith.constant 0.000000e+00 : f32
    %3 = vector.broadcast %cst : f32 to vector<64x8xf32>
    %c0 = arith.constant 0 : index
    %c0_1 = arith.constant 0 : index
    %c0_2 = arith.constant 0 : index
    %4 = vector.load %arg6[%c0, %c0_1, %c0_2] : memref<3x64x24xbf16, #tpu.memory_space<vmem>>, vector<1x64x24xbf16>
    %5 = vector.shape_cast %4 : vector<1x64x24xbf16> to vector<64x24xbf16>
    %c3_i32 = arith.constant 3 : i32
    %6 = arith.muli %arg1, %c3_i32 : i32
    %c0_i32_3 = arith.constant 0 : i32
    %7 = arith.addi %6, %c0_i32_3 : i32
    %8 = arith.index_cast %7 : i32 to index
    %c0_4 = arith.constant 0 : index
    %c0_5 = arith.constant 0 : index
    %9 = vector.load %arg3[%8, %c0_4, %c0_5] : memref<3x24x8xbf16, #tpu.memory_space<vmem>>, vector<1x24x8xbf16>
    %10 = vector.shape_cast %9 : vector<1x24x8xbf16> to vector<24x8xbf16>
    %cst_6 = arith.constant dense<0.000000e+00> : vector<64x8xf32>
    %11 = tpu.matmul %5, %10, %cst_6 {dimension_numbers = #tpu.dot_dimension_numbers<[1], [0], [0], [1], [0, 0, 1, 1], [], []>} : vector<64x24xbf16>, vector<24x8xbf16>, vector<64x8xf32> -> vector<64x8xf32>
    %12 = arith.addf %3, %11 : vector<64x8xf32>
    %c1 = arith.constant 1 : index
    %c0_7 = arith.constant 0 : index
    %c0_8 = arith.constant 0 : index
    %13 = vector.load %arg6[%c1, %c0_7, %c0_8] : memref<3x64x24xbf16, #tpu.memory_space<vmem>>, vector<1x64x24xbf16>
    %14 = vector.shape_cast %13 : vector<1x64x24xbf16> to vector<64x24xbf16>
    %c3_i32_9 = arith.constant 3 : i32
    %15 = arith.muli %arg1, %c3_i32_9 : i32
    %c1_i32 = arith.constant 1 : i32
    %16 = arith.addi %15, %c1_i32 : i32
    %17 = arith.index_cast %16 : i32 to index
    %c0_10 = arith.constant 0 : index
    %c0_11 = arith.constant 0 : index
    %18 = vector.load %arg3[%17, %c0_10, %c0_11] : memref<3x24x8xbf16, #tpu.memory_space<vmem>>, vector<1x24x8xbf16>
    %19 = vector.shape_cast %18 : vector<1x24x8xbf16> to vector<24x8xbf16>
    %cst_12 = arith.constant dense<0.000000e+00> : vector<64x8xf32>
    %20 = tpu.matmul %14, %19, %cst_12 {dimension_numbers = #tpu.dot_dimension_numbers<[1], [0], [0], [1], [0, 0, 1, 1], [], []>} : vector<64x24xbf16>, vector<24x8xbf16>, vector<64x8xf32> -> vector<64x8xf32>
    %21 = arith.addf %12, %20 : vector<64x8xf32>
    %c2 = arith.constant 2 : index
    %c0_13 = arith.constant 0 : index
    %c0_14 = arith.constant 0 : index
    %22 = vector.load %arg6[%c2, %c0_13, %c0_14] : memref<3x64x24xbf16, #tpu.memory_space<vmem>>, vector<1x64x24xbf16>
    %23 = vector.shape_cast %22 : vector<1x64x24xbf16> to vector<64x24xbf16>
    %c3_i32_15 = arith.constant 3 : i32
    %24 = arith.muli %arg1, %c3_i32_15 : i32
    %c2_i32 = arith.constant 2 : i32
    %25 = arith.addi %24, %c2_i32 : i32
    %26 = arith.index_cast %25 : i32 to index
    %c0_16 = arith.constant 0 : index
    %c0_17 = arith.constant 0 : index
    %27 = vector.load %arg3[%26, %c0_16, %c0_17] : memref<3x24x8xbf16, #tpu.memory_space<vmem>>, vector<1x24x8xbf16>
    %28 = vector.shape_cast %27 : vector<1x24x8xbf16> to vector<24x8xbf16>
    %cst_18 = arith.constant dense<0.000000e+00> : vector<64x8xf32>
    %29 = tpu.matmul %23, %28, %cst_18 {dimension_numbers = #tpu.dot_dimension_numbers<[1], [0], [0], [1], [0, 0, 1, 1], [], []>} : vector<64x24xbf16>, vector<24x8xbf16>, vector<64x8xf32> -> vector<64x8xf32>
    %30 = arith.addf %21, %29 : vector<64x8xf32>
    %c0_19 = arith.constant 0 : index
    %c0_20 = arith.constant 0 : index
    %31 = vector.load %arg4[%c0_19, %c0_20] : memref<64x8xf32, #tpu.memory_space<vmem>>, vector<64x8xf32>
    %32 = arith.addf %30, %31 : vector<64x8xf32>
    %c0_21 = arith.constant 0 : index
    %c0_22 = arith.constant 0 : index
    %33 = vector.load %arg5[%c0_21, %c0_22] : memref<64x8xf32, #tpu.memory_space<vmem>>, vector<64x8xf32>
    tpu.vector_store %arg5[%c0_21, %c0_22], %32 {strides = array<i32>} : memref<64x8xf32, #tpu.memory_space<vmem>>, vector<64x8xf32>,
    return
  }
  func.func @transform_0(%arg0: i32, %arg1: i32) -> (i32, i32, i32, i32, i32) {
    %c0_i32 = arith.constant 0 : i32
    %c0_i32_0 = arith.constant 0 : i32
    %c0_i32_1 = arith.constant 0 : i32
    %c0_i32_2 = arith.constant 0 : i32
    %c0_i32_3 = arith.constant 0 : i32
    return %arg0, %c0_i32, %c0_i32_0, %c0_i32_1, %c0_i32_2 : i32, i32, i32, i32, i32
  }
  func.func @transform_1(%arg0: i32, %arg1: i32) -> (i32, i32, i32) {
    %c0_i32 = arith.constant 0 : i32
    %c0_i32_0 = arith.constant 0 : i32
    %c0_i32_1 = arith.constant 0 : i32
    %c0_i32_2 = arith.constant 0 : i32
    return %c0_i32, %c0_i32_0, %c0_i32_1 : i32, i32, i32
  }
  func.func @transform_2(%arg0: i32, %arg1: i32) -> (i32, i32) {
    %c0_i32 = arith.constant 0 : i32
    return %arg0, %arg1 : i32, i32
  }
  func.func @transform_3(%arg0: i32, %arg1: i32) -> (i32, i32) {
    %c0_i32 = arith.constant 0 : i32
    return %arg0, %arg1 : i32, i32
  }
}

</mosaic_0001>

<llo_original>
// kernel: basic_block_forward.4
$region0: #{basic_block_forward.4}
  #allocation0 [shape = 'u32[]', space=smem, size = 0x4, offset = 0x4, fixed_abs, tag = 'smem constant byte address 0x4 - core index']
  #allocation1 [shape = 'u32[144,128]{1,0:T(1,128)}', space=vmem, size = 0x12000, scoped, tag = 'internal scratch']
  %s0 = inlined_call_operand.vmem [shape: bf16[128,4], index: 0, kind: input, shape index: {}]
  %s1 = inlined_call_operand.vmem [shape: bf16[4,8], index: 1, kind: input, shape index: {}]
  %s2 = inlined_call_operand.vmem [shape: f32[128,8], index: 2, kind: output, shape index: {}]
  %s3 = sld [smem:[#allocation0]]
  $region18: #{basic_block_forward.4} parent=0
    _
  %s5 = ssub.s32 1, %s3
  %s6 = scalar_select 0, %s5, %s3
  // Predicated region
  $region2: #{basic_block_forward.4} parent=0 // pred_check
    _
  $region3: #{basic_block_forward.4} parent=0 // pred_check_branch
    %8 = sbr.rel (0) target = $region5
  $region4: #{basic_block_forward.4} parent=0 // pred_region
    _
  $region5: #{basic_block_forward.4} parent=0 // pred_fallthru
    _
  // Predicated region
  $region6: #{basic_block_forward.4} parent=0 // pred_check
    _
  $region7: #{basic_block_forward.4} parent=0 // pred_check_branch
    %10 = sbr.rel (0) target = $region9
  $region8: #{basic_block_forward.4} parent=0 // pred_region
    _
  $region9: #{basic_block_forward.4} parent=0 // pred_fallthru
    _
  %v12 = vld [vmem:[%s0] sm:$0xf]
  %v13 = vld [vmem:[%s0 + $0x4] sm:$0xf]
  %v14 = vld [vmem:[%s0 + $0x8] sm:$0xf]
  %v15 = vld [vmem:[%s0 + $0xc] sm:$0xf]
  %v16 = vld [vmem:[%s0 + $0x10] sm:$0xf]
  %v17 = vld [vmem:[%s0 + $0x14] sm:$0xf]
  %v18 = vld [vmem:[%s0 + $0x18] sm:$0xf]
  %v19 = vld [vmem:[%s0 + $0x1c] sm:$0xf]
  %v20 = vld [vmem:[%s0 + $0x20] sm:$0xf]
  %v21 = vld [vmem:[%s0 + $0x24] sm:$0xf]
  %v22 = vld [vmem:[%s0 + $0x28] sm:$0xf]
  %v23 = vld [vmem:[%s0 + $0x2c] sm:$0xf]
  %v24 = vld [vmem:[%s0 + $0x30] sm:$0xf]
  %v25 = vld [vmem:[%s0 + $0x34] sm:$0xf]
  %v26 = vld [vmem:[%s0 + $0x38] sm:$0xf]
  %v27 = vld [vmem:[%s0 + $0x3c] sm:$0xf]
  %v28 = vld [vmem:[%s1] sm:$0x3]
  %v45 = vunpack.c.l.b16 %v12
  %v46 = vunpack.c.l.b16 %v13
  %v47 = vunpack.c.l.b16 %v14
  %v48 = vunpack.c.l.b16 %v15
  %v49 = vunpack.c.l.b16 %v16
  %v50 = vunpack.c.l.b16 %v17
  %v51 = vunpack.c.l.b16 %v18
  %v52 = vunpack.c.l.b16 %v19
  %v53 = vunpack.c.l.b16 %v20
  %v54 = vunpack.c.l.b16 %v21
  %v55 = vunpack.c.l.b16 %v22
  %v56 = vunpack.c.l.b16 %v23
  %v57 = vunpack.c.l.b16 %v24
  %v58 = vunpack.c.l.b16 %v25
  %v59 = vunpack.c.l.b16 %v26
  %v60 = vunpack.c.l.b16 %v27
  %v61 = vpack.c.b16 %v46, %v45
  %v62 = vpack.c.b16 %v48, %v47
  %v63 = vpack.c.b16 %v50, %v49
  %v64 = vpack.c.b16 %v52, %v51
  %v65 = vpack.c.b16 %v54, %v53
  %v66 = vpack.c.b16 %v56, %v55
  %v67 = vpack.c.b16 %v58, %v57
  %v68 = vpack.c.b16 %v60, %v59
  %vm69 = vcmask 31744
  %v71 = vsel %vm69, %v61, 0
  %v74 = vsel %vm69, %v62, 0
  %v77 = vsel %vm69, %v63, 0
  %v80 = vsel %vm69, %v64, 0
  %v83 = vsel %vm69, %v65, 0
  %v86 = vsel %vm69, %v66, 0
  %v89 = vsel %vm69, %v67, 0
  %v92 = vsel %vm69, %v68, 0
  %vm94 = vcmask 1041408
  %v96 = vsel %vm94, %v28, 0
  %98 = vmatprep.subr.bf16.mxu0 0
  %99 = vmatpush1.bf16.msra.mxu0 0
  %100 = vmatprep.subr.bf16.mxu0 0
  %101 = vmatpush1.bf16.msra.mxu0 0
  %102 = vmatprep.subr.bf16.mxu0 0
  %103 = vmatpush1.bf16.msra.mxu0 0
  %104 = vmatprep.subr.bf16.mxu0 0
  %105 = vmatpush1.bf16.msra.mxu0 0
  %106 = vmatprep.subr.bf16.mxu0 0
  %107 = vmatpush1.bf16.msra.mxu0 0
  %108 = vmatprep.subr.bf16.mxu0 0
  %109 = vmatpush1.bf16.msra.mxu0 0
  %110 = vmatprep.subr.bf16.mxu0 0
  %111 = vmatpush1.bf16.msra.mxu0 0
  %112 = vmatprep.subr.bf16.mxu0 0
  %113 = vmatpush1.bf16.msra.mxu0 %v96
  %114 = vmatprep.subr.bf16.mxu0 0
  %115 = vmatpush2.bf16.msra.mxu0 0
  %116 = vmatprep.subr.bf16.mxu0 0
  %117 = vmatpush2.bf16.msra.mxu0 0
  %118 = vmatprep.subr.bf16.mxu0 0
  %119 = vmatpush2.bf16.msra.mxu0 0
  %120 = vmatprep.subr.bf16.mxu0 0
  %121 = vmatpush2.bf16.msra.mxu0 0
  %122 = vmatprep.subr.bf16.mxu0 0
  %123 = vmatpush2.bf16.msra.mxu0 0
  %124 = vmatprep.subr.bf16.mxu0 0
  %125 = vmatpush2.bf16.msra.mxu0 0
  %126 = vmatprep.subr.bf16.mxu0 0
  %127 = vmatpush2.bf16.msra.mxu0 0
  %128 = vmatprep.subr.bf16.mxu0 0
  %129 = vmatpush2.bf16.msra.mxu0 0
  %130 = vmatprep.mubr.bf16.mxu0 0
  %131 = vmatmul.mubr.bf16.gmra.mxu0 %v71
  %v132 = vpop.f32.mrf.mxu0
  %v133 = vadd.f32 0.0, %v132
  %v134 = vpop.f32.mrf.mxu0
  %v135 = vpop.f32.mrf.mxu0
  %v136 = vadd.f32 0.0, %v135
  %v137 = vpop.f32.mrf.mxu0
  %138 = vmatprep.mubr.bf16.mxu0 0
  %139 = vmatmul.mubr.bf16.gmra.mxu0 %v74
  %v140 = vpop.f32.mrf.mxu0
  %v141 = vadd.f32 0.0, %v140
  %v142 = vpop.f32.mrf.mxu0
  %v143 = vpop.f32.mrf.mxu0
  %v144 = vadd.f32 0.0, %v143
  %v145 = vpop.f32.mrf.mxu0
  %146 = vmatprep.mubr.bf16.mxu0 0
  %147 = vmatmul.mubr.bf16.gmra.mxu0 %v77
  %v148 = vpop.f32.mrf.mxu0
  %v149 = vadd.f32 0.0, %v148
  %v150 = vpop.f32.mrf.mxu0
  %v151 = vpop.f32.mrf.mxu0
  %v152 = vadd.f32 0.0, %v151
  %v153 = vpop.f32.mrf.mxu0
  %154 = vmatprep.mubr.bf16.mxu0 0
  %155 = vmatmul.mubr.bf16.gmra.mxu0 %v80
  %v156 = vpop.f32.mrf.mxu0
  %v157 = vadd.f32 0.0, %v156
  %v158 = vpop.f32.mrf.mxu0
  %v159 = vpop.f32.mrf.mxu0
  %v160 = vadd.f32 0.0, %v159
  %v161 = vpop.f32.mrf.mxu0
  %162 = vmatprep.mubr.bf16.mxu0 0
  %163 = vmatmul.mubr.bf16.gmra.mxu0 %v83
  %v164 = vpop.f32.mrf.mxu0
  %v165 = vadd.f32 0.0, %v164
  %v166 = vpop.f32.mrf.mxu0
  %v167 = vpop.f32.mrf.mxu0
  %v168 = vadd.f32 0.0, %v167
  %v169 = vpop.f32.mrf.mxu0
  %170 = vmatprep.mubr.bf16.mxu0 0
  %171 = vmatmul.mubr.bf16.gmra.mxu0 %v86
  %v172 = vpop.f32.mrf.mxu0
  %v173 = vadd.f32 0.0, %v172
  %v174 = vpop.f32.mrf.mxu0
  %v175 = vpop.f32.mrf.mxu0
  %v176 = vadd.f32 0.0, %v175
  %v177 = vpop.f32.mrf.mxu0
  %178 = vmatprep.mubr.bf16.mxu0 0
  %179 = vmatmul.mubr.bf16.gmra.mxu0 %v89
  %v180 = vpop.f32.mrf.mxu0
  %v181 = vadd.f32 0.0, %v180
  %v182 = vpop.f32.mrf.mxu0
  %v183 = vpop.f32.mrf.mxu0
  %v184 = vadd.f32 0.0, %v183
  %v185 = vpop.f32.mrf.mxu0
  %186 = vmatprep.mubr.bf16.mxu0 0
  %187 = vmatmul.mubr.bf16.gmra.mxu0 %v92
  %v188 = vpop.f32.mrf.mxu0
  %v189 = vadd.f32 0.0, %v188
  %v190 = vpop.f32.mrf.mxu0
  %v191 = vpop.f32.mrf.mxu0
  %v192 = vadd.f32 0.0, %v191
  %v193 = vpop.f32.mrf.mxu0
  %194 = vdwg.mxu0
  %vm195 = vcmask 64512
  %196 = vst.msk [vmem:[%s2] sm:$0xff] %vm195, %v133
  %197 = vst.msk [vmem:[%s2 + $0x8] sm:$0xff] %vm195, %v136
  %198 = vst.msk [vmem:[%s2 + $0x10] sm:$0xff] %vm195, %v141
  %199 = vst.msk [vmem:[%s2 + $0x18] sm:$0xff] %vm195, %v144
  %200 = vst.msk [vmem:[%s2 + $0x20] sm:$0xff] %vm195, %v149
  %201 = vst.msk [vmem:[%s2 + $0x28] sm:$0xff] %vm195, %v152
  %202 = vst.msk [vmem:[%s2 + $0x30] sm:$0xff] %vm195, %v157
  %203 = vst.msk [vmem:[%s2 + $0x38] sm:$0xff] %vm195, %v160
  %204 = vst.msk [vmem:[%s2 + $0x40] sm:$0xff] %vm195, %v165
  %205 = vst.msk [vmem:[%s2 + $0x48] sm:$0xff] %vm195, %v168
  %206 = vst.msk [vmem:[%s2 + $0x50] sm:$0xff] %vm195, %v173
  %207 = vst.msk [vmem:[%s2 + $0x58] sm:$0xff] %vm195, %v176
  %208 = vst.msk [vmem:[%s2 + $0x60] sm:$0xff] %vm195, %v181
  %209 = vst.msk [vmem:[%s2 + $0x68] sm:$0xff] %vm195, %v184
  %210 = vst.msk [vmem:[%s2 + $0x70] sm:$0xff] %vm195, %v189
  %211 = vst.msk [vmem:[%s2 + $0x78] sm:$0xff] %vm195, %v192
  // Predicated region
  $region10: #{basic_block_forward.4} parent=0 // pred_check
    _
  $region11: #{basic_block_forward.4} parent=0 // pred_check_branch
    %213 = sbr.rel (0) target = $region13
  $region12: #{basic_block_forward.4} parent=0 // pred_region
    _
  $region13: #{basic_block_forward.4} parent=0 // pred_fallthru
    _
  // Predicated region
  $region14: #{basic_block_forward.4} parent=0 // pred_check
    _
  $region15: #{basic_block_forward.4} parent=0 // pred_check_branch
    %215 = sbr.rel (0) target = $region17
  $region16: #{basic_block_forward.4} parent=0 // pred_region
    _
  $region17: #{basic_block_forward.4} parent=0 // pred_fallthru
    _

// kernel: basic_block_forward.3
$region0: #{basic_block_forward.3}
  #allocation0 [shape = 'u32[]', space=smem, size = 0x4, offset = 0x4, fixed_abs, tag = 'smem constant byte address 0x4 - core index']
  #allocation1 [shape = 'u32[144,128]{1,0:T(1,128)}', space=vmem, size = 0x12000, scoped, tag = 'internal scratch']
  #allocation2 [shape = 'bf16[3,64,12]{2,1,0:T(8,128)(2,1)}', space=vmem, size = 0xc000, scoped, tag = 'scratch operand']
  %s0 = inlined_call_operand.vmem [shape: bf16[2,4,9,9,4], index: 0, kind: input, shape index: {}]
  %s1 = inlined_call_operand.vmem [shape: bf16[3,12,8], index: 1, kind: input, shape index: {}]
  %s2 = inlined_call_operand.vmem [shape: bf16[128,8], index: 2, kind: output, shape index: {0}]
  %s3 = inlined_call_operand.vmem [shape: f32[2,1,8], index: 3, kind: output, shape index: {1}]
  %s4 = inlined_call_operand.vmem [shape: f32[2,1,8], index: 4, kind: output, shape index: {2}]
  %5 = xla_tuple %s2, %s3, %s4
  %s6 = sld [smem:[#allocation0]]
  $region61: #{basic_block_forward.3} parent=0
    _
  %s8 = ssub.s32 1, %s6
  %s9 = scalar_select 0, %s8, %s6
  loop: start=0, step=1, limit=4
  $region2: #{basic_block_forward.3} parent=0 // loop_pre_header
    _
  $region3: #{basic_block_forward.3} parent=0 // loop_header
    %s11 = sphi 0, %s15
    %p12 = scmp.ge.s32.totalorder %s11, 4
    %s18 = sphi 0, %s30
    %s19 = sphi 0, %s26
    %s20 = sphi 0, %s18
    %s21 = sphi 0, %s19
    %s22 = sphi 0, %s20
    %s23 = sphi 0, %s21
    %s33 = sphi 0, %s35
    %s36 = sphi 0, %s33
    %s37 = sphi 0, %s36
    %s53 = sphi 0, %s37
    %s57 = sphi 0, %s57
    %s59 = sphi 0, %s57
    %s60 = sphi 0, %s59
    %s74 = sphi 0, %s60
    %s82 = sphi 0, %s84
    %s85 = sphi 0, %s82
    %s86 = sphi 0, %s85
    %s102 = sphi 0, %s86
    %s110 = sphi 0, %s112
    %s113 = sphi 0, %s110
    %s114 = sphi 0, %s113
    %s130 = sphi 0, %s114
    %s138 = sphi 0, %s140
    %s141 = sphi 0, %s138
    %s142 = sphi 0, %s141
    %s158 = sphi 0, %s142
  $region4: #{basic_block_forward.3} parent=0 // loop_header_branch
    %14 = sbr.rel (%p12) target = $region8
  $region5: #{basic_block_forward.3} parent=0 // loop_body
    %s16 = ssub.s32 %s11, 1
    %s17 = ssub.s32 %s11, 2
    %s24 = sadd.s32 1, %s19
    %p25 = scmp.ge.s32.totalorder %s24, 1
    %s26 = scalar_select %p25, 0, %s24
    %s27 = sadd.s32 1, %s18
    %s28 = scalar_select %p25, %s27, %s18
    %p29 = scmp.ge.s32.totalorder %s28, 2
    %s30 = scalar_select %p29, 0, %s28
    %s31 = ssub.s32 %s18, %s30
    %p32 = scmp.eq.s32.totalorder %s31, 0
    %s34 = sadd.s32 %s33, 1
    %s35 = scalar_select %p32, %s33, %s34
    %p38 = pneg %p32
    %p39 = scmp.eq.s32.totalorder %s11, 1
    %p40 = por %p38, %p39
    %p41 = scmp.ne.s32.totalorder %s33, %s36
    %p42 = scmp.eq.s32.totalorder %s11, 0
    %p43 = por %p41, %p42
    %p44 = scmp.ne.s32.totalorder %s33, %s36
    %p45 = scmp.eq.s32.totalorder %s16, 1
    %p46 = por %p44, %p45
    %p47 = scmp.ne.s32.totalorder %s36, %s37
    %p48 = scmp.eq.s32.totalorder %s16, 0
    %p49 = por %p47, %p48
    %p50 = scmp.ne.s32.totalorder %s36, %s37
    %p51 = scmp.eq.s32.totalorder %s17, 1
    %p52 = por %p50, %p51
    %p54 = scmp.ne.s32.totalorder %s37, %s53
    %p55 = scmp.eq.s32.totalorder %s17, 0
    %p56 = por %p54, %p55
    %s58 = sadd.s32 %s57, 1
    %p61 = scmp.eq.s32.totalorder %s11, 1
    %p62 = scmp.ne.s32.totalorder %s57, %s59
    %p63 = scmp.eq.s32.totalorder %s11, 0
    %p64 = por %p62, %p63
    %p65 = scmp.ne.s32.totalorder %s57, %s59
    %p66 = scmp.eq.s32.totalorder %s16, 1
    %p67 = por %p65, %p66
    %p68 = scmp.ne.s32.totalorder %s59, %s60
    %p69 = scmp.eq.s32.totalorder %s16, 0
    %p70 = por %p68, %p69
    %p71 = scmp.ne.s32.totalorder %s59, %s60
    %p72 = scmp.eq.s32.totalorder %s17, 1
    %p73 = por %p71, %p72
    %p75 = scmp.ne.s32.totalorder %s60, %s74
    %p76 = scmp.eq.s32.totalorder %s17, 0
    %p77 = por %p75, %p76
    %s78 = ssub.s32 %s18, %s30
    %s79 = ssub.s32 %s19, %s26
    %s80 = sor.u32 %s78, %s79
    %p81 = scmp.eq.s32.totalorder %s80, 0
    %s83 = sadd.s32 %s82, 1
    %s84 = scalar_select %p81, %s82, %s83
    %p87 = pneg %p81
    %p88 = scmp.eq.s32.totalorder %s11, 1
    %p89 = por %p87, %p88
    %p90 = scmp.ne.s32.totalorder %s82, %s85
    %p91 = scmp.eq.s32.totalorder %s11, 0
    %p92 = por %p90, %p91
    %p93 = scmp.ne.s32.totalorder %s82, %s85
    %p94 = scmp.eq.s32.totalorder %s16, 1
    %p95 = por %p93, %p94
    %p96 = scmp.ne.s32.totalorder %s85, %s86
    %p97 = scmp.eq.s32.totalorder %s16, 0
    %p98 = por %p96, %p97
    %p99 = scmp.ne.s32.totalorder %s85, %s86
    %p100 = scmp.eq.s32.totalorder %s17, 1
    %p101 = por %p99, %p100
    %p103 = scmp.ne.s32.totalorder %s86, %s102
    %p104 = scmp.eq.s32.totalorder %s17, 0
    %p105 = por %p103, %p104
    %s106 = ssub.s32 %s18, %s30
    %s107 = ssub.s32 %s19, %s26
    %s108 = sor.u32 %s106, %s107
    %p109 = scmp.eq.s32.totalorder %s108, 0
    %s111 = sadd.s32 %s110, 1
    %s112 = scalar_select %p109, %s110, %s111
    %p115 = pneg %p109
    %p116 = scmp.eq.s32.totalorder %s11, 1
    %p117 = por %p115, %p116
    %p118 = scmp.ne.s32.totalorder %s110, %s113
    %p119 = scmp.eq.s32.totalorder %s11, 0
    %p120 = por %p118, %p119
    %p121 = scmp.ne.s32.totalorder %s110, %s113
    %p122 = scmp.eq.s32.totalorder %s16, 1
    %p123 = por %p121, %p122
    %p124 = scmp.ne.s32.totalorder %s113, %s114
    %p125 = scmp.eq.s32.totalorder %s16, 0
    %p126 = por %p124, %p125
    %p127 = scmp.ne.s32.totalorder %s113, %s114
    %p128 = scmp.eq.s32.totalorder %s17, 1
    %p129 = por %p127, %p128
    %p131 = scmp.ne.s32.totalorder %s114, %s130
    %p132 = scmp.eq.s32.totalorder %s17, 0
    %p133 = por %p131, %p132
    %s134 = ssub.s32 %s18, %s30
    %s135 = ssub.s32 %s19, %s26
    %s136 = sor.u32 %s134, %s135
    %p137 = scmp.eq.s32.totalorder %s136, 0
    %s139 = sadd.s32 %s138, 1
    %s140 = scalar_select %p137, %s138, %s139
    %p143 = pneg %p137
    %p144 = scmp.eq.s32.totalorder %s11, 1
    %p145 = por %p143, %p144
    %p146 = scmp.ne.s32.totalorder %s138, %s141
    %p147 = scmp.eq.s32.totalorder %s11, 0
    %p148 = por %p146, %p147
    %p149 = scmp.ne.s32.totalorder %s138, %s141
    %p150 = scmp.eq.s32.totalorder %s16, 1
    %p151 = por %p149, %p150
    %p152 = scmp.ne.s32.totalorder %s141, %s142
    %p153 = scmp.eq.s32.totalorder %s16, 0
    %p154 = por %p152, %p153
    %p155 = scmp.ne.s32.totalorder %s141, %s142
    %p156 = scmp.eq.s32.totalorder %s17, 1
    %p157 = por %p155, %p156
    %p159 = scmp.ne.s32.totalorder %s142, %s158
    %p160 = scmp.eq.s32.totalorder %s17, 0
    %p161 = por %p159, %p160
    %p162 = scmp.le.s32.totalorder 1, %s11
    %p163 = scmp.lt.s32.totalorder %s11, 3
    %p164 = pnand %p162, %p163
    %p165 = pneg %p164
    // Predicated region
    $region9: #{basic_block_forward.3} parent=5 // pred_check
      _
    $region10: #{basic_block_forward.3} parent=5 // pred_check_branch
      %167 = sbr.rel (%p164) target = $region12
    $region11: #{basic_block_forward.3} parent=5 // pred_region
      %s168 = ssub.s32 %s11, 1
      // Predicated region
      $region13: #{basic_block_forward.3} parent=11 // pred_check
        %p169 = pneg %p70
      $region14: #{basic_block_forward.3} parent=11 // pred_check_branch
        %171 = sbr.rel (%p169) target = $region16
      $region15: #{basic_block_forward.3} parent=11 // pred_region
        _
      $region16: #{basic_block_forward.3} parent=11 // pred_fallthru
        _
    $region12: #{basic_block_forward.3} parent=5 // pred_fallthru
      _
    %p172 = scmp.lt.s32.totalorder %s11, 2
    // Predicated region
    $region17: #{basic_block_forward.3} parent=5 // pred_check
      %p173 = pneg %p172
    $region18: #{basic_block_forward.3} parent=5 // pred_check_branch
      %175 = sbr.rel (%p173) target = $region20
    $region19: #{basic_block_forward.3} parent=5 // pred_region
      // Predicated region
      $region21: #{basic_block_forward.3} parent=19 // pred_check
        %p176 = pneg %p43
      $region22: #{basic_block_forward.3} parent=19 // pred_check_branch
        %178 = sbr.rel (%p176) target = $region24
      $region23: #{basic_block_forward.3} parent=19 // pred_region
        %p179 = scmp.lt.s32.totalorder %s18, 1
        %s180 = scalar_select %p179, %s18, 1
        %s181 = smul.addr %s180, 72
        %s182 = smul.addr %s181, 4
        %s183 = scalar_lea.vmem %s0, %s182
      $region24: #{basic_block_forward.3} parent=19 // pred_fallthru
        _
    $region20: #{basic_block_forward.3} parent=5 // pred_fallthru
      _
    %p184 = scmp.le.s32.totalorder 1, %s11
    %p185 = scmp.lt.s32.totalorder %s11, 3
    %p186 = pnand %p184, %p185
    %p187 = pneg %p186
    // Predicated region
    $region25: #{basic_block_forward.3} parent=5 // pred_check
      _
    $region26: #{basic_block_forward.3} parent=5 // pred_check_branch
      %189 = sbr.rel (%p186) target = $region28
    $region27: #{basic_block_forward.3} parent=5 // pred_region
      %s190 = ssub.s32 %s11, 1
      %p191 = scmp.lt.s32.totalorder %s20, 1
      %s192 = scalar_select %p191, %s20, 1
      %s193 = smul.addr %s192, 72
      %s194 = smul.addr %s193, 4
      %s195 = scalar_lea.vmem %s0, %s194
      %p196 = pneg %p49
      %p197 = pneg %p46
      %p198 = pneg %p70
      %p199 = pneg %p67
      %p200 = pneg %p98
      %p201 = pneg %p95
      %s202 = smul.u32 8, %s20
      %p203 = scmp.lt.s32.totalorder %s202, 15
      %s204 = scalar_select %p203, %s202, 15
      %p205 = scmp.lt.s32.totalorder %s21, 0
      %s206 = scalar_select %p205, %s21, 0
      %s207 = sadd.s32 %s206, %s204
      %s208 = smul.addr %s207, 4
      %s209 = scalar_lea.vmem %s2, %s208
      %p210 = pneg %p126
      %p211 = pneg %p123
      %p212 = scmp.lt.s32.totalorder %s20, 1
      %s213 = scalar_select %p212, %s20, 1
      %p214 = scmp.lt.s32.totalorder %s21, 0
      %s215 = scalar_select %p214, %s21, 0
      %s216 = sadd.s32 %s215, %s213
      %s217 = scalar_lea.vmem %s3, %s216
      %p218 = pneg %p154
      %p219 = pneg %p151
      %p220 = scmp.lt.s32.totalorder %s20, 1
      %s221 = scalar_select %p220, %s20, 1
      %p222 = scmp.lt.s32.totalorder %s21, 0
      %s223 = scalar_select %p222, %s21, 0
      %s224 = sadd.s32 %s223, %s221
      %s225 = scalar_lea.vmem %s4, %s224
      %p226 = scmp.lt.s32.totalorder %s20, 1
      %s227 = scalar_select %p226, %s20, 1
      %s228 = smul.addr %s227, 72
      %s229 = smul.addr %s228, 4
      %s230 = scalar_lea.vmem %s0, %s229
      %s231 = smul.u32 8, %s20
      %p232 = scmp.lt.s32.totalorder %s231, 15
      %s233 = scalar_select %p232, %s231, 15
      %p234 = scmp.lt.s32.totalorder %s21, 0
      %s235 = scalar_select %p234, %s21, 0
      %s236 = sadd.s32 %s235, %s233
      %s237 = smul.addr %s236, 4
      %s238 = scalar_lea.vmem %s2, %s237
      %s239 = smul.u32 8, %s20
      %p240 = scmp.lt.s32.totalorder %s20, 1
      %s241 = scalar_select %p240, %s20, 1
      %p242 = scmp.lt.s32.totalorder %s21, 0
      %s243 = scalar_select %p242, %s21, 0
      %s244 = sadd.s32 %s243, %s241
      %s245 = scalar_lea.vmem %s3, %s244
      %p246 = scmp.lt.s32.totalorder %s20, 1
      %s247 = scalar_select %p246, %s20, 1
      %p248 = scmp.lt.s32.totalorder %s21, 0
      %s249 = scalar_select %p248, %s21, 0
      %s250 = sadd.s32 %s249, %s247
      %s251 = scalar_lea.vmem %s4, %s250
      %p253 = scmp.eq.s32.totalorder %s21, 0
      // Predicated region
      $region29: #{basic_block_forward.3} parent=27 // pred_check
        %p254 = pneg %p253
      $region30: #{basic_block_forward.3} parent=27 // pred_check_branch
        %256 = sbr.rel (%p254) target = $region32
      $region31: #{basic_block_forward.3} parent=27 // pred_region
        %v257 = vld [vmem:[%s230] sm:$0xf]
        %v258 = vld [vmem:[%s230 + $0x8] sm:$0xf]
        %v259 = vld [vmem:[%s230 + $0x10] sm:$0xf]
        %v260 = vld [vmem:[%s230 + $0x18] sm:$0xf]
        %v261 = vld [vmem:[%s230 + $0x20] sm:$0xf]
        %v262 = vld [vmem:[%s230 + $0x28] sm:$0xf]
        %v263 = vld [vmem:[%s230 + $0x30] sm:$0xf]
        %v264 = vld [vmem:[%s230 + $0x38] sm:$0xf]
        %vm265 = vcmask 27648
        %266 = vst.msk [vmem:[#allocation2] sm:$0xf] %vm265, %v257
        %267 = vst.msk [vmem:[#allocation2 + $0x4] sm:$0xf] %vm265, %v258
        %268 = vst.msk [vmem:[#allocation2 + $0x8] sm:$0xf] %vm265, %v259
        %269 = vst.msk [vmem:[#allocation2 + $0xc] sm:$0xf] %vm265, %v260
        %270 = vst.msk [vmem:[#allocation2 + $0x10] sm:$0xf] %vm265, %v261
        %271 = vst.msk [vmem:[#allocation2 + $0x14] sm:$0xf] %vm265, %v262
        %272 = vst.msk [vmem:[#allocation2 + $0x18] sm:$0xf] %vm265, %v263
        %273 = vst.msk [vmem:[#allocation2 + $0x1c] sm:$0xf] %vm265, %v264
        %s274 = scalar_lea.vmem %s230, 72
        %v275 = vld [vmem:[%s274] sm:$0xf]
        %v276 = vld [vmem:[%s274 + $0x8] sm:$0xf]
        %v277 = vld [vmem:[%s274 + $0x10] sm:$0xf]
        %v278 = vld [vmem:[%s274 + $0x18] sm:$0xf]
        %v279 = vld [vmem:[%s274 + $0x20] sm:$0xf]
        %v280 = vld [vmem:[%s274 + $0x28] sm:$0xf]
        %v281 = vld [vmem:[%s274 + $0x30] sm:$0xf]
        %v282 = vld [vmem:[%s274 + $0x38] sm:$0xf]
        %291 = vrot.lane.b32.xlu0 %v275, 4
        %v292 = vpop.permute.xlu0 %291
        %293 = vrot.lane.b32.xlu0 %v276, 4
        %v294 = vpop.permute.xlu0 %293
        %295 = vrot.lane.b32.xlu0 %v277, 4
        %v296 = vpop.permute.xlu0 %295
        %297 = vrot.lane.b32.xlu0 %v278, 4
        %v298 = vpop.permute.xlu0 %297
        %299 = vrot.lane.b32.xlu0 %v279, 4
        %v300 = vpop.permute.xlu0 %299
        %301 = vrot.lane.b32.xlu0 %v280, 4
        %v302 = vpop.permute.xlu0 %301
        %303 = vrot.lane.b32.xlu0 %v281, 4
        %v304 = vpop.permute.xlu0 %303
        %305 = vrot.lane.b32.xlu0 %v282, 4
        %v306 = vpop.permute.xlu0 %305
        %vm315 = vcmask 60448
        %316 = vst.msk [vmem:[#allocation2] sm:$0xf] %vm315, %v292
        %317 = vst.msk [vmem:[#allocation2 + $0x4] sm:$0xf] %vm315, %v294
        %318 = vst.msk [vmem:[#allocation2 + $0x8] sm:$0xf] %vm315, %v296
        %319 = vst.msk [vmem:[#allocation2 + $0xc] sm:$0xf] %vm315, %v298
        %320 = vst.msk [vmem:[#allocation2 + $0x10] sm:$0xf] %vm315, %v300
        %321 = vst.msk [vmem:[#allocation2 + $0x14] sm:$0xf] %vm315, %v302
        %322 = vst.msk [vmem:[#allocation2 + $0x18] sm:$0xf] %vm315, %v304
        %323 = vst.msk [vmem:[#allocation2 + $0x1c] sm:$0xf] %vm315, %v306
        %v324 = vld [vmem:[%s230] sm:$0xf]
        %v325 = vld [vmem:[%s230 + $0x4] sm:$0x1]
        %v326 = vld [vmem:[%s230 + $0x8] sm:$0xf]
        %v327 = vld [vmem:[%s230 + $0xc] sm:$0x1]
        %v328 = vld [vmem:[%s230 + $0x10] sm:$0xf]
        %v329 = vld [vmem:[%s230 + $0x14] sm:$0x1]
        %v330 = vld [vmem:[%s230 + $0x18] sm:$0xf]
        %v331 = vld [vmem:[%s230 + $0x1c] sm:$0x1]
        %v332 = vld [vmem:[%s230 + $0x20] sm:$0xf]
        %v333 = vld [vmem:[%s230 + $0x24] sm:$0x1]
        %v334 = vld [vmem:[%s230 + $0x28] sm:$0xf]
        %v335 = vld [vmem:[%s230 + $0x2c] sm:$0x1]
        %v336 = vld [vmem:[%s230 + $0x30] sm:$0xf]
        %v337 = vld [vmem:[%s230 + $0x34] sm:$0x1]
        %v338 = vld [vmem:[%s230 + $0x38] sm:$0xf]
        %v339 = vld [vmem:[%s230 + $0x3c] sm:$0x1]
        %vm340 = vsmask.f32 3328
        %vm341 = vsmask.f32 7440
        %vm342 = vmor %vm340, %vm341
        %v344 = vshrl.u32 %v324, 16
        %v346 = vrot.slane %v344, 4
        %v347 = vshll.u32 %v324, 16
        %v349 = vrot.slane %v347, 5
        %v350 = vor.u32 %v346, %v349
        %v351 = vrot.slane %v350, 4
        %v353 = vshll.u32 %v325, 16
        %v355 = vrot.slane %v353, 5
        %v356 = vsel %vm342, %v351, %v355
        %v358 = vshrl.u32 %v326, 16
        %v360 = vrot.slane %v358, 4
        %v361 = vshll.u32 %v326, 16
        %v363 = vrot.slane %v361, 5
        %v364 = vor.u32 %v360, %v363
        %v365 = vrot.slane %v364, 4
        %v367 = vshll.u32 %v327, 16
        %v369 = vrot.slane %v367, 5
        %v370 = vsel %vm342, %v365, %v369
        %v372 = vshrl.u32 %v328, 16
        %v374 = vrot.slane %v372, 4
        %v375 = vshll.u32 %v328, 16
        %v377 = vrot.slane %v375, 5
        %v378 = vor.u32 %v374, %v377
        %v379 = vrot.slane %v378, 4
        %v381 = vshll.u32 %v329, 16
        %v383 = vrot.slane %v381, 5
        %v384 = vsel %vm342, %v379, %v383
        %v386 = vshrl.u32 %v330, 16
        %v388 = vrot.slane %v386, 4
        %v389 = vshll.u32 %v330, 16
        %v391 = vrot.slane %v389, 5
        %v392 = vor.u32 %v388, %v391
        %v393 = vrot.slane %v392, 4
        %v395 = vshll.u32 %v331, 16
        %v397 = vrot.slane %v395, 5
        %v398 = vsel %vm342, %v393, %v397
        %v400 = vshrl.u32 %v332, 16
        %v402 = vrot.slane %v400, 4
        %v403 = vshll.u32 %v332, 16
        %v405 = vrot.slane %v403, 5
        %v406 = vor.u32 %v402, %v405
        %v407 = vrot.slane %v406, 4
        %v409 = vshll.u32 %v333, 16
        %v411 = vrot.slane %v409, 5
        %v412 = vsel %vm342, %v407, %v411
        %v414 = vshrl.u32 %v334, 16
        %v416 = vrot.slane %v414, 4
        %v417 = vshll.u32 %v334, 16
        %v419 = vrot.slane %v417, 5
        %v420 = vor.u32 %v416, %v419
        %v421 = vrot.slane %v420, 4
        %v423 = vshll.u32 %v335, 16
        %v425 = vrot.slane %v423, 5
        %v426 = vsel %vm342, %v421, %v425
        %v428 = vshrl.u32 %v336, 16
        %v430 = vrot.slane %v428, 4
        %v431 = vshll.u32 %v336, 16
        %v433 = vrot.slane %v431, 5
        %v434 = vor.u32 %v430, %v433
        %v435 = vrot.slane %v434, 4
        %v437 = vshll.u32 %v337, 16
        %v439 = vrot.slane %v437, 5
        %v440 = vsel %vm342, %v435, %v439
        %v442 = vshrl.u32 %v338, 16
        %v444 = vrot.slane %v442, 4
        %v445 = vshll.u32 %v338, 16
        %v447 = vrot.slane %v445, 5
        %v448 = vor.u32 %v444, %v447
        %v449 = vrot.slane %v448, 4
        %v451 = vshll.u32 %v339, 16
        %v453 = vrot.slane %v451, 5
        %v454 = vsel %vm342, %v449, %v453
        %455 = vrot.lane.b32.xlu0 %v356, 8
        %v456 = vpop.permute.xlu0 %455
        %457 = vrot.lane.b32.xlu0 %v370, 8
        %v458 = vpop.permute.xlu0 %457
        %459 = vrot.lane.b32.xlu0 %v384, 8
        %v460 = vpop.permute.xlu0 %459
        %461 = vrot.lane.b32.xlu0 %v398, 8
        %v462 = vpop.permute.xlu0 %461
        %463 = vrot.lane.b32.xlu0 %v412, 8
        %v464 = vpop.permute.xlu0 %463
        %465 = vrot.lane.b32.xlu0 %v426, 8
        %v466 = vpop.permute.xlu0 %465
        %467 = vrot.lane.b32.xlu0 %v440, 8
        %v468 = vpop.permute.xlu0 %467
        %469 = vrot.lane.b32.xlu0 %v454, 8
        %v470 = vpop.permute.xlu0 %469
        %vm479 = vcmask 93248
        %480 = vst.msk [vmem:[#allocation2] sm:$0xf] %vm479, %v456
        %481 = vst.msk [vmem:[#allocation2 + $0x4] sm:$0xf] %vm479, %v458
        %482 = vst.msk [vmem:[#allocation2 + $0x8] sm:$0xf] %vm479, %v460
        %483 = vst.msk [vmem:[#allocation2 + $0xc] sm:$0xf] %vm479, %v462
        %484 = vst.msk [vmem:[#allocation2 + $0x10] sm:$0xf] %vm479, %v464
        %485 = vst.msk [vmem:[#allocation2 + $0x14] sm:$0xf] %vm479, %v466
        %486 = vst.msk [vmem:[#allocation2 + $0x18] sm:$0xf] %vm479, %v468
        %487 = vst.msk [vmem:[#allocation2 + $0x1c] sm:$0xf] %vm479, %v470
        %s488 = scalar_lea.vmem %s230, 144
        %v489 = vld [vmem:[%s488] sm:$0xf]
        %v490 = vld [vmem:[%s488 + $0x8] sm:$0xf]
        %v491 = vld [vmem:[%s488 + $0x10] sm:$0xf]
        %v492 = vld [vmem:[%s488 + $0x18] sm:$0xf]
        %v493 = vld [vmem:[%s488 + $0x20] sm:$0xf]
        %v494 = vld [vmem:[%s488 + $0x28] sm:$0xf]
        %v495 = vld [vmem:[%s488 + $0x30] sm:$0xf]
        %v496 = vld [vmem:[%s488 + $0x38] sm:$0xf]
        %s497 = scalar_lea.vmem [#allocation2], 32
        %498 = vst.msk [vmem:[%s497] sm:$0xf] %vm265, %v489
        %499 = vst.msk [vmem:[%s497 + $0x4] sm:$0xf] %vm265, %v490
        %500 = vst.msk [vmem:[%s497 + $0x8] sm:$0xf] %vm265, %v491
        %501 = vst.msk [vmem:[%s497 + $0xc] sm:$0xf] %vm265, %v492
        %502 = vst.msk [vmem:[%s497 + $0x10] sm:$0xf] %vm265, %v493
        %503 = vst.msk [vmem:[%s497 + $0x14] sm:$0xf] %vm265, %v494
        %504 = vst.msk [vmem:[%s497 + $0x18] sm:$0xf] %vm265, %v495
        %505 = vst.msk [vmem:[%s497 + $0x1c] sm:$0xf] %vm265, %v496
        %s506 = scalar_lea.vmem %s230, 216
        %v507 = vld [vmem:[%s506] sm:$0xf]
        %v508 = vld [vmem:[%s506 + $0x8] sm:$0xf]
        %v509 = vld [vmem:[%s506 + $0x10] sm:$0xf]
        %v510 = vld [vmem:[%s506 + $0x18] sm:$0xf]
        %v511 = vld [vmem:[%s506 + $0x20] sm:$0xf]
        %v512 = vld [vmem:[%s506 + $0x28] sm:$0xf]
        %v513 = vld [vmem:[%s506 + $0x30] sm:$0xf]
        %v514 = vld [vmem:[%s506 + $0x38] sm:$0xf]
        %523 = vrot.lane.b32.xlu0 %v507, 4
        %v524 = vpop.permute.xlu0 %523
        %525 = vrot.lane.b32.xlu0 %v508, 4
        %v526 = vpop.permute.xlu0 %525
        %527 = vrot.lane.b32.xlu0 %v509, 4
        %v528 = vpop.permute.xlu0 %527
        %529 = vrot.lane.b32.xlu0 %v510, 4
        %v530 = vpop.permute.xlu0 %529
        %531 = vrot.lane.b32.xlu0 %v511, 4
        %v532 = vpop.permute.xlu0 %531
        %533 = vrot.lane.b32.xlu0 %v512, 4
        %v534 = vpop.permute.xlu0 %533
        %535 = vrot.lane.b32.xlu0 %v513, 4
        %v536 = vpop.permute.xlu0 %535
        %537 = vrot.lane.b32.xlu0 %v514, 4
        %v538 = vpop.permute.xlu0 %537
        %547 = vst.msk [vmem:[%s497] sm:$0xf] %vm315, %v524
        %548 = vst.msk [vmem:[%s497 + $0x4] sm:$0xf] %vm315, %v526
        %549 = vst.msk [vmem:[%s497 + $0x8] sm:$0xf] %vm315, %v528
        %550 = vst.msk [vmem:[%s497 + $0xc] sm:$0xf] %vm315, %v530
        %551 = vst.msk [vmem:[%s497 + $0x10] sm:$0xf] %vm315, %v532
        %552 = vst.msk [vmem:[%s497 + $0x14] sm:$0xf] %vm315, %v534
        %553 = vst.msk [vmem:[%s497 + $0x18] sm:$0xf] %vm315, %v536
        %554 = vst.msk [vmem:[%s497 + $0x1c] sm:$0xf] %vm315, %v538
        %v555 = vld [vmem:[%s488] sm:$0xf]
        %v556 = vld [vmem:[%s488 + $0x4] sm:$0x1]
        %v557 = vld [vmem:[%s488 + $0x8] sm:$0xf]
        %v558 = vld [vmem:[%s488 + $0xc] sm:$0x1]
        %v559 = vld [vmem:[%s488 + $0x10] sm:$0xf]
        %v560 = vld [vmem:[%s488 + $0x14] sm:$0x1]
        %v561 = vld [vmem:[%s488 + $0x18] sm:$0xf]
        %v562 = vld [vmem:[%s488 + $0x1c] sm:$0x1]
        %v563 = vld [vmem:[%s488 + $0x20] sm:$0xf]
        %v564 = vld [vmem:[%s488 + $0x24] sm:$0x1]
        %v565 = vld [vmem:[%s488 + $0x28] sm:$0xf]
        %v566 = vld [vmem:[%s488 + $0x2c] sm:$0x1]
        %v567 = vld [vmem:[%s488 + $0x30] sm:$0xf]
        %v568 = vld [vmem:[%s488 + $0x34] sm:$0x1]
        %v569 = vld [vmem:[%s488 + $0x38] sm:$0xf]
        %v570 = vld [vmem:[%s488 + $0x3c] sm:$0x1]
        %v572 = vshrl.u32 %v555, 16
        %v574 = vrot.slane %v572, 4
        %v575 = vshll.u32 %v555, 16
        %v577 = vrot.slane %v575, 5
        %v578 = vor.u32 %v574, %v577
        %v579 = vrot.slane %v578, 4
        %v581 = vshll.u32 %v556, 16
        %v583 = vrot.slane %v581, 5
        %v584 = vsel %vm342, %v579, %v583
        %v586 = vshrl.u32 %v557, 16
        %v588 = vrot.slane %v586, 4
        %v589 = vshll.u32 %v557, 16
        %v591 = vrot.slane %v589, 5
        %v592 = vor.u32 %v588, %v591
        %v593 = vrot.slane %v592, 4
        %v595 = vshll.u32 %v558, 16
        %v597 = vrot.slane %v595, 5
        %v598 = vsel %vm342, %v593, %v597
        %v600 = vshrl.u32 %v559, 16
        %v602 = vrot.slane %v600, 4
        %v603 = vshll.u32 %v559, 16
        %v605 = vrot.slane %v603, 5
        %v606 = vor.u32 %v602, %v605
        %v607 = vrot.slane %v606, 4
        %v609 = vshll.u32 %v560, 16
        %v611 = vrot.slane %v609, 5
        %v612 = vsel %vm342, %v607, %v611
        %v614 = vshrl.u32 %v561, 16
        %v616 = vrot.slane %v614, 4
        %v617 = vshll.u32 %v561, 16
        %v619 = vrot.slane %v617, 5
        %v620 = vor.u32 %v616, %v619
        %v621 = vrot.slane %v620, 4
        %v623 = vshll.u32 %v562, 16
        %v625 = vrot.slane %v623, 5
        %v626 = vsel %vm342, %v621, %v625
        %v628 = vshrl.u32 %v563, 16
        %v630 = vrot.slane %v628, 4
        %v631 = vshll.u32 %v563, 16
        %v633 = vrot.slane %v631, 5
        %v634 = vor.u32 %v630, %v633
        %v635 = vrot.slane %v634, 4
        %v637 = vshll.u32 %v564, 16
        %v639 = vrot.slane %v637, 5
        %v640 = vsel %vm342, %v635, %v639
        %v642 = vshrl.u32 %v565, 16
        %v644 = vrot.slane %v642, 4
        %v645 = vshll.u32 %v565, 16
        %v647 = vrot.slane %v645, 5
        %v648 = vor.u32 %v644, %v647
        %v649 = vrot.slane %v648, 4
        %v651 = vshll.u32 %v566, 16
        %v653 = vrot.slane %v651, 5
        %v654 = vsel %vm342, %v649, %v653
        %v656 = vshrl.u32 %v567, 16
        %v658 = vrot.slane %v656, 4
        %v659 = vshll.u32 %v567, 16
        %v661 = vrot.slane %v659, 5
        %v662 = vor.u32 %v658, %v661
        %v663 = vrot.slane %v662, 4
        %v665 = vshll.u32 %v568, 16
        %v667 = vrot.slane %v665, 5
        %v668 = vsel %vm342, %v663, %v667
        %v670 = vshrl.u32 %v569, 16
        %v672 = vrot.slane %v670, 4
        %v673 = vshll.u32 %v569, 16
        %v675 = vrot.slane %v673, 5
        %v676 = vor.u32 %v672, %v675
        %v677 = vrot.slane %v676, 4
        %v679 = vshll.u32 %v570, 16
        %v681 = vrot.slane %v679, 5
        %v682 = vsel %vm342, %v677, %v681
        %683 = vrot.lane.b32.xlu0 %v584, 8
        %v684 = vpop.permute.xlu0 %683
        %685 = vrot.lane.b32.xlu0 %v598, 8
        %v686 = vpop.permute.xlu0 %685
        %687 = vrot.lane.b32.xlu0 %v612, 8
        %v688 = vpop.permute.xlu0 %687
        %689 = vrot.lane.b32.xlu0 %v626, 8
        %v690 = vpop.permute.xlu0 %689
        %691 = vrot.lane.b32.xlu0 %v640, 8
        %v692 = vpop.permute.xlu0 %691
        %693 = vrot.lane.b32.xlu0 %v654, 8
        %v694 = vpop.permute.xlu0 %693
        %695 = vrot.lane.b32.xlu0 %v668, 8
        %v696 = vpop.permute.xlu0 %695
        %697 = vrot.lane.b32.xlu0 %v682, 8
        %v698 = vpop.permute.xlu0 %697
        %707 = vst.msk [vmem:[%s497] sm:$0xf] %vm479, %v684
        %708 = vst.msk [vmem:[%s497 + $0x4] sm:$0xf] %vm479, %v686
        %709 = vst.msk [vmem:[%s497 + $0x8] sm:$0xf] %vm479, %v688
        %710 = vst.msk [vmem:[%s497 + $0xc] sm:$0xf] %vm479, %v690
        %711 = vst.msk [vmem:[%s497 + $0x10] sm:$0xf] %vm479, %v692
        %712 = vst.msk [vmem:[%s497 + $0x14] sm:$0xf] %vm479, %v694
        %713 = vst.msk [vmem:[%s497 + $0x18] sm:$0xf] %vm479, %v696
        %714 = vst.msk [vmem:[%s497 + $0x1c] sm:$0xf] %vm479, %v698
        %s715 = scalar_lea.vmem %s230, 8
        %v716 = vld [vmem:[%s715] sm:$0xf]
        %v717 = vld [vmem:[%s715 + $0x8] sm:$0xf]
        %v718 = vld [vmem:[%s715 + $0x10] sm:$0xf]
        %v719 = vld [vmem:[%s715 + $0x18] sm:$0xf]
        %v720 = vld [vmem:[%s715 + $0x20] sm:$0xf]
        %v721 = vld [vmem:[%s715 + $0x28] sm:$0xf]
        %v722 = vld [vmem:[%s715 + $0x30] sm:$0xf]
        %v723 = vld [vmem:[%s715 + $0x38] sm:$0xf]
        %s724 = scalar_lea.vmem [#allocation2], 64
        %725 = vst.msk [vmem:[%s724] sm:$0xf] %vm265, %v716
        %726 = vst.msk [vmem:[%s724 + $0x4] sm:$0xf] %vm265, %v717
        %727 = vst.msk [vmem:[%s724 + $0x8] sm:$0xf] %vm265, %v718
        %728 = vst.msk [vmem:[%s724 + $0xc] sm:$0xf] %vm265, %v719
        %729 = vst.msk [vmem:[%s724 + $0x10] sm:$0xf] %vm265, %v720
        %730 = vst.msk [vmem:[%s724 + $0x14] sm:$0xf] %vm265, %v721
        %731 = vst.msk [vmem:[%s724 + $0x18] sm:$0xf] %vm265, %v722
        %732 = vst.msk [vmem:[%s724 + $0x1c] sm:$0xf] %vm265, %v723
        %s733 = scalar_lea.vmem %s230, 80
        %v734 = vld [vmem:[%s733] sm:$0xf]
        %v735 = vld [vmem:[%s733 + $0x8] sm:$0xf]
        %v736 = vld [vmem:[%s733 + $0x10] sm:$0xf]
        %v737 = vld [vmem:[%s733 + $0x18] sm:$0xf]
        %v738 = vld [vmem:[%s733 + $0x20] sm:$0xf]
        %v739 = vld [vmem:[%s733 + $0x28] sm:$0xf]
        %v740 = vld [vmem:[%s733 + $0x30] sm:$0xf]
        %v741 = vld [vmem:[%s733 + $0x38] sm:$0xf]
        %750 = vrot.lane.b32.xlu0 %v734, 4
        %v751 = vpop.permute.xlu0 %750
        %752 = vrot.lane.b32.xlu0 %v735, 4
        %v753 = vpop.permute.xlu0 %752
        %754 = vrot.lane.b32.xlu0 %v736, 4
        %v755 = vpop.permute.xlu0 %754
        %756 = vrot.lane.b32.xlu0 %v737, 4
        %v757 = vpop.permute.xlu0 %756
        %758 = vrot.lane.b32.xlu0 %v738, 4
        %v759 = vpop.permute.xlu0 %758
        %760 = vrot.lane.b32.xlu0 %v739, 4
        %v761 = vpop.permute.xlu0 %760
        %762 = vrot.lane.b32.xlu0 %v740, 4
        %v763 = vpop.permute.xlu0 %762
        %764 = vrot.lane.b32.xlu0 %v741, 4
        %v765 = vpop.permute.xlu0 %764
        %774 = vst.msk [vmem:[%s724] sm:$0xf] %vm315, %v751
        %775 = vst.msk [vmem:[%s724 + $0x4] sm:$0xf] %vm315, %v753
        %776 = vst.msk [vmem:[%s724 + $0x8] sm:$0xf] %vm315, %v755
        %777 = vst.msk [vmem:[%s724 + $0xc] sm:$0xf] %vm315, %v757
        %778 = vst.msk [vmem:[%s724 + $0x10] sm:$0xf] %vm315, %v759
        %779 = vst.msk [vmem:[%s724 + $0x14] sm:$0xf] %vm315, %v761
        %780 = vst.msk [vmem:[%s724 + $0x18] sm:$0xf] %vm315, %v763
        %781 = vst.msk [vmem:[%s724 + $0x1c] sm:$0xf] %vm315, %v765
        %v782 = vld [vmem:[%s715] sm:$0xf]
        %v783 = vld [vmem:[%s715 + $0x4] sm:$0x1]
        %v784 = vld [vmem:[%s715 + $0x8] sm:$0xf]
        %v785 = vld [vmem:[%s715 + $0xc] sm:$0x1]
        %v786 = vld [vmem:[%s715 + $0x10] sm:$0xf]
        %v787 = vld [vmem:[%s715 + $0x14] sm:$0x1]
        %v788 = vld [vmem:[%s715 + $0x18] sm:$0xf]
        %v789 = vld [vmem:[%s715 + $0x1c] sm:$0x1]
        %v790 = vld [vmem:[%s715 + $0x20] sm:$0xf]
        %v791 = vld [vmem:[%s715 + $0x24] sm:$0x1]
        %v792 = vld [vmem:[%s715 + $0x28] sm:$0xf]
        %v793 = vld [vmem:[%s715 + $0x2c] sm:$0x1]
        %v794 = vld [vmem:[%s715 + $0x30] sm:$0xf]
        %v795 = vld [vmem:[%s715 + $0x34] sm:$0x1]
        %v796 = vld [vmem:[%s715 + $0x38] sm:$0xf]
        %v797 = vld [vmem:[%s715 + $0x3c] sm:$0x1]
        %v799 = vshrl.u32 %v782, 16
        %v801 = vrot.slane %v799, 4
        %v802 = vshll.u32 %v782, 16
        %v804 = vrot.slane %v802, 5
        %v805 = vor.u32 %v801, %v804
        %v806 = vrot.slane %v805, 4
        %v808 = vshll.u32 %v783, 16
        %v810 = vrot.slane %v808, 5
        %v811 = vsel %vm342, %v806, %v810
        %v813 = vshrl.u32 %v784, 16
        %v815 = vrot.slane %v813, 4
        %v816 = vshll.u32 %v784, 16
        %v818 = vrot.slane %v816, 5
        %v819 = vor.u32 %v815, %v818
        %v820 = vrot.slane %v819, 4
        %v822 = vshll.u32 %v785, 16
        %v824 = vrot.slane %v822, 5
        %v825 = vsel %vm342, %v820, %v824
        %v827 = vshrl.u32 %v786, 16
        %v829 = vrot.slane %v827, 4
        %v830 = vshll.u32 %v786, 16
        %v832 = vrot.slane %v830, 5
        %v833 = vor.u32 %v829, %v832
        %v834 = vrot.slane %v833, 4
        %v836 = vshll.u32 %v787, 16
        %v838 = vrot.slane %v836, 5
        %v839 = vsel %vm342, %v834, %v838
        %v841 = vshrl.u32 %v788, 16
        %v843 = vrot.slane %v841, 4
        %v844 = vshll.u32 %v788, 16
        %v846 = vrot.slane %v844, 5
        %v847 = vor.u32 %v843, %v846
        %v848 = vrot.slane %v847, 4
        %v850 = vshll.u32 %v789, 16
        %v852 = vrot.slane %v850, 5
        %v853 = vsel %vm342, %v848, %v852
        %v855 = vshrl.u32 %v790, 16
        %v857 = vrot.slane %v855, 4
        %v858 = vshll.u32 %v790, 16
        %v860 = vrot.slane %v858, 5
        %v861 = vor.u32 %v857, %v860
        %v862 = vrot.slane %v861, 4
        %v864 = vshll.u32 %v791, 16
        %v866 = vrot.slane %v864, 5
        %v867 = vsel %vm342, %v862, %v866
        %v869 = vshrl.u32 %v792, 16
        %v871 = vrot.slane %v869, 4
        %v872 = vshll.u32 %v792, 16
        %v874 = vrot.slane %v872, 5
        %v875 = vor.u32 %v871, %v874
        %v876 = vrot.slane %v875, 4
        %v878 = vshll.u32 %v793, 16
        %v880 = vrot.slane %v878, 5
        %v881 = vsel %vm342, %v876, %v880
        %v883 = vshrl.u32 %v794, 16
        %v885 = vrot.slane %v883, 4
        %v886 = vshll.u32 %v794, 16
        %v888 = vrot.slane %v886, 5
        %v889 = vor.u32 %v885, %v888
        %v890 = vrot.slane %v889, 4
        %v892 = vshll.u32 %v795, 16
        %v894 = vrot.slane %v892, 5
        %v895 = vsel %vm342, %v890, %v894
        %v897 = vshrl.u32 %v796, 16
        %v899 = vrot.slane %v897, 4
        %v900 = vshll.u32 %v796, 16
        %v902 = vrot.slane %v900, 5
        %v903 = vor.u32 %v899, %v902
        %v904 = vrot.slane %v903, 4
        %v906 = vshll.u32 %v797, 16
        %v908 = vrot.slane %v906, 5
        %v909 = vsel %vm342, %v904, %v908
        %910 = vrot.lane.b32.xlu0 %v811, 8
        %v911 = vpop.permute.xlu0 %910
        %912 = vrot.lane.b32.xlu0 %v825, 8
        %v913 = vpop.permute.xlu0 %912
        %914 = vrot.lane.b32.xlu0 %v839, 8
        %v915 = vpop.permute.xlu0 %914
        %916 = vrot.lane.b32.xlu0 %v853, 8
        %v917 = vpop.permute.xlu0 %916
        %918 = vrot.lane.b32.xlu0 %v867, 8
        %v919 = vpop.permute.xlu0 %918
        %920 = vrot.lane.b32.xlu0 %v881, 8
        %v921 = vpop.permute.xlu0 %920
        %922 = vrot.lane.b32.xlu0 %v895, 8
        %v923 = vpop.permute.xlu0 %922
        %924 = vrot.lane.b32.xlu0 %v909, 8
        %v925 = vpop.permute.xlu0 %924
        %934 = vst.msk [vmem:[%s724] sm:$0xf] %vm479, %v911
        %935 = vst.msk [vmem:[%s724 + $0x4] sm:$0xf] %vm479, %v913
        %936 = vst.msk [vmem:[%s724 + $0x8] sm:$0xf] %vm479, %v915
        %937 = vst.msk [vmem:[%s724 + $0xc] sm:$0xf] %vm479, %v917
        %938 = vst.msk [vmem:[%s724 + $0x10] sm:$0xf] %vm479, %v919
        %939 = vst.msk [vmem:[%s724 + $0x14] sm:$0xf] %vm479, %v921
        %940 = vst.msk [vmem:[%s724 + $0x18] sm:$0xf] %vm479, %v923
        %941 = vst.msk [vmem:[%s724 + $0x1c] sm:$0xf] %vm479, %v925
      $region32: #{basic_block_forward.3} parent=27 // pred_fallthru
        _
      %v942 = vld [vmem:[#allocation2] sm:$0xf]
      %v943 = vld [vmem:[#allocation2 + $0x4] sm:$0xf]
      %v944 = vld [vmem:[#allocation2 + $0x8] sm:$0xf]
      %v945 = vld [vmem:[#allocation2 + $0xc] sm:$0xf]
      %v946 = vld [vmem:[#allocation2 + $0x10] sm:$0xf]
      %v947 = vld [vmem:[#allocation2 + $0x14] sm:$0xf]
      %v948 = vld [vmem:[#allocation2 + $0x18] sm:$0xf]
      %v949 = vld [vmem:[#allocation2 + $0x1c] sm:$0xf]
      %s950 = smul.u32 %s21, 3
      %s951 = smul.u32 %s950, 2
      %s952 = smul.addr %s951, 4
      %s953 = scalar_lea.vmem %s1, %s952
      %v954 = vld [vmem:[%s953] sm:$0xf]
      %v955 = vld [vmem:[%s953 + $0x4] sm:$0x3]
      %s956 = scalar_lea.vmem [#allocation2], 32
      %v957 = vld [vmem:[%s956] sm:$0xf]
      %v958 = vld [vmem:[%s956 + $0x4] sm:$0xf]
      %v959 = vld [vmem:[%s956 + $0x8] sm:$0xf]
      %v960 = vld [vmem:[%s956 + $0xc] sm:$0xf]
      %v961 = vld [vmem:[%s956 + $0x10] sm:$0xf]
      %v962 = vld [vmem:[%s956 + $0x14] sm:$0xf]
      %v963 = vld [vmem:[%s956 + $0x18] sm:$0xf]
      %v964 = vld [vmem:[%s956 + $0x1c] sm:$0xf]
      %s965 = sadd.s32 %s950, 1
      %s966 = smul.u32 %s965, 2
      %s967 = smul.addr %s966, 4
      %s968 = scalar_lea.vmem %s1, %s967
      %v969 = vld [vmem:[%s968] sm:$0xf]
      %v970 = vld [vmem:[%s968 + $0x4] sm:$0x3]
      %v979 = vunpack.c.l.b16 %v957
      %v980 = vunpack.c.l.b16 %v958
      %v981 = vunpack.c.l.b16 %v959
      %v982 = vunpack.c.l.b16 %v960
      %v983 = vunpack.c.l.b16 %v961
      %v984 = vunpack.c.l.b16 %v962
      %v985 = vunpack.c.l.b16 %v963
      %v986 = vunpack.c.l.b16 %v964
      %v987 = vpack.c.b16 %v980, %v979
      %v988 = vpack.c.b16 %v982, %v981
      %v989 = vpack.c.b16 %v984, %v983
      %v990 = vpack.c.b16 %v986, %v985
      %v993 = vunpack.c.l.b16 %v969
      %v994 = vunpack.c.l.b16 %v970
      %v995 = vpack.c.b16 %v994, %v993
      %vm996 = vcmask 97280
      %v998 = vsel %vm996, %v987, 0
      %v1001 = vsel %vm996, %v988, 0
      %v1004 = vsel %vm996, %v989, 0
      %v1007 = vsel %vm996, %v990, 0
      %vm1009 = vcmask 1045504
      %v1011 = vsel %vm1009, %v995, 0
      %1013 = vmatprep.subr.bf16.mxu0 0
      %1014 = vmatpush1.bf16.msra.mxu0 0
      %1015 = vmatprep.subr.bf16.mxu0 0
      %1016 = vmatpush1.bf16.msra.mxu0 0
      %1017 = vmatprep.subr.bf16.mxu0 0
      %1018 = vmatpush1.bf16.msra.mxu0 0
      %1019 = vmatprep.subr.bf16.mxu0 0
      %1020 = vmatpush1.bf16.msra.mxu0 0
      %1021 = vmatprep.subr.bf16.mxu0 0
      %1022 = vmatpush1.bf16.msra.mxu0 0
      %1023 = vmatprep.subr.bf16.mxu0 0
      %1024 = vmatpush1.bf16.msra.mxu0 0
      %1025 = vmatprep.subr.bf16.mxu0 0
      %1026 = vmatpush1.bf16.msra.mxu0 0
      %1027 = vmatprep.subr.bf16.mxu0 0
      %1028 = vmatpush1.bf16.msra.mxu0 %v1011
      %1029 = vmatprep.subr.bf16.mxu0 0
      %1030 = vmatpush2.bf16.msra.mxu0 0
      %1031 = vmatprep.subr.bf16.mxu0 0
      %1032 = vmatpush2.bf16.msra.mxu0 0
      %1033 = vmatprep.subr.bf16.mxu0 0
      %1034 = vmatpush2.bf16.msra.mxu0 0
      %1035 = vmatprep.subr.bf16.mxu0 0
      %1036 = vmatpush2.bf16.msra.mxu0 0
      %1037 = vmatprep.subr.bf16.mxu0 0
      %1038 = vmatpush2.bf16.msra.mxu0 0
      %1039 = vmatprep.subr.bf16.mxu0 0
      %1040 = vmatpush2.bf16.msra.mxu0 0
      %1041 = vmatprep.subr.bf16.mxu0 0
      %1042 = vmatpush2.bf16.msra.mxu0 0
      %1043 = vmatprep.subr.bf16.mxu0 0
      %1044 = vmatpush2.bf16.msra.mxu0 0
      %1045 = vmatprep.mubr.bf16.mxu0 0
      %1046 = vmatmul.mubr.bf16.gmra.mxu0 %v998
      %v1047 = vpop.f32.mrf.mxu0
      %v1048 = vadd.f32 0.0, %v1047
      %v1049 = vpop.f32.mrf.mxu0
      %v1050 = vpop.f32.mrf.mxu0
      %v1051 = vadd.f32 0.0, %v1050
      %v1052 = vpop.f32.mrf.mxu0
      %1053 = vmatprep.mubr.bf16.mxu0 0
      %1054 = vmatmul.mubr.bf16.gmra.mxu0 %v1001
      %v1055 = vpop.f32.mrf.mxu0
      %v1056 = vadd.f32 0.0, %v1055
      %v1057 = vpop.f32.mrf.mxu0
      %v1058 = vpop.f32.mrf.mxu0
      %v1059 = vadd.f32 0.0, %v1058
      %v1060 = vpop.f32.mrf.mxu0
      %1061 = vmatprep.mubr.bf16.mxu0 0
      %1062 = vmatmul.mubr.bf16.gmra.mxu0 %v1004
      %v1063 = vpop.f32.mrf.mxu0
      %v1064 = vadd.f32 0.0, %v1063
      %v1065 = vpop.f32.mrf.mxu0
      %v1066 = vpop.f32.mrf.mxu0
      %v1067 = vadd.f32 0.0, %v1066
      %v1068 = vpop.f32.mrf.mxu0
      %1069 = vmatprep.mubr.bf16.mxu0 0
      %1070 = vmatmul.mubr.bf16.gmra.mxu0 %v1007
      %v1071 = vpop.f32.mrf.mxu0
      %v1072 = vadd.f32 0.0, %v1071
      %v1073 = vpop.f32.mrf.mxu0
      %v1074 = vpop.f32.mrf.mxu0
      %v1075 = vadd.f32 0.0, %v1074
      %v1076 = vpop.f32.mrf.mxu0
      %1077 = vdwg.mxu0
      %v1086 = vunpack.c.l.b16 %v942
      %v1087 = vunpack.c.l.b16 %v943
      %v1088 = vunpack.c.l.b16 %v944
      %v1089 = vunpack.c.l.b16 %v945
      %v1090 = vunpack.c.l.b16 %v946
      %v1091 = vunpack.c.l.b16 %v947
      %v1092 = vunpack.c.l.b16 %v948
      %v1093 = vunpack.c.l.b16 %v949
      %v1094 = vpack.c.b16 %v1087, %v1086
      %v1095 = vpack.c.b16 %v1089, %v1088
      %v1096 = vpack.c.b16 %v1091, %v1090
      %v1097 = vpack.c.b16 %v1093, %v1092
      %v1100 = vunpack.c.l.b16 %v954
      %v1101 = vunpack.c.l.b16 %v955
      %v1102 = vpack.c.b16 %v1101, %v1100
      %v1104 = vsel %vm996, %v1094, 0
      %v1107 = vsel %vm996, %v1095, 0
      %v1110 = vsel %vm996, %v1096, 0
      %v1113 = vsel %vm996, %v1097, 0
      %v1116 = vsel %vm1009, %v1102, 0
      %1118 = vmatprep.subr.bf16.mxu0 0
      %1119 = vmatpush1.bf16.msra.mxu0 0
      %1120 = vmatprep.subr.bf16.mxu0 0
      %1121 = vmatpush1.bf16.msra.mxu0 0
      %1122 = vmatprep.subr.bf16.mxu0 0
      %1123 = vmatpush1.bf16.msra.mxu0 0
      %1124 = vmatprep.subr.bf16.mxu0 0
      %1125 = vmatpush1.bf16.msra.mxu0 0
      %1126 = vmatprep.subr.bf16.mxu0 0
      %1127 = vmatpush1.bf16.msra.mxu0 0
      %1128 = vmatprep.subr.bf16.mxu0 0
      %1129 = vmatpush1.bf16.msra.mxu0 0
      %1130 = vmatprep.subr.bf16.mxu0 0
      %1131 = vmatpush1.bf16.msra.mxu0 0
      %1132 = vmatprep.subr.bf16.mxu0 0
      %1133 = vmatpush1.bf16.msra.mxu0 %v1116
      %1134 = vmatprep.subr.bf16.mxu0 0
      %1135 = vmatpush2.bf16.msra.mxu0 0
      %1136 = vmatprep.subr.bf16.mxu0 0
      %1137 = vmatpush2.bf16.msra.mxu0 0
      %1138 = vmatprep.subr.bf16.mxu0 0
      %1139 = vmatpush2.bf16.msra.mxu0 0
      %1140 = vmatprep.subr.bf16.mxu0 0
      %1141 = vmatpush2.bf16.msra.mxu0 0
      %1142 = vmatprep.subr.bf16.mxu0 0
      %1143 = vmatpush2.bf16.msra.mxu0 0
      %1144 = vmatprep.subr.bf16.mxu0 0
      %1145 = vmatpush2.bf16.msra.mxu0 0
      %1146 = vmatprep.subr.bf16.mxu0 0
      %1147 = vmatpush2.bf16.msra.mxu0 0
      %1148 = vmatprep.subr.bf16.mxu0 0
      %1149 = vmatpush2.bf16.msra.mxu0 0
      %1150 = vmatprep.mubr.bf16.mxu0 0
      %1151 = vmatmul.mubr.bf16.gmra.mxu0 %v1104
      %v1152 = vpop.f32.mrf.mxu0
      %v1153 = vadd.f32 %v1048, %v1152
      %v1154 = vpop.f32.mrf.mxu0
      %v1155 = vpop.f32.mrf.mxu0
      %v1156 = vadd.f32 %v1051, %v1155
      %v1157 = vpop.f32.mrf.mxu0
      %1158 = vmatprep.mubr.bf16.mxu0 0
      %1159 = vmatmul.mubr.bf16.gmra.mxu0 %v1107
      %v1160 = vpop.f32.mrf.mxu0
      %v1161 = vadd.f32 %v1056, %v1160
      %v1162 = vpop.f32.mrf.mxu0
      %v1163 = vpop.f32.mrf.mxu0
      %v1164 = vadd.f32 %v1059, %v1163
      %v1165 = vpop.f32.mrf.mxu0
      %1166 = vmatprep.mubr.bf16.mxu0 0
      %1167 = vmatmul.mubr.bf16.gmra.mxu0 %v1110
      %v1168 = vpop.f32.mrf.mxu0
      %v1169 = vadd.f32 %v1064, %v1168
      %v1170 = vpop.f32.mrf.mxu0
      %v1171 = vpop.f32.mrf.mxu0
      %v1172 = vadd.f32 %v1067, %v1171
      %v1173 = vpop.f32.mrf.mxu0
      %1174 = vmatprep.mubr.bf16.mxu0 0
      %1175 = vmatmul.mubr.bf16.gmra.mxu0 %v1113
      %v1176 = vpop.f32.mrf.mxu0
      %v1177 = vadd.f32 %v1072, %v1176
      %v1178 = vpop.f32.mrf.mxu0
      %v1179 = vpop.f32.mrf.mxu0
      %v1180 = vadd.f32 %v1075, %v1179
      %v1181 = vpop.f32.mrf.mxu0
      %1182 = vdwg.mxu0
      %s1183 = scalar_lea.vmem [#allocation2], 64
      %v1184 = vld [vmem:[%s1183] sm:$0xf]
      %v1185 = vld [vmem:[%s1183 + $0x4] sm:$0xf]
      %v1186 = vld [vmem:[%s1183 + $0x8] sm:$0xf]
      %v1187 = vld [vmem:[%s1183 + $0xc] sm:$0xf]
      %v1188 = vld [vmem:[%s1183 + $0x10] sm:$0xf]
      %v1189 = vld [vmem:[%s1183 + $0x14] sm:$0xf]
      %v1190 = vld [vmem:[%s1183 + $0x18] sm:$0xf]
      %v1191 = vld [vmem:[%s1183 + $0x1c] sm:$0xf]
      %s1192 = sadd.s32 %s950, 2
      %s1193 = smul.u32 %s1192, 2
      %s1194 = smul.addr %s1193, 4
      %s1195 = scalar_lea.vmem %s1, %s1194
      %v1196 = vld [vmem:[%s1195] sm:$0xf]
      %v1197 = vld [vmem:[%s1195 + $0x4] sm:$0x3]
      %v1206 = vunpack.c.l.b16 %v1184
      %v1207 = vunpack.c.l.b16 %v1185
      %v1208 = vunpack.c.l.b16 %v1186
      %v1209 = vunpack.c.l.b16 %v1187
      %v1210 = vunpack.c.l.b16 %v1188
      %v1211 = vunpack.c.l.b16 %v1189
      %v1212 = vunpack.c.l.b16 %v1190
      %v1213 = vunpack.c.l.b16 %v1191
      %v1214 = vpack.c.b16 %v1207, %v1206
      %v1215 = vpack.c.b16 %v1209, %v1208
      %v1216 = vpack.c.b16 %v1211, %v1210
      %v1217 = vpack.c.b16 %v1213, %v1212
      %v1220 = vunpack.c.l.b16 %v1196
      %v1221 = vunpack.c.l.b16 %v1197
      %v1222 = vpack.c.b16 %v1221, %v1220
      %v1224 = vsel %vm996, %v1214, 0
      %v1227 = vsel %vm996, %v1215, 0
      %v1230 = vsel %vm996, %v1216, 0
      %v1233 = vsel %vm996, %v1217, 0
      %v1236 = vsel %vm1009, %v1222, 0
      %1238 = vmatprep.subr.bf16.mxu0 0
      %1239 = vmatpush1.bf16.msra.mxu0 0
      %1240 = vmatprep.subr.bf16.mxu0 0
      %1241 = vmatpush1.bf16.msra.mxu0 0
      %1242 = vmatprep.subr.bf16.mxu0 0
      %1243 = vmatpush1.bf16.msra.mxu0 0
      %1244 = vmatprep.subr.bf16.mxu0 0
      %1245 = vmatpush1.bf16.msra.mxu0 0
      %1246 = vmatprep.subr.bf16.mxu0 0
      %1247 = vmatpush1.bf16.msra.mxu0 0
      %1248 = vmatprep.subr.bf16.mxu0 0
      %1249 = vmatpush1.bf16.msra.mxu0 0
      %1250 = vmatprep.subr.bf16.mxu0 0
      %1251 = vmatpush1.bf16.msra.mxu0 0
      %1252 = vmatprep.subr.bf16.mxu0 0
      %1253 = vmatpush1.bf16.msra.mxu0 %v1236
      %1254 = vmatprep.subr.bf16.mxu0 0
      %1255 = vmatpush2.bf16.msra.mxu0 0
      %1256 = vmatprep.subr.bf16.mxu0 0
      %1257 = vmatpush2.bf16.msra.mxu0 0
      %1258 = vmatprep.subr.bf16.mxu0 0
      %1259 = vmatpush2.bf16.msra.mxu0 0
      %1260 = vmatprep.subr.bf16.mxu0 0
      %1261 = vmatpush2.bf16.msra.mxu0 0
      %1262 = vmatprep.subr.bf16.mxu0 0
      %1263 = vmatpush2.bf16.msra.mxu0 0
      %1264 = vmatprep.subr.bf16.mxu0 0
      %1265 = vmatpush2.bf16.msra.mxu0 0
      %1266 = vmatprep.subr.bf16.mxu0 0
      %1267 = vmatpush2.bf16.msra.mxu0 0
      %1268 = vmatprep.subr.bf16.mxu0 0
      %1269 = vmatpush2.bf16.msra.mxu0 0
      %1270 = vmatprep.mubr.bf16.mxu0 0
      %1271 = vmatmul.mubr.bf16.gmra.mxu0 %v1224
      %v1272 = vpop.f32.mrf.mxu0
      %v1273 = vadd.f32 0.0, %v1272
      %v1274 = vpop.f32.mrf.mxu0
      %v1275 = vpop.f32.mrf.mxu0
      %v1276 = vadd.f32 0.0, %v1275
      %v1277 = vpop.f32.mrf.mxu0
      %1278 = vmatprep.mubr.bf16.mxu0 0
      %1279 = vmatmul.mubr.bf16.gmra.mxu0 %v1227
      %v1280 = vpop.f32.mrf.mxu0
      %v1281 = vadd.f32 0.0, %v1280
      %v1282 = vpop.f32.mrf.mxu0
      %v1283 = vpop.f32.mrf.mxu0
      %v1284 = vadd.f32 0.0, %v1283
      %v1285 = vpop.f32.mrf.mxu0
      %1286 = vmatprep.mubr.bf16.mxu0 0
      %1287 = vmatmul.mubr.bf16.gmra.mxu0 %v1230
      %v1288 = vpop.f32.mrf.mxu0
      %v1289 = vadd.f32 0.0, %v1288
      %v1290 = vpop.f32.mrf.mxu0
      %v1291 = vpop.f32.mrf.mxu0
      %v1292 = vadd.f32 0.0, %v1291
      %v1293 = vpop.f32.mrf.mxu0
      %1294 = vmatprep.mubr.bf16.mxu0 0
      %1295 = vmatmul.mubr.bf16.gmra.mxu0 %v1233
      %v1296 = vpop.f32.mrf.mxu0
      %v1297 = vadd.f32 0.0, %v1296
      %v1298 = vpop.f32.mrf.mxu0
      %v1299 = vpop.f32.mrf.mxu0
      %v1300 = vadd.f32 0.0, %v1299
      %v1301 = vpop.f32.mrf.mxu0
      %1302 = vdwg.mxu0
      %v1303 = vadd.f32 %v1153, %v1273
      %v1304 = vadd.f32 %v1156, %v1276
      %v1305 = vadd.f32 %v1161, %v1281
      %v1306 = vadd.f32 %v1164, %v1284
      %v1307 = vadd.f32 %v1169, %v1289
      %v1308 = vadd.f32 %v1172, %v1292
      %v1309 = vadd.f32 %v1177, %v1297
      %v1310 = vadd.f32 %v1180, %v1300
      %v1311 = vpack.c.bf16 %v1304, %v1303
      %v1312 = vpack.c.bf16 %v1306, %v1305
      %v1313 = vpack.c.bf16 %v1308, %v1307
      %v1314 = vpack.c.bf16 %v1310, %v1309
      %v1319 = vunpack.c.l.b16 %v1311
      %v1320 = vunpack.c.h.b16 %v1311
      %v1321 = vunpack.c.l.b16 %v1312
      %v1322 = vunpack.c.h.b16 %v1312
      %v1323 = vunpack.c.l.b16 %v1313
      %v1324 = vunpack.c.h.b16 %v1313
      %v1325 = vunpack.c.l.b16 %v1314
      %v1326 = vunpack.c.h.b16 %v1314
      %v1327 = vpack.c.b16 %v1319, %v1319
      %v1328 = vpack.c.b16 %v1320, %v1320
      %v1329 = vpack.c.b16 %v1321, %v1321
      %v1330 = vpack.c.b16 %v1322, %v1322
      %v1331 = vpack.c.b16 %v1323, %v1323
      %v1332 = vpack.c.b16 %v1324, %v1324
      %v1333 = vpack.c.b16 %v1325, %v1325
      %v1334 = vpack.c.b16 %v1326, %v1326
      %vm1343 = vcmask 60416
      %1344 = vst.msk [vmem:[%s238] sm:$0xf] %vm1343, %v1327
      %1345 = vst.msk [vmem:[%s238 + $0x4] sm:$0xf] %vm1343, %v1328
      %1346 = vst.msk [vmem:[%s238 + $0x8] sm:$0xf] %vm1343, %v1329
      %1347 = vst.msk [vmem:[%s238 + $0xc] sm:$0xf] %vm1343, %v1330
      %1348 = vst.msk [vmem:[%s238 + $0x10] sm:$0xf] %vm1343, %v1331
      %1349 = vst.msk [vmem:[%s238 + $0x14] sm:$0xf] %vm1343, %v1332
      %1350 = vst.msk [vmem:[%s238 + $0x18] sm:$0xf] %vm1343, %v1333
      %1351 = vst.msk [vmem:[%s238 + $0x1c] sm:$0xf] %vm1343, %v1334
      %v1352 = vunpack.c.l.bf16 %v1311
      %v1353 = vunpack.c.h.bf16 %v1311
      %v1354 = vunpack.c.l.bf16 %v1312
      %v1355 = vunpack.c.h.bf16 %v1312
      %v1356 = vunpack.c.l.bf16 %v1313
      %v1357 = vunpack.c.h.bf16 %v1313
      %v1358 = vunpack.c.l.bf16 %v1314
      %v1359 = vunpack.c.h.bf16 %v1314
      %vm1360 = vcmask 64512
      %v1361 = vsel %vm1360, %v1352, 0.0
      %v1362 = vsel %vm1360, %v1353, 0.0
      %v1363 = vadd.f32 %v1361, %v1362
      %v1364 = vsel %vm1360, %v1354, 0.0
      %v1365 = vadd.f32 %v1363, %v1364
      %v1366 = vsel %vm1360, %v1355, 0.0
      %v1367 = vadd.f32 %v1365, %v1366
      %v1368 = vsel %vm1360, %v1356, 0.0
      %v1369 = vadd.f32 %v1367, %v1368
      %v1370 = vsel %vm1360, %v1357, 0.0
      %v1371 = vadd.f32 %v1369, %v1370
      %v1372 = vsel %vm1360, %v1358, 0.0
      %v1373 = vadd.f32 %v1371, %v1372
      %v1374 = vsel %vm1360, %v1359, 0.0
      %v1375 = vadd.f32 %v1373, %v1374
      %v1376 = vrot.slane %v1375, 4
      %v1377 = vadd.f32 %v1375, %v1376
      %v1378 = vrot.slane %v1377, 2
      %v1379 = vadd.f32 %v1377, %v1378
      %v1380 = vrot.slane %v1379, 1
      %v1381 = vadd.f32 %v1379, %v1380
      %vm1382 = vcmask 57344
      %1383 = vst.msk [vmem:[%s245] sm:$0x1] %vm1382, %v1381
      %v1384 = vmul.f32 %v1352, %v1352
      %v1385 = vmul.f32 %v1353, %v1353
      %v1386 = vmul.f32 %v1354, %v1354
      %v1387 = vmul.f32 %v1355, %v1355
      %v1388 = vmul.f32 %v1356, %v1356
      %v1389 = vmul.f32 %v1357, %v1357
      %v1390 = vmul.f32 %v1358, %v1358
      %v1391 = vmul.f32 %v1359, %v1359
      %v1392 = vsel %vm1360, %v1384, 0.0
      %v1393 = vsel %vm1360, %v1385, 0.0
      %v1394 = vadd.f32 %v1392, %v1393
      %v1395 = vsel %vm1360, %v1386, 0.0
      %v1396 = vadd.f32 %v1394, %v1395
      %v1397 = vsel %vm1360, %v1387, 0.0
      %v1398 = vadd.f32 %v1396, %v1397
      %v1399 = vsel %vm1360, %v1388, 0.0
      %v1400 = vadd.f32 %v1398, %v1399
      %v1401 = vsel %vm1360, %v1389, 0.0
      %v1402 = vadd.f32 %v1400, %v1401
      %v1403 = vsel %vm1360, %v1390, 0.0
      %v1404 = vadd.f32 %v1402, %v1403
      %v1405 = vsel %vm1360, %v1391, 0.0
      %v1406 = vadd.f32 %v1404, %v1405
      %v1407 = vrot.slane %v1406, 4
      %v1408 = vadd.f32 %v1406, %v1407
      %v1409 = vrot.slane %v1408, 2
      %v1410 = vadd.f32 %v1408, %v1409
      %v1411 = vrot.slane %v1410, 1
      %v1412 = vadd.f32 %v1410, %v1411
      %1413 = vst.msk [vmem:[%s251] sm:$0x1] %vm1382, %v1412
      %s1414 = smul.u32 8, %s20
      %p1415 = scmp.lt.s32.totalorder %s1414, 15
      %s1416 = scalar_select %p1415, %s1414, 15
      %p1417 = scmp.lt.s32.totalorder %s21, 0
      %s1418 = scalar_select %p1417, %s21, 0
      %s1419 = sadd.s32 %s1418, %s1416
      %s1420 = smul.addr %s1419, 4
      %s1421 = scalar_lea.vmem %s2, %s1420
      %p1422 = scmp.lt.s32.totalorder %s20, 1
      %s1423 = scalar_select %p1422, %s20, 1
      %p1424 = scmp.lt.s32.totalorder %s21, 0
      %s1425 = scalar_select %p1424, %s21, 0
      %s1426 = sadd.s32 %s1425, %s1423
      %s1427 = scalar_lea.vmem %s3, %s1426
      %p1428 = scmp.lt.s32.totalorder %s20, 1
      %s1429 = scalar_select %p1428, %s20, 1
      %p1430 = scmp.lt.s32.totalorder %s21, 0
      %s1431 = scalar_select %p1430, %s21, 0
      %s1432 = sadd.s32 %s1431, %s1429
      %s1433 = scalar_lea.vmem %s4, %s1432
      // Predicated region
      $region33: #{basic_block_forward.3} parent=27 // pred_check
        %p1434 = pneg %p95
      $region34: #{basic_block_forward.3} parent=27 // pred_check_branch
        %1436 = sbr.rel (%p1434) target = $region36
      $region35: #{basic_block_forward.3} parent=27 // pred_region
        %s1437 = smul.u32 8, %s20
      $region36: #{basic_block_forward.3} parent=27 // pred_fallthru
        _
      // Predicated region
      $region37: #{basic_block_forward.3} parent=27 // pred_check
        %p1438 = pneg %p123
      $region38: #{basic_block_forward.3} parent=27 // pred_check_branch
        %1440 = sbr.rel (%p1438) target = $region40
      $region39: #{basic_block_forward.3} parent=27 // pred_region
        _
      $region40: #{basic_block_forward.3} parent=27 // pred_fallthru
        _
      // Predicated region
      $region41: #{basic_block_forward.3} parent=27 // pred_check
        %p1441 = pneg %p151
      $region42: #{basic_block_forward.3} parent=27 // pred_check_branch
        %1443 = sbr.rel (%p1441) target = $region44
      $region43: #{basic_block_forward.3} parent=27 // pred_region
        _
      $region44: #{basic_block_forward.3} parent=27 // pred_fallthru
        _
    $region28: #{basic_block_forward.3} parent=5 // pred_fallthru
      _
    %p1444 = scmp.le.s32.totalorder 2, %s11
    // Predicated region
    $region45: #{basic_block_forward.3} parent=5 // pred_check
      %p1445 = pneg %p1444
    $region46: #{basic_block_forward.3} parent=5 // pred_check_branch
      %1447 = sbr.rel (%p1445) target = $region48
    $region47: #{basic_block_forward.3} parent=5 // pred_region
      %s1448 = ssub.s32 %s11, 2
      // Predicated region
      $region49: #{basic_block_forward.3} parent=47 // pred_check
        %p1449 = pneg %p101
      $region50: #{basic_block_forward.3} parent=47 // pred_check_branch
        %1451 = sbr.rel (%p1449) target = $region52
      $region51: #{basic_block_forward.3} parent=47 // pred_region
        %s1452 = smul.u32 8, %s22
        %p1453 = scmp.lt.s32.totalorder %s1452, 15
        %s1454 = scalar_select %p1453, %s1452, 15
        %p1455 = scmp.lt.s32.totalorder %s23, 0
        %s1456 = scalar_select %p1455, %s23, 0
        %s1457 = sadd.s32 %s1456, %s1454
        %s1458 = smul.addr %s1457, 4
        %s1459 = scalar_lea.vmem %s2, %s1458
      $region52: #{basic_block_forward.3} parent=47 // pred_fallthru
        _
      // Predicated region
      $region53: #{basic_block_forward.3} parent=47 // pred_check
        %p1460 = pneg %p129
      $region54: #{basic_block_forward.3} parent=47 // pred_check_branch
        %1462 = sbr.rel (%p1460) target = $region56
      $region55: #{basic_block_forward.3} parent=47 // pred_region
        %p1463 = scmp.lt.s32.totalorder %s22, 1
        %s1464 = scalar_select %p1463, %s22, 1
        %p1465 = scmp.lt.s32.totalorder %s23, 0
        %s1466 = scalar_select %p1465, %s23, 0
        %s1467 = sadd.s32 %s1466, %s1464
        %s1468 = scalar_lea.vmem %s3, %s1467
      $region56: #{basic_block_forward.3} parent=47 // pred_fallthru
        _
      // Predicated region
      $region57: #{basic_block_forward.3} parent=47 // pred_check
        %p1469 = pneg %p157
      $region58: #{basic_block_forward.3} parent=47 // pred_check_branch
        %1471 = sbr.rel (%p1469) target = $region60
      $region59: #{basic_block_forward.3} parent=47 // pred_region
        %p1472 = scmp.lt.s32.totalorder %s22, 1
        %s1473 = scalar_select %p1472, %s22, 1
        %p1474 = scmp.lt.s32.totalorder %s23, 0
        %s1475 = scalar_select %p1474, %s23, 0
        %s1476 = sadd.s32 %s1475, %s1473
        %s1477 = scalar_lea.vmem %s4, %s1476
      $region60: #{basic_block_forward.3} parent=47 // pred_fallthru
        _
    $region48: #{basic_block_forward.3} parent=5 // pred_fallthru
      _
  $region6: #{basic_block_forward.3} parent=0 // loop_footer
    %s15 = sadd.s32 1, %s11
  $region7: #{basic_block_forward.3} parent=0 // loop_footer_branch
    %10 = sbr.rel target = $region3
  $region8: #{basic_block_forward.3} parent=0 // loop_exit
    _

// kernel: basic_block_forward.5
$region0: #{basic_block_forward.5}
  #allocation0 [shape = 'u32[]', space=smem, size = 0x4, offset = 0x4, fixed_abs, tag = 'smem constant byte address 0x4 - core index']
  #allocation1 [shape = 'u32[144,128]{1,0:T(1,128)}', space=vmem, size = 0x12000, scoped, tag = 'internal scratch']
  #allocation2 [shape = 'bf16[3,64,24]{2,1,0:T(8,128)(2,1)}', space=vmem, size = 0xc000, scoped, tag = 'scratch operand']
  %s0 = inlined_call_operand.vmem [shape: bf16[2,1,10,10,8], index: 0, kind: input, shape index: {}]
  %s1 = inlined_call_operand.vmem [shape: bf16[3,24,8], index: 1, kind: input, shape index: {}]
  %s2 = inlined_call_operand.vmem [shape: f32[128,8], index: 2, kind: input, shape index: {}]
  %s3 = inlined_call_operand.vmem [shape: f32[128,8], index: 3, kind: output, shape index: {}]
  %s4 = sld [smem:[#allocation0]]
  $region49: #{basic_block_forward.5} parent=0
    _
  %s6 = ssub.s32 1, %s4
  %s7 = scalar_select 0, %s6, %s4
  loop: start=0, step=1, limit=4
  $region2: #{basic_block_forward.5} parent=0 // loop_pre_header
    _
  $region3: #{basic_block_forward.5} parent=0 // loop_header
    %s9 = sphi 0, %s13
    %p10 = scmp.ge.s32.totalorder %s9, 4
    %s16 = sphi 0, %s28
    %s17 = sphi 0, %s24
    %s18 = sphi 0, %s16
    %s19 = sphi 0, %s17
    %s20 = sphi 0, %s18
    %s21 = sphi 0, %s19
    %s31 = sphi 0, %s33
    %s34 = sphi 0, %s31
    %s35 = sphi 0, %s34
    %s51 = sphi 0, %s35
    %s55 = sphi 0, %s55
    %s57 = sphi 0, %s55
    %s58 = sphi 0, %s57
    %s72 = sphi 0, %s58
    %s80 = sphi 0, %s82
    %s83 = sphi 0, %s80
    %s84 = sphi 0, %s83
    %s100 = sphi 0, %s84
    %s108 = sphi 0, %s110
    %s111 = sphi 0, %s108
    %s112 = sphi 0, %s111
    %s128 = sphi 0, %s112
  $region4: #{basic_block_forward.5} parent=0 // loop_header_branch
    %12 = sbr.rel (%p10) target = $region8
  $region5: #{basic_block_forward.5} parent=0 // loop_body
    %s14 = ssub.s32 %s9, 1
    %s15 = ssub.s32 %s9, 2
    %s22 = sadd.s32 1, %s17
    %p23 = scmp.ge.s32.totalorder %s22, 1
    %s24 = scalar_select %p23, 0, %s22
    %s25 = sadd.s32 1, %s16
    %s26 = scalar_select %p23, %s25, %s16
    %p27 = scmp.ge.s32.totalorder %s26, 2
    %s28 = scalar_select %p27, 0, %s26
    %s29 = ssub.s32 %s16, %s28
    %p30 = scmp.eq.s32.totalorder %s29, 0
    %s32 = sadd.s32 %s31, 1
    %s33 = scalar_select %p30, %s31, %s32
    %p36 = pneg %p30
    %p37 = scmp.eq.s32.totalorder %s9, 1
    %p38 = por %p36, %p37
    %p39 = scmp.ne.s32.totalorder %s31, %s34
    %p40 = scmp.eq.s32.totalorder %s9, 0
    %p41 = por %p39, %p40
    %p42 = scmp.ne.s32.totalorder %s31, %s34
    %p43 = scmp.eq.s32.totalorder %s14, 1
    %p44 = por %p42, %p43
    %p45 = scmp.ne.s32.totalorder %s34, %s35
    %p46 = scmp.eq.s32.totalorder %s14, 0
    %p47 = por %p45, %p46
    %p48 = scmp.ne.s32.totalorder %s34, %s35
    %p49 = scmp.eq.s32.totalorder %s15, 1
    %p50 = por %p48, %p49
    %p52 = scmp.ne.s32.totalorder %s35, %s51
    %p53 = scmp.eq.s32.totalorder %s15, 0
    %p54 = por %p52, %p53
    %s56 = sadd.s32 %s55, 1
    %p59 = scmp.eq.s32.totalorder %s9, 1
    %p60 = scmp.ne.s32.totalorder %s55, %s57
    %p61 = scmp.eq.s32.totalorder %s9, 0
    %p62 = por %p60, %p61
    %p63 = scmp.ne.s32.totalorder %s55, %s57
    %p64 = scmp.eq.s32.totalorder %s14, 1
    %p65 = por %p63, %p64
    %p66 = scmp.ne.s32.totalorder %s57, %s58
    %p67 = scmp.eq.s32.totalorder %s14, 0
    %p68 = por %p66, %p67
    %p69 = scmp.ne.s32.totalorder %s57, %s58
    %p70 = scmp.eq.s32.totalorder %s15, 1
    %p71 = por %p69, %p70
    %p73 = scmp.ne.s32.totalorder %s58, %s72
    %p74 = scmp.eq.s32.totalorder %s15, 0
    %p75 = por %p73, %p74
    %s76 = ssub.s32 %s16, %s28
    %s77 = ssub.s32 %s17, %s24
    %s78 = sor.u32 %s76, %s77
    %p79 = scmp.eq.s32.totalorder %s78, 0
    %s81 = sadd.s32 %s80, 1
    %s82 = scalar_select %p79, %s80, %s81
    %p85 = pneg %p79
    %p86 = scmp.eq.s32.totalorder %s9, 1
    %p87 = por %p85, %p86
    %p88 = scmp.ne.s32.totalorder %s80, %s83
    %p89 = scmp.eq.s32.totalorder %s9, 0
    %p90 = por %p88, %p89
    %p91 = scmp.ne.s32.totalorder %s80, %s83
    %p92 = scmp.eq.s32.totalorder %s14, 1
    %p93 = por %p91, %p92
    %p94 = scmp.ne.s32.totalorder %s83, %s84
    %p95 = scmp.eq.s32.totalorder %s14, 0
    %p96 = por %p94, %p95
    %p97 = scmp.ne.s32.totalorder %s83, %s84
    %p98 = scmp.eq.s32.totalorder %s15, 1
    %p99 = por %p97, %p98
    %p101 = scmp.ne.s32.totalorder %s84, %s100
    %p102 = scmp.eq.s32.totalorder %s15, 0
    %p103 = por %p101, %p102
    %s104 = ssub.s32 %s16, %s28
    %s105 = ssub.s32 %s17, %s24
    %s106 = sor.u32 %s104, %s105
    %p107 = scmp.eq.s32.totalorder %s106, 0
    %s109 = sadd.s32 %s108, 1
    %s110 = scalar_select %p107, %s108, %s109
    %p113 = pneg %p107
    %p114 = scmp.eq.s32.totalorder %s9, 1
    %p115 = por %p113, %p114
    %p116 = scmp.ne.s32.totalorder %s108, %s111
    %p117 = scmp.eq.s32.totalorder %s9, 0
    %p118 = por %p116, %p117
    %p119 = scmp.ne.s32.totalorder %s108, %s111
    %p120 = scmp.eq.s32.totalorder %s14, 1
    %p121 = por %p119, %p120
    %p122 = scmp.ne.s32.totalorder %s111, %s112
    %p123 = scmp.eq.s32.totalorder %s14, 0
    %p124 = por %p122, %p123
    %p125 = scmp.ne.s32.totalorder %s111, %s112
    %p126 = scmp.eq.s32.totalorder %s15, 1
    %p127 = por %p125, %p126
    %p129 = scmp.ne.s32.totalorder %s112, %s128
    %p130 = scmp.eq.s32.totalorder %s15, 0
    %p131 = por %p129, %p130
    %p132 = scmp.le.s32.totalorder 1, %s9
    %p133 = scmp.lt.s32.totalorder %s9, 3
    %p134 = pnand %p132, %p133
    %p135 = pneg %p134
    // Predicated region
    $region9: #{basic_block_forward.5} parent=5 // pred_check
      _
    $region10: #{basic_block_forward.5} parent=5 // pred_check_branch
      %137 = sbr.rel (%p134) target = $region12
    $region11: #{basic_block_forward.5} parent=5 // pred_region
      %s138 = ssub.s32 %s9, 1
      // Predicated region
      $region13: #{basic_block_forward.5} parent=11 // pred_check
        %p139 = pneg %p68
      $region14: #{basic_block_forward.5} parent=11 // pred_check_branch
        %141 = sbr.rel (%p139) target = $region16
      $region15: #{basic_block_forward.5} parent=11 // pred_region
        _
      $region16: #{basic_block_forward.5} parent=11 // pred_fallthru
        _
    $region12: #{basic_block_forward.5} parent=5 // pred_fallthru
      _
    %p142 = scmp.lt.s32.totalorder %s9, 2
    // Predicated region
    $region17: #{basic_block_forward.5} parent=5 // pred_check
      %p143 = pneg %p142
    $region18: #{basic_block_forward.5} parent=5 // pred_check_branch
      %145 = sbr.rel (%p143) target = $region20
    $region19: #{basic_block_forward.5} parent=5 // pred_region
      // Predicated region
      $region21: #{basic_block_forward.5} parent=19 // pred_check
        %p146 = pneg %p41
      $region22: #{basic_block_forward.5} parent=19 // pred_check_branch
        %148 = sbr.rel (%p146) target = $region24
      $region23: #{basic_block_forward.5} parent=19 // pred_region
        %p149 = scmp.lt.s32.totalorder %s16, 1
        %s150 = scalar_select %p149, %s16, 1
        %s151 = smul.addr %s150, 20
        %s152 = smul.addr %s151, 4
        %s153 = scalar_lea.vmem %s0, %s152
      $region24: #{basic_block_forward.5} parent=19 // pred_fallthru
        _
      // Predicated region
      $region25: #{basic_block_forward.5} parent=19 // pred_check
        %p154 = pneg %p90
      $region26: #{basic_block_forward.5} parent=19 // pred_check_branch
        %156 = sbr.rel (%p154) target = $region28
      $region27: #{basic_block_forward.5} parent=19 // pred_region
        %s157 = smul.u32 8, %s16
        %p158 = scmp.lt.s32.totalorder %s157, 15
        %s159 = scalar_select %p158, %s157, 15
        %p160 = scmp.lt.s32.totalorder %s17, 0
        %s161 = scalar_select %p160, %s17, 0
        %s162 = sadd.s32 %s161, %s159
        %s163 = smul.addr %s162, 8
        %s164 = scalar_lea.vmem %s2, %s163
        %s165 = smul.u32 8, %s16
      $region28: #{basic_block_forward.5} parent=19 // pred_fallthru
        _
    $region20: #{basic_block_forward.5} parent=5 // pred_fallthru
      _
    %p166 = scmp.le.s32.totalorder 1, %s9
    %p167 = scmp.lt.s32.totalorder %s9, 3
    %p168 = pnand %p166, %p167
    %p169 = pneg %p168
    // Predicated region
    $region29: #{basic_block_forward.5} parent=5 // pred_check
      _
    $region30: #{basic_block_forward.5} parent=5 // pred_check_branch
      %171 = sbr.rel (%p168) target = $region32
    $region31: #{basic_block_forward.5} parent=5 // pred_region
      %s172 = ssub.s32 %s9, 1
      %p173 = scmp.lt.s32.totalorder %s18, 1
      %s174 = scalar_select %p173, %s18, 1
      %s175 = smul.addr %s174, 20
      %s176 = smul.addr %s175, 4
      %s177 = scalar_lea.vmem %s0, %s176
      %p178 = pneg %p47
      %p179 = pneg %p44
      %p180 = pneg %p68
      %p181 = pneg %p65
      %s182 = smul.u32 8, %s18
      %p183 = scmp.lt.s32.totalorder %s182, 15
      %s184 = scalar_select %p183, %s182, 15
      %p185 = scmp.lt.s32.totalorder %s19, 0
      %s186 = scalar_select %p185, %s19, 0
      %s187 = sadd.s32 %s186, %s184
      %s188 = smul.addr %s187, 8
      %s189 = scalar_lea.vmem %s2, %s188
      %p190 = pneg %p96
      %p191 = pneg %p93
      %p192 = pneg %p124
      %p193 = pneg %p121
      %s194 = smul.u32 8, %s18
      %p195 = scmp.lt.s32.totalorder %s194, 15
      %s196 = scalar_select %p195, %s194, 15
      %p197 = scmp.lt.s32.totalorder %s19, 0
      %s198 = scalar_select %p197, %s19, 0
      %s199 = sadd.s32 %s198, %s196
      %s200 = smul.addr %s199, 8
      %s201 = scalar_lea.vmem %s3, %s200
      %p202 = scmp.lt.s32.totalorder %s18, 1
      %s203 = scalar_select %p202, %s18, 1
      %s204 = smul.addr %s203, 20
      %s205 = smul.addr %s204, 4
      %s206 = scalar_lea.vmem %s0, %s205
      %s207 = smul.u32 8, %s18
      %p208 = scmp.lt.s32.totalorder %s207, 15
      %s209 = scalar_select %p208, %s207, 15
      %p210 = scmp.lt.s32.totalorder %s19, 0
      %s211 = scalar_select %p210, %s19, 0
      %s212 = sadd.s32 %s211, %s209
      %s213 = smul.addr %s212, 8
      %s214 = scalar_lea.vmem %s2, %s213
      %s215 = smul.u32 8, %s18
      %s216 = smul.u32 8, %s18
      %p217 = scmp.lt.s32.totalorder %s216, 15
      %s218 = scalar_select %p217, %s216, 15
      %p219 = scmp.lt.s32.totalorder %s19, 0
      %s220 = scalar_select %p219, %s19, 0
      %s221 = sadd.s32 %s220, %s218
      %s222 = smul.addr %s221, 8
      %s223 = scalar_lea.vmem %s3, %s222
      %s224 = smul.u32 8, %s18
      %p226 = scmp.eq.s32.totalorder %s19, 0
      // Predicated region
      $region33: #{basic_block_forward.5} parent=31 // pred_check
        %p227 = pneg %p226
      $region34: #{basic_block_forward.5} parent=31 // pred_check_branch
        %229 = sbr.rel (%p227) target = $region36
      $region35: #{basic_block_forward.5} parent=31 // pred_region
        %v230 = vld [vmem:[%s206] sm:$0xf]
        %v231 = vld [vmem:[%s206 + $0x8] sm:$0xf]
        %v232 = vld [vmem:[%s206 + $0x10] sm:$0xf]
        %v233 = vld [vmem:[%s206 + $0x18] sm:$0xf]
        %v234 = vld [vmem:[%s206 + $0x20] sm:$0xf]
        %v235 = vld [vmem:[%s206 + $0x28] sm:$0xf]
        %v236 = vld [vmem:[%s206 + $0x30] sm:$0xf]
        %v237 = vld [vmem:[%s206 + $0x38] sm:$0xf]
        %vm238 = vcmask 60416
        %239 = vst.msk [vmem:[#allocation2] sm:$0xf] %vm238, %v230
        %240 = vst.msk [vmem:[#allocation2 + $0x4] sm:$0xf] %vm238, %v231
        %241 = vst.msk [vmem:[#allocation2 + $0x8] sm:$0xf] %vm238, %v232
        %242 = vst.msk [vmem:[#allocation2 + $0xc] sm:$0xf] %vm238, %v233
        %243 = vst.msk [vmem:[#allocation2 + $0x10] sm:$0xf] %vm238, %v234
        %244 = vst.msk [vmem:[#allocation2 + $0x14] sm:$0xf] %vm238, %v235
        %245 = vst.msk [vmem:[#allocation2 + $0x18] sm:$0xf] %vm238, %v236
        %246 = vst.msk [vmem:[#allocation2 + $0x1c] sm:$0xf] %vm238, %v237
        %v247 = vld [vmem:[%s206] sm:$0xf]
        %v248 = vld [vmem:[%s206 + $0x4] sm:$0x1]
        %v249 = vld [vmem:[%s206 + $0x8] sm:$0xf]
        %v250 = vld [vmem:[%s206 + $0xc] sm:$0x1]
        %v251 = vld [vmem:[%s206 + $0x10] sm:$0xf]
        %v252 = vld [vmem:[%s206 + $0x14] sm:$0x1]
        %v253 = vld [vmem:[%s206 + $0x18] sm:$0xf]
        %v254 = vld [vmem:[%s206 + $0x1c] sm:$0x1]
        %v255 = vld [vmem:[%s206 + $0x20] sm:$0xf]
        %v256 = vld [vmem:[%s206 + $0x24] sm:$0x1]
        %v257 = vld [vmem:[%s206 + $0x28] sm:$0xf]
        %v258 = vld [vmem:[%s206 + $0x2c] sm:$0x1]
        %v259 = vld [vmem:[%s206 + $0x30] sm:$0xf]
        %v260 = vld [vmem:[%s206 + $0x34] sm:$0x1]
        %v261 = vld [vmem:[%s206 + $0x38] sm:$0xf]
        %v262 = vld [vmem:[%s206 + $0x3c] sm:$0x1]
        %vm263 = vsmask.f32 3328
        %vm264 = vsmask.f32 7440
        %vm265 = vmor %vm263, %vm264
        %v267 = vshrl.u32 %v247, 16
        %v269 = vrot.slane %v267, 4
        %v270 = vshll.u32 %v247, 16
        %v272 = vrot.slane %v270, 5
        %v273 = vor.u32 %v269, %v272
        %v274 = vrot.slane %v273, 4
        %v276 = vshll.u32 %v248, 16
        %v278 = vrot.slane %v276, 5
        %v279 = vsel %vm265, %v274, %v278
        %v281 = vshrl.u32 %v249, 16
        %v283 = vrot.slane %v281, 4
        %v284 = vshll.u32 %v249, 16
        %v286 = vrot.slane %v284, 5
        %v287 = vor.u32 %v283, %v286
        %v288 = vrot.slane %v287, 4
        %v290 = vshll.u32 %v250, 16
        %v292 = vrot.slane %v290, 5
        %v293 = vsel %vm265, %v288, %v292
        %v295 = vshrl.u32 %v251, 16
        %v297 = vrot.slane %v295, 4
        %v298 = vshll.u32 %v251, 16
        %v300 = vrot.slane %v298, 5
        %v301 = vor.u32 %v297, %v300
        %v302 = vrot.slane %v301, 4
        %v304 = vshll.u32 %v252, 16
        %v306 = vrot.slane %v304, 5
        %v307 = vsel %vm265, %v302, %v306
        %v309 = vshrl.u32 %v253, 16
        %v311 = vrot.slane %v309, 4
        %v312 = vshll.u32 %v253, 16
        %v314 = vrot.slane %v312, 5
        %v315 = vor.u32 %v311, %v314
        %v316 = vrot.slane %v315, 4
        %v318 = vshll.u32 %v254, 16
        %v320 = vrot.slane %v318, 5
        %v321 = vsel %vm265, %v316, %v320
        %v323 = vshrl.u32 %v255, 16
        %v325 = vrot.slane %v323, 4
        %v326 = vshll.u32 %v255, 16
        %v328 = vrot.slane %v326, 5
        %v329 = vor.u32 %v325, %v328
        %v330 = vrot.slane %v329, 4
        %v332 = vshll.u32 %v256, 16
        %v334 = vrot.slane %v332, 5
        %v335 = vsel %vm265, %v330, %v334
        %v337 = vshrl.u32 %v257, 16
        %v339 = vrot.slane %v337, 4
        %v340 = vshll.u32 %v257, 16
        %v342 = vrot.slane %v340, 5
        %v343 = vor.u32 %v339, %v342
        %v344 = vrot.slane %v343, 4
        %v346 = vshll.u32 %v258, 16
        %v348 = vrot.slane %v346, 5
        %v349 = vsel %vm265, %v344, %v348
        %v351 = vshrl.u32 %v259, 16
        %v353 = vrot.slane %v351, 4
        %v354 = vshll.u32 %v259, 16
        %v356 = vrot.slane %v354, 5
        %v357 = vor.u32 %v353, %v356
        %v358 = vrot.slane %v357, 4
        %v360 = vshll.u32 %v260, 16
        %v362 = vrot.slane %v360, 5
        %v363 = vsel %vm265, %v358, %v362
        %v365 = vshrl.u32 %v261, 16
        %v367 = vrot.slane %v365, 4
        %v368 = vshll.u32 %v261, 16
        %v370 = vrot.slane %v368, 5
        %v371 = vor.u32 %v367, %v370
        %v372 = vrot.slane %v371, 4
        %v374 = vshll.u32 %v262, 16
        %v376 = vrot.slane %v374, 5
        %v377 = vsel %vm265, %v372, %v376
        %378 = vrot.lane.b32.xlu0 %v279, 8
        %v379 = vpop.permute.xlu0 %378
        %380 = vrot.lane.b32.xlu0 %v293, 8
        %v381 = vpop.permute.xlu0 %380
        %382 = vrot.lane.b32.xlu0 %v307, 8
        %v383 = vpop.permute.xlu0 %382
        %384 = vrot.lane.b32.xlu0 %v321, 8
        %v385 = vpop.permute.xlu0 %384
        %386 = vrot.lane.b32.xlu0 %v335, 8
        %v387 = vpop.permute.xlu0 %386
        %388 = vrot.lane.b32.xlu0 %v349, 8
        %v389 = vpop.permute.xlu0 %388
        %390 = vrot.lane.b32.xlu0 %v363, 8
        %v391 = vpop.permute.xlu0 %390
        %392 = vrot.lane.b32.xlu0 %v377, 8
        %v393 = vpop.permute.xlu0 %392
        %vm402 = vcmask 126016
        %403 = vst.msk [vmem:[#allocation2] sm:$0xf] %vm402, %v379
        %404 = vst.msk [vmem:[#allocation2 + $0x4] sm:$0xf] %vm402, %v381
        %405 = vst.msk [vmem:[#allocation2 + $0x8] sm:$0xf] %vm402, %v383
        %406 = vst.msk [vmem:[#allocation2 + $0xc] sm:$0xf] %vm402, %v385
        %407 = vst.msk [vmem:[#allocation2 + $0x10] sm:$0xf] %vm402, %v387
        %408 = vst.msk [vmem:[#allocation2 + $0x14] sm:$0xf] %vm402, %v389
        %409 = vst.msk [vmem:[#allocation2 + $0x18] sm:$0xf] %vm402, %v391
        %410 = vst.msk [vmem:[#allocation2 + $0x1c] sm:$0xf] %vm402, %v393
        %v411 = vld [vmem:[%s206] sm:$0xe]
        %v412 = vld [vmem:[%s206 + $0x4] sm:$0x1]
        %v413 = vld [vmem:[%s206 + $0x8] sm:$0xe]
        %v414 = vld [vmem:[%s206 + $0xc] sm:$0x1]
        %v415 = vld [vmem:[%s206 + $0x10] sm:$0xe]
        %v416 = vld [vmem:[%s206 + $0x14] sm:$0x1]
        %v417 = vld [vmem:[%s206 + $0x18] sm:$0xe]
        %v418 = vld [vmem:[%s206 + $0x1c] sm:$0x1]
        %v419 = vld [vmem:[%s206 + $0x20] sm:$0xe]
        %v420 = vld [vmem:[%s206 + $0x24] sm:$0x1]
        %v421 = vld [vmem:[%s206 + $0x28] sm:$0xe]
        %v422 = vld [vmem:[%s206 + $0x2c] sm:$0x1]
        %v423 = vld [vmem:[%s206 + $0x30] sm:$0xe]
        %v424 = vld [vmem:[%s206 + $0x34] sm:$0x1]
        %v425 = vld [vmem:[%s206 + $0x38] sm:$0xe]
        %v426 = vld [vmem:[%s206 + $0x3c] sm:$0x1]
        %vm443 = vcmask 1042432
        %vm444 = vcmask 1046532
        %vm445 = vmor %vm443, %vm444
        %v446 = vrot.slane %v411, 5
        %v447 = vrot.slane %v446, 4
        %v448 = vrot.slane %v412, 5
        %v449 = vsel %vm445, %v447, %v448
        %v450 = vrot.slane %v413, 5
        %v451 = vrot.slane %v450, 4
        %v452 = vrot.slane %v414, 5
        %v453 = vsel %vm445, %v451, %v452
        %v454 = vrot.slane %v415, 5
        %v455 = vrot.slane %v454, 4
        %v456 = vrot.slane %v416, 5
        %v457 = vsel %vm445, %v455, %v456
        %v458 = vrot.slane %v417, 5
        %v459 = vrot.slane %v458, 4
        %v460 = vrot.slane %v418, 5
        %v461 = vsel %vm445, %v459, %v460
        %v462 = vrot.slane %v419, 5
        %v463 = vrot.slane %v462, 4
        %v464 = vrot.slane %v420, 5
        %v465 = vsel %vm445, %v463, %v464
        %v466 = vrot.slane %v421, 5
        %v467 = vrot.slane %v466, 4
        %v468 = vrot.slane %v422, 5
        %v469 = vsel %vm445, %v467, %v468
        %v470 = vrot.slane %v423, 5
        %v471 = vrot.slane %v470, 4
        %v472 = vrot.slane %v424, 5
        %v473 = vsel %vm445, %v471, %v472
        %v474 = vrot.slane %v425, 5
        %v475 = vrot.slane %v474, 4
        %v476 = vrot.slane %v426, 5
        %v477 = vsel %vm445, %v475, %v476
        %478 = vrot.lane.b32.xlu0 %v449, 16
        %v479 = vpop.permute.xlu0 %478
        %480 = vrot.lane.b32.xlu0 %v453, 16
        %v481 = vpop.permute.xlu0 %480
        %482 = vrot.lane.b32.xlu0 %v457, 16
        %v483 = vpop.permute.xlu0 %482
        %484 = vrot.lane.b32.xlu0 %v461, 16
        %v485 = vpop.permute.xlu0 %484
        %486 = vrot.lane.b32.xlu0 %v465, 16
        %v487 = vpop.permute.xlu0 %486
        %488 = vrot.lane.b32.xlu0 %v469, 16
        %v489 = vpop.permute.xlu0 %488
        %490 = vrot.lane.b32.xlu0 %v473, 16
        %v491 = vpop.permute.xlu0 %490
        %492 = vrot.lane.b32.xlu0 %v477, 16
        %v493 = vpop.permute.xlu0 %492
        %vm502 = vcmask 191616
        %503 = vst.msk [vmem:[#allocation2] sm:$0xf] %vm502, %v479
        %504 = vst.msk [vmem:[#allocation2 + $0x4] sm:$0xf] %vm502, %v481
        %505 = vst.msk [vmem:[#allocation2 + $0x8] sm:$0xf] %vm502, %v483
        %506 = vst.msk [vmem:[#allocation2 + $0xc] sm:$0xf] %vm502, %v485
        %507 = vst.msk [vmem:[#allocation2 + $0x10] sm:$0xf] %vm502, %v487
        %508 = vst.msk [vmem:[#allocation2 + $0x14] sm:$0xf] %vm502, %v489
        %509 = vst.msk [vmem:[#allocation2 + $0x18] sm:$0xf] %vm502, %v491
        %510 = vst.msk [vmem:[#allocation2 + $0x1c] sm:$0xf] %vm502, %v493
        %s511 = scalar_lea.vmem %s206, 8
        %v512 = vld [vmem:[%s511] sm:$0xf]
        %v513 = vld [vmem:[%s511 + $0x8] sm:$0xf]
        %v514 = vld [vmem:[%s511 + $0x10] sm:$0xf]
        %v515 = vld [vmem:[%s511 + $0x18] sm:$0xf]
        %v516 = vld [vmem:[%s511 + $0x20] sm:$0xf]
        %v517 = vld [vmem:[%s511 + $0x28] sm:$0xf]
        %v518 = vld [vmem:[%s511 + $0x30] sm:$0xf]
        %v519 = vld [vmem:[%s511 + $0x38] sm:$0xf]
        %s520 = scalar_lea.vmem [#allocation2], 32
        %521 = vst.msk [vmem:[%s520] sm:$0xf] %vm238, %v512
        %522 = vst.msk [vmem:[%s520 + $0x4] sm:$0xf] %vm238, %v513
        %523 = vst.msk [vmem:[%s520 + $0x8] sm:$0xf] %vm238, %v514
        %524 = vst.msk [vmem:[%s520 + $0xc] sm:$0xf] %vm238, %v515
        %525 = vst.msk [vmem:[%s520 + $0x10] sm:$0xf] %vm238, %v516
        %526 = vst.msk [vmem:[%s520 + $0x14] sm:$0xf] %vm238, %v517
        %527 = vst.msk [vmem:[%s520 + $0x18] sm:$0xf] %vm238, %v518
        %528 = vst.msk [vmem:[%s520 + $0x1c] sm:$0xf] %vm238, %v519
        %v529 = vld [vmem:[%s511] sm:$0xf]
        %v530 = vld [vmem:[%s511 + $0x4] sm:$0x1]
        %v531 = vld [vmem:[%s511 + $0x8] sm:$0xf]
        %v532 = vld [vmem:[%s511 + $0xc] sm:$0x1]
        %v533 = vld [vmem:[%s511 + $0x10] sm:$0xf]
        %v534 = vld [vmem:[%s511 + $0x14] sm:$0x1]
        %v535 = vld [vmem:[%s511 + $0x18] sm:$0xf]
        %v536 = vld [vmem:[%s511 + $0x1c] sm:$0x1]
        %v537 = vld [vmem:[%s511 + $0x20] sm:$0xf]
        %v538 = vld [vmem:[%s511 + $0x24] sm:$0x1]
        %v539 = vld [vmem:[%s511 + $0x28] sm:$0xf]
        %v540 = vld [vmem:[%s511 + $0x2c] sm:$0x1]
        %v541 = vld [vmem:[%s511 + $0x30] sm:$0xf]
        %v542 = vld [vmem:[%s511 + $0x34] sm:$0x1]
        %v543 = vld [vmem:[%s511 + $0x38] sm:$0xf]
        %v544 = vld [vmem:[%s511 + $0x3c] sm:$0x1]
        %v546 = vshrl.u32 %v529, 16
        %v548 = vrot.slane %v546, 4
        %v549 = vshll.u32 %v529, 16
        %v551 = vrot.slane %v549, 5
        %v552 = vor.u32 %v548, %v551
        %v553 = vrot.slane %v552, 4
        %v555 = vshll.u32 %v530, 16
        %v557 = vrot.slane %v555, 5
        %v558 = vsel %vm265, %v553, %v557
        %v560 = vshrl.u32 %v531, 16
        %v562 = vrot.slane %v560, 4
        %v563 = vshll.u32 %v531, 16
        %v565 = vrot.slane %v563, 5
        %v566 = vor.u32 %v562, %v565
        %v567 = vrot.slane %v566, 4
        %v569 = vshll.u32 %v532, 16
        %v571 = vrot.slane %v569, 5
        %v572 = vsel %vm265, %v567, %v571
        %v574 = vshrl.u32 %v533, 16
        %v576 = vrot.slane %v574, 4
        %v577 = vshll.u32 %v533, 16
        %v579 = vrot.slane %v577, 5
        %v580 = vor.u32 %v576, %v579
        %v581 = vrot.slane %v580, 4
        %v583 = vshll.u32 %v534, 16
        %v585 = vrot.slane %v583, 5
        %v586 = vsel %vm265, %v581, %v585
        %v588 = vshrl.u32 %v535, 16
        %v590 = vrot.slane %v588, 4
        %v591 = vshll.u32 %v535, 16
        %v593 = vrot.slane %v591, 5
        %v594 = vor.u32 %v590, %v593
        %v595 = vrot.slane %v594, 4
        %v597 = vshll.u32 %v536, 16
        %v599 = vrot.slane %v597, 5
        %v600 = vsel %vm265, %v595, %v599
        %v602 = vshrl.u32 %v537, 16
        %v604 = vrot.slane %v602, 4
        %v605 = vshll.u32 %v537, 16
        %v607 = vrot.slane %v605, 5
        %v608 = vor.u32 %v604, %v607
        %v609 = vrot.slane %v608, 4
        %v611 = vshll.u32 %v538, 16
        %v613 = vrot.slane %v611, 5
        %v614 = vsel %vm265, %v609, %v613
        %v616 = vshrl.u32 %v539, 16
        %v618 = vrot.slane %v616, 4
        %v619 = vshll.u32 %v539, 16
        %v621 = vrot.slane %v619, 5
        %v622 = vor.u32 %v618, %v621
        %v623 = vrot.slane %v622, 4
        %v625 = vshll.u32 %v540, 16
        %v627 = vrot.slane %v625, 5
        %v628 = vsel %vm265, %v623, %v627
        %v630 = vshrl.u32 %v541, 16
        %v632 = vrot.slane %v630, 4
        %v633 = vshll.u32 %v541, 16
        %v635 = vrot.slane %v633, 5
        %v636 = vor.u32 %v632, %v635
        %v637 = vrot.slane %v636, 4
        %v639 = vshll.u32 %v542, 16
        %v641 = vrot.slane %v639, 5
        %v642 = vsel %vm265, %v637, %v641
        %v644 = vshrl.u32 %v543, 16
        %v646 = vrot.slane %v644, 4
        %v647 = vshll.u32 %v543, 16
        %v649 = vrot.slane %v647, 5
        %v650 = vor.u32 %v646, %v649
        %v651 = vrot.slane %v650, 4
        %v653 = vshll.u32 %v544, 16
        %v655 = vrot.slane %v653, 5
        %v656 = vsel %vm265, %v651, %v655
        %657 = vrot.lane.b32.xlu0 %v558, 8
        %v658 = vpop.permute.xlu0 %657
        %659 = vrot.lane.b32.xlu0 %v572, 8
        %v660 = vpop.permute.xlu0 %659
        %661 = vrot.lane.b32.xlu0 %v586, 8
        %v662 = vpop.permute.xlu0 %661
        %663 = vrot.lane.b32.xlu0 %v600, 8
        %v664 = vpop.permute.xlu0 %663
        %665 = vrot.lane.b32.xlu0 %v614, 8
        %v666 = vpop.permute.xlu0 %665
        %667 = vrot.lane.b32.xlu0 %v628, 8
        %v668 = vpop.permute.xlu0 %667
        %669 = vrot.lane.b32.xlu0 %v642, 8
        %v670 = vpop.permute.xlu0 %669
        %671 = vrot.lane.b32.xlu0 %v656, 8
        %v672 = vpop.permute.xlu0 %671
        %681 = vst.msk [vmem:[%s520] sm:$0xf] %vm402, %v658
        %682 = vst.msk [vmem:[%s520 + $0x4] sm:$0xf] %vm402, %v660
        %683 = vst.msk [vmem:[%s520 + $0x8] sm:$0xf] %vm402, %v662
        %684 = vst.msk [vmem:[%s520 + $0xc] sm:$0xf] %vm402, %v664
        %685 = vst.msk [vmem:[%s520 + $0x10] sm:$0xf] %vm402, %v666
        %686 = vst.msk [vmem:[%s520 + $0x14] sm:$0xf] %vm402, %v668
        %687 = vst.msk [vmem:[%s520 + $0x18] sm:$0xf] %vm402, %v670
        %688 = vst.msk [vmem:[%s520 + $0x1c] sm:$0xf] %vm402, %v672
        %v689 = vld [vmem:[%s511] sm:$0xe]
        %v690 = vld [vmem:[%s511 + $0x4] sm:$0x1]
        %v691 = vld [vmem:[%s511 + $0x8] sm:$0xe]
        %v692 = vld [vmem:[%s511 + $0xc] sm:$0x1]
        %v693 = vld [vmem:[%s511 + $0x10] sm:$0xe]
        %v694 = vld [vmem:[%s511 + $0x14] sm:$0x1]
        %v695 = vld [vmem:[%s511 + $0x18] sm:$0xe]
        %v696 = vld [vmem:[%s511 + $0x1c] sm:$0x1]
        %v697 = vld [vmem:[%s511 + $0x20] sm:$0xe]
        %v698 = vld [vmem:[%s511 + $0x24] sm:$0x1]
        %v699 = vld [vmem:[%s511 + $0x28] sm:$0xe]
        %v700 = vld [vmem:[%s511 + $0x2c] sm:$0x1]
        %v701 = vld [vmem:[%s511 + $0x30] sm:$0xe]
        %v702 = vld [vmem:[%s511 + $0x34] sm:$0x1]
        %v703 = vld [vmem:[%s511 + $0x38] sm:$0xe]
        %v704 = vld [vmem:[%s511 + $0x3c] sm:$0x1]
        %v721 = vrot.slane %v689, 5
        %v722 = vrot.slane %v721, 4
        %v723 = vrot.slane %v690, 5
        %v724 = vsel %vm445, %v722, %v723
        %v725 = vrot.slane %v691, 5
        %v726 = vrot.slane %v725, 4
        %v727 = vrot.slane %v692, 5
        %v728 = vsel %vm445, %v726, %v727
        %v729 = vrot.slane %v693, 5
        %v730 = vrot.slane %v729, 4
        %v731 = vrot.slane %v694, 5
        %v732 = vsel %vm445, %v730, %v731
        %v733 = vrot.slane %v695, 5
        %v734 = vrot.slane %v733, 4
        %v735 = vrot.slane %v696, 5
        %v736 = vsel %vm445, %v734, %v735
        %v737 = vrot.slane %v697, 5
        %v738 = vrot.slane %v737, 4
        %v739 = vrot.slane %v698, 5
        %v740 = vsel %vm445, %v738, %v739
        %v741 = vrot.slane %v699, 5
        %v742 = vrot.slane %v741, 4
        %v743 = vrot.slane %v700, 5
        %v744 = vsel %vm445, %v742, %v743
        %v745 = vrot.slane %v701, 5
        %v746 = vrot.slane %v745, 4
        %v747 = vrot.slane %v702, 5
        %v748 = vsel %vm445, %v746, %v747
        %v749 = vrot.slane %v703, 5
        %v750 = vrot.slane %v749, 4
        %v751 = vrot.slane %v704, 5
        %v752 = vsel %vm445, %v750, %v751
        %753 = vrot.lane.b32.xlu0 %v724, 16
        %v754 = vpop.permute.xlu0 %753
        %755 = vrot.lane.b32.xlu0 %v728, 16
        %v756 = vpop.permute.xlu0 %755
        %757 = vrot.lane.b32.xlu0 %v732, 16
        %v758 = vpop.permute.xlu0 %757
        %759 = vrot.lane.b32.xlu0 %v736, 16
        %v760 = vpop.permute.xlu0 %759
        %761 = vrot.lane.b32.xlu0 %v740, 16
        %v762 = vpop.permute.xlu0 %761
        %763 = vrot.lane.b32.xlu0 %v744, 16
        %v764 = vpop.permute.xlu0 %763
        %765 = vrot.lane.b32.xlu0 %v748, 16
        %v766 = vpop.permute.xlu0 %765
        %767 = vrot.lane.b32.xlu0 %v752, 16
        %v768 = vpop.permute.xlu0 %767
        %777 = vst.msk [vmem:[%s520] sm:$0xf] %vm502, %v754
        %778 = vst.msk [vmem:[%s520 + $0x4] sm:$0xf] %vm502, %v756
        %779 = vst.msk [vmem:[%s520 + $0x8] sm:$0xf] %vm502, %v758
        %780 = vst.msk [vmem:[%s520 + $0xc] sm:$0xf] %vm502, %v760
        %781 = vst.msk [vmem:[%s520 + $0x10] sm:$0xf] %vm502, %v762
        %782 = vst.msk [vmem:[%s520 + $0x14] sm:$0xf] %vm502, %v764
        %783 = vst.msk [vmem:[%s520 + $0x18] sm:$0xf] %vm502, %v766
        %784 = vst.msk [vmem:[%s520 + $0x1c] sm:$0xf] %vm502, %v768
        %s785 = scalar_lea.vmem %s206, 16
        %v786 = vld [vmem:[%s785] sm:$0xf]
        %v787 = vld [vmem:[%s785 + $0x8] sm:$0xf]
        %v788 = vld [vmem:[%s785 + $0x10] sm:$0xf]
        %v789 = vld [vmem:[%s785 + $0x18] sm:$0xf]
        %v790 = vld [vmem:[%s785 + $0x20] sm:$0xf]
        %v791 = vld [vmem:[%s785 + $0x28] sm:$0xf]
        %v792 = vld [vmem:[%s785 + $0x30] sm:$0xf]
        %v793 = vld [vmem:[%s785 + $0x38] sm:$0xf]
        %s794 = scalar_lea.vmem [#allocation2], 64
        %795 = vst.msk [vmem:[%s794] sm:$0xf] %vm238, %v786
        %796 = vst.msk [vmem:[%s794 + $0x4] sm:$0xf] %vm238, %v787
        %797 = vst.msk [vmem:[%s794 + $0x8] sm:$0xf] %vm238, %v788
        %798 = vst.msk [vmem:[%s794 + $0xc] sm:$0xf] %vm238, %v789
        %799 = vst.msk [vmem:[%s794 + $0x10] sm:$0xf] %vm238, %v790
        %800 = vst.msk [vmem:[%s794 + $0x14] sm:$0xf] %vm238, %v791
        %801 = vst.msk [vmem:[%s794 + $0x18] sm:$0xf] %vm238, %v792
        %802 = vst.msk [vmem:[%s794 + $0x1c] sm:$0xf] %vm238, %v793
        %v803 = vld [vmem:[%s785] sm:$0xf]
        %v804 = vld [vmem:[%s785 + $0x4] sm:$0x1]
        %v805 = vld [vmem:[%s785 + $0x8] sm:$0xf]
        %v806 = vld [vmem:[%s785 + $0xc] sm:$0x1]
        %v807 = vld [vmem:[%s785 + $0x10] sm:$0xf]
        %v808 = vld [vmem:[%s785 + $0x14] sm:$0x1]
        %v809 = vld [vmem:[%s785 + $0x18] sm:$0xf]
        %v810 = vld [vmem:[%s785 + $0x1c] sm:$0x1]
        %v811 = vld [vmem:[%s785 + $0x20] sm:$0xf]
        %v812 = vld [vmem:[%s785 + $0x24] sm:$0x1]
        %v813 = vld [vmem:[%s785 + $0x28] sm:$0xf]
        %v814 = vld [vmem:[%s785 + $0x2c] sm:$0x1]
        %v815 = vld [vmem:[%s785 + $0x30] sm:$0xf]
        %v816 = vld [vmem:[%s785 + $0x34] sm:$0x1]
        %v817 = vld [vmem:[%s785 + $0x38] sm:$0xf]
        %v818 = vld [vmem:[%s785 + $0x3c] sm:$0x1]
        %v820 = vshrl.u32 %v803, 16
        %v822 = vrot.slane %v820, 4
        %v823 = vshll.u32 %v803, 16
        %v825 = vrot.slane %v823, 5
        %v826 = vor.u32 %v822, %v825
        %v827 = vrot.slane %v826, 4
        %v829 = vshll.u32 %v804, 16
        %v831 = vrot.slane %v829, 5
        %v832 = vsel %vm265, %v827, %v831
        %v834 = vshrl.u32 %v805, 16
        %v836 = vrot.slane %v834, 4
        %v837 = vshll.u32 %v805, 16
        %v839 = vrot.slane %v837, 5
        %v840 = vor.u32 %v836, %v839
        %v841 = vrot.slane %v840, 4
        %v843 = vshll.u32 %v806, 16
        %v845 = vrot.slane %v843, 5
        %v846 = vsel %vm265, %v841, %v845
        %v848 = vshrl.u32 %v807, 16
        %v850 = vrot.slane %v848, 4
        %v851 = vshll.u32 %v807, 16
        %v853 = vrot.slane %v851, 5
        %v854 = vor.u32 %v850, %v853
        %v855 = vrot.slane %v854, 4
        %v857 = vshll.u32 %v808, 16
        %v859 = vrot.slane %v857, 5
        %v860 = vsel %vm265, %v855, %v859
        %v862 = vshrl.u32 %v809, 16
        %v864 = vrot.slane %v862, 4
        %v865 = vshll.u32 %v809, 16
        %v867 = vrot.slane %v865, 5
        %v868 = vor.u32 %v864, %v867
        %v869 = vrot.slane %v868, 4
        %v871 = vshll.u32 %v810, 16
        %v873 = vrot.slane %v871, 5
        %v874 = vsel %vm265, %v869, %v873
        %v876 = vshrl.u32 %v811, 16
        %v878 = vrot.slane %v876, 4
        %v879 = vshll.u32 %v811, 16
        %v881 = vrot.slane %v879, 5
        %v882 = vor.u32 %v878, %v881
        %v883 = vrot.slane %v882, 4
        %v885 = vshll.u32 %v812, 16
        %v887 = vrot.slane %v885, 5
        %v888 = vsel %vm265, %v883, %v887
        %v890 = vshrl.u32 %v813, 16
        %v892 = vrot.slane %v890, 4
        %v893 = vshll.u32 %v813, 16
        %v895 = vrot.slane %v893, 5
        %v896 = vor.u32 %v892, %v895
        %v897 = vrot.slane %v896, 4
        %v899 = vshll.u32 %v814, 16
        %v901 = vrot.slane %v899, 5
        %v902 = vsel %vm265, %v897, %v901
        %v904 = vshrl.u32 %v815, 16
        %v906 = vrot.slane %v904, 4
        %v907 = vshll.u32 %v815, 16
        %v909 = vrot.slane %v907, 5
        %v910 = vor.u32 %v906, %v909
        %v911 = vrot.slane %v910, 4
        %v913 = vshll.u32 %v816, 16
        %v915 = vrot.slane %v913, 5
        %v916 = vsel %vm265, %v911, %v915
        %v918 = vshrl.u32 %v817, 16
        %v920 = vrot.slane %v918, 4
        %v921 = vshll.u32 %v817, 16
        %v923 = vrot.slane %v921, 5
        %v924 = vor.u32 %v920, %v923
        %v925 = vrot.slane %v924, 4
        %v927 = vshll.u32 %v818, 16
        %v929 = vrot.slane %v927, 5
        %v930 = vsel %vm265, %v925, %v929
        %931 = vrot.lane.b32.xlu0 %v832, 8
        %v932 = vpop.permute.xlu0 %931
        %933 = vrot.lane.b32.xlu0 %v846, 8
        %v934 = vpop.permute.xlu0 %933
        %935 = vrot.lane.b32.xlu0 %v860, 8
        %v936 = vpop.permute.xlu0 %935
        %937 = vrot.lane.b32.xlu0 %v874, 8
        %v938 = vpop.permute.xlu0 %937
        %939 = vrot.lane.b32.xlu0 %v888, 8
        %v940 = vpop.permute.xlu0 %939
        %941 = vrot.lane.b32.xlu0 %v902, 8
        %v942 = vpop.permute.xlu0 %941
        %943 = vrot.lane.b32.xlu0 %v916, 8
        %v944 = vpop.permute.xlu0 %943
        %945 = vrot.lane.b32.xlu0 %v930, 8
        %v946 = vpop.permute.xlu0 %945
        %955 = vst.msk [vmem:[%s794] sm:$0xf] %vm402, %v932
        %956 = vst.msk [vmem:[%s794 + $0x4] sm:$0xf] %vm402, %v934
        %957 = vst.msk [vmem:[%s794 + $0x8] sm:$0xf] %vm402, %v936
        %958 = vst.msk [vmem:[%s794 + $0xc] sm:$0xf] %vm402, %v938
        %959 = vst.msk [vmem:[%s794 + $0x10] sm:$0xf] %vm402, %v940
        %960 = vst.msk [vmem:[%s794 + $0x14] sm:$0xf] %vm402, %v942
        %961 = vst.msk [vmem:[%s794 + $0x18] sm:$0xf] %vm402, %v944
        %962 = vst.msk [vmem:[%s794 + $0x1c] sm:$0xf] %vm402, %v946
        %v963 = vld [vmem:[%s785] sm:$0xe]
        %v964 = vld [vmem:[%s785 + $0x4] sm:$0x1]
        %v965 = vld [vmem:[%s785 + $0x8] sm:$0xe]
        %v966 = vld [vmem:[%s785 + $0xc] sm:$0x1]
        %v967 = vld [vmem:[%s785 + $0x10] sm:$0xe]
        %v968 = vld [vmem:[%s785 + $0x14] sm:$0x1]
        %v969 = vld [vmem:[%s785 + $0x18] sm:$0xe]
        %v970 = vld [vmem:[%s785 + $0x1c] sm:$0x1]
        %v971 = vld [vmem:[%s785 + $0x20] sm:$0xe]
        %v972 = vld [vmem:[%s785 + $0x24] sm:$0x1]
        %v973 = vld [vmem:[%s785 + $0x28] sm:$0xe]
        %v974 = vld [vmem:[%s785 + $0x2c] sm:$0x1]
        %v975 = vld [vmem:[%s785 + $0x30] sm:$0xe]
        %v976 = vld [vmem:[%s785 + $0x34] sm:$0x1]
        %v977 = vld [vmem:[%s785 + $0x38] sm:$0xe]
        %v978 = vld [vmem:[%s785 + $0x3c] sm:$0x1]
        %v995 = vrot.slane %v963, 5
        %v996 = vrot.slane %v995, 4
        %v997 = vrot.slane %v964, 5
        %v998 = vsel %vm445, %v996, %v997
        %v999 = vrot.slane %v965, 5
        %v1000 = vrot.slane %v999, 4
        %v1001 = vrot.slane %v966, 5
        %v1002 = vsel %vm445, %v1000, %v1001
        %v1003 = vrot.slane %v967, 5
        %v1004 = vrot.slane %v1003, 4
        %v1005 = vrot.slane %v968, 5
        %v1006 = vsel %vm445, %v1004, %v1005
        %v1007 = vrot.slane %v969, 5
        %v1008 = vrot.slane %v1007, 4
        %v1009 = vrot.slane %v970, 5
        %v1010 = vsel %vm445, %v1008, %v1009
        %v1011 = vrot.slane %v971, 5
        %v1012 = vrot.slane %v1011, 4
        %v1013 = vrot.slane %v972, 5
        %v1014 = vsel %vm445, %v1012, %v1013
        %v1015 = vrot.slane %v973, 5
        %v1016 = vrot.slane %v1015, 4
        %v1017 = vrot.slane %v974, 5
        %v1018 = vsel %vm445, %v1016, %v1017
        %v1019 = vrot.slane %v975, 5
        %v1020 = vrot.slane %v1019, 4
        %v1021 = vrot.slane %v976, 5
        %v1022 = vsel %vm445, %v1020, %v1021
        %v1023 = vrot.slane %v977, 5
        %v1024 = vrot.slane %v1023, 4
        %v1025 = vrot.slane %v978, 5
        %v1026 = vsel %vm445, %v1024, %v1025
        %1027 = vrot.lane.b32.xlu0 %v998, 16
        %v1028 = vpop.permute.xlu0 %1027
        %1029 = vrot.lane.b32.xlu0 %v1002, 16
        %v1030 = vpop.permute.xlu0 %1029
        %1031 = vrot.lane.b32.xlu0 %v1006, 16
        %v1032 = vpop.permute.xlu0 %1031
        %1033 = vrot.lane.b32.xlu0 %v1010, 16
        %v1034 = vpop.permute.xlu0 %1033
        %1035 = vrot.lane.b32.xlu0 %v1014, 16
        %v1036 = vpop.permute.xlu0 %1035
        %1037 = vrot.lane.b32.xlu0 %v1018, 16
        %v1038 = vpop.permute.xlu0 %1037
        %1039 = vrot.lane.b32.xlu0 %v1022, 16
        %v1040 = vpop.permute.xlu0 %1039
        %1041 = vrot.lane.b32.xlu0 %v1026, 16
        %v1042 = vpop.permute.xlu0 %1041
        %1051 = vst.msk [vmem:[%s794] sm:$0xf] %vm502, %v1028
        %1052 = vst.msk [vmem:[%s794 + $0x4] sm:$0xf] %vm502, %v1030
        %1053 = vst.msk [vmem:[%s794 + $0x8] sm:$0xf] %vm502, %v1032
        %1054 = vst.msk [vmem:[%s794 + $0xc] sm:$0xf] %vm502, %v1034
        %1055 = vst.msk [vmem:[%s794 + $0x10] sm:$0xf] %vm502, %v1036
        %1056 = vst.msk [vmem:[%s794 + $0x14] sm:$0xf] %vm502, %v1038
        %1057 = vst.msk [vmem:[%s794 + $0x18] sm:$0xf] %vm502, %v1040
        %1058 = vst.msk [vmem:[%s794 + $0x1c] sm:$0xf] %vm502, %v1042
      $region36: #{basic_block_forward.5} parent=31 // pred_fallthru
        _
      %v1059 = vld [vmem:[#allocation2] sm:$0xf]
      %v1060 = vld [vmem:[#allocation2 + $0x4] sm:$0xf]
      %v1061 = vld [vmem:[#allocation2 + $0x8] sm:$0xf]
      %v1062 = vld [vmem:[#allocation2 + $0xc] sm:$0xf]
      %v1063 = vld [vmem:[#allocation2 + $0x10] sm:$0xf]
      %v1064 = vld [vmem:[#allocation2 + $0x14] sm:$0xf]
      %v1065 = vld [vmem:[#allocation2 + $0x18] sm:$0xf]
      %v1066 = vld [vmem:[#allocation2 + $0x1c] sm:$0xf]
      %s1067 = smul.u32 %s19, 3
      %s1068 = smul.u32 %s1067, 3
      %s1069 = smul.addr %s1068, 4
      %s1070 = scalar_lea.vmem %s1, %s1069
      %v1071 = vld [vmem:[%s1070] sm:$0xf]
      %v1072 = vld [vmem:[%s1070 + $0x4] sm:$0xf]
      %v1073 = vld [vmem:[%s1070 + $0x8] sm:$0xf]
      %s1074 = scalar_lea.vmem [#allocation2], 32
      %v1075 = vld [vmem:[%s1074] sm:$0xf]
      %v1076 = vld [vmem:[%s1074 + $0x4] sm:$0xf]
      %v1077 = vld [vmem:[%s1074 + $0x8] sm:$0xf]
      %v1078 = vld [vmem:[%s1074 + $0xc] sm:$0xf]
      %v1079 = vld [vmem:[%s1074 + $0x10] sm:$0xf]
      %v1080 = vld [vmem:[%s1074 + $0x14] sm:$0xf]
      %v1081 = vld [vmem:[%s1074 + $0x18] sm:$0xf]
      %v1082 = vld [vmem:[%s1074 + $0x1c] sm:$0xf]
      %s1083 = sadd.s32 %s1067, 1
      %s1084 = smul.u32 %s1083, 3
      %s1085 = smul.addr %s1084, 4
      %s1086 = scalar_lea.vmem %s1, %s1085
      %v1087 = vld [vmem:[%s1086] sm:$0xf]
      %v1088 = vld [vmem:[%s1086 + $0x4] sm:$0xf]
      %v1089 = vld [vmem:[%s1086 + $0x8] sm:$0xf]
      %v1098 = vunpack.c.l.b16 %v1075
      %v1099 = vunpack.c.l.b16 %v1076
      %v1100 = vunpack.c.l.b16 %v1077
      %v1101 = vunpack.c.l.b16 %v1078
      %v1102 = vunpack.c.l.b16 %v1079
      %v1103 = vunpack.c.l.b16 %v1080
      %v1104 = vunpack.c.l.b16 %v1081
      %v1105 = vunpack.c.l.b16 %v1082
      %v1106 = vpack.c.b16 %v1099, %v1098
      %v1107 = vpack.c.b16 %v1101, %v1100
      %v1108 = vpack.c.b16 %v1103, %v1102
      %v1109 = vpack.c.b16 %v1105, %v1104
      %v1113 = vunpack.c.l.b16 %v1087
      %v1114 = vunpack.c.l.b16 %v1088
      %v1115 = vunpack.c.l.b16 %v1089
      %v1116 = vpack.c.b16 %v1114, %v1113
      %v1117 = vpack.c.b16 %v1115, %v1115
      %vm1119 = vcmask 195584
      %v1121 = vsel %vm1119, %v1106, 0
      %v1124 = vsel %vm1119, %v1107, 0
      %v1127 = vsel %vm1119, %v1108, 0
      %v1130 = vsel %vm1119, %v1109, 0
      %vm1132 = vcmask 1043456
      %v1134 = vsel %vm1132, %v1117, 0
      %1136 = vmatprep.subr.bf16.mxu0 0
      %1137 = vmatpush1.bf16.msra.mxu0 0
      %1138 = vmatprep.subr.bf16.mxu0 0
      %1139 = vmatpush1.bf16.msra.mxu0 0
      %1140 = vmatprep.subr.bf16.mxu0 0
      %1141 = vmatpush1.bf16.msra.mxu0 0
      %1142 = vmatprep.subr.bf16.mxu0 0
      %1143 = vmatpush1.bf16.msra.mxu0 0
      %1144 = vmatprep.subr.bf16.mxu0 0
      %1145 = vmatpush1.bf16.msra.mxu0 0
      %1146 = vmatprep.subr.bf16.mxu0 0
      %1147 = vmatpush1.bf16.msra.mxu0 0
      %1148 = vmatprep.subr.bf16.mxu0 0
      %1149 = vmatpush1.bf16.msra.mxu0 %v1134
      %1150 = vmatprep.subr.bf16.mxu0 0
      %1151 = vmatpush1.bf16.msra.mxu0 %v1116
      %1152 = vmatprep.subr.bf16.mxu0 0
      %1153 = vmatpush2.bf16.msra.mxu0 0
      %1154 = vmatprep.subr.bf16.mxu0 0
      %1155 = vmatpush2.bf16.msra.mxu0 0
      %1156 = vmatprep.subr.bf16.mxu0 0
      %1157 = vmatpush2.bf16.msra.mxu0 0
      %1158 = vmatprep.subr.bf16.mxu0 0
      %1159 = vmatpush2.bf16.msra.mxu0 0
      %1160 = vmatprep.subr.bf16.mxu0 0
      %1161 = vmatpush2.bf16.msra.mxu0 0
      %1162 = vmatprep.subr.bf16.mxu0 0
      %1163 = vmatpush2.bf16.msra.mxu0 0
      %1164 = vmatprep.subr.bf16.mxu0 0
      %1165 = vmatpush2.bf16.msra.mxu0 0
      %1166 = vmatprep.subr.bf16.mxu0 0
      %1167 = vmatpush2.bf16.msra.mxu0 0
      %1168 = vmatprep.mubr.bf16.mxu0 0
      %1169 = vmatmul.mubr.bf16.gmra.mxu0 %v1121
      %v1170 = vpop.f32.mrf.mxu0
      %v1171 = vadd.f32 0.0, %v1170
      %v1172 = vpop.f32.mrf.mxu0
      %v1173 = vpop.f32.mrf.mxu0
      %v1174 = vadd.f32 0.0, %v1173
      %v1175 = vpop.f32.mrf.mxu0
      %1176 = vmatprep.mubr.bf16.mxu0 0
      %1177 = vmatmul.mubr.bf16.gmra.mxu0 %v1124
      %v1178 = vpop.f32.mrf.mxu0
      %v1179 = vadd.f32 0.0, %v1178
      %v1180 = vpop.f32.mrf.mxu0
      %v1181 = vpop.f32.mrf.mxu0
      %v1182 = vadd.f32 0.0, %v1181
      %v1183 = vpop.f32.mrf.mxu0
      %1184 = vmatprep.mubr.bf16.mxu0 0
      %1185 = vmatmul.mubr.bf16.gmra.mxu0 %v1127
      %v1186 = vpop.f32.mrf.mxu0
      %v1187 = vadd.f32 0.0, %v1186
      %v1188 = vpop.f32.mrf.mxu0
      %v1189 = vpop.f32.mrf.mxu0
      %v1190 = vadd.f32 0.0, %v1189
      %v1191 = vpop.f32.mrf.mxu0
      %1192 = vmatprep.mubr.bf16.mxu0 0
      %1193 = vmatmul.mubr.bf16.gmra.mxu0 %v1130
      %v1194 = vpop.f32.mrf.mxu0
      %v1195 = vadd.f32 0.0, %v1194
      %v1196 = vpop.f32.mrf.mxu0
      %v1197 = vpop.f32.mrf.mxu0
      %v1198 = vadd.f32 0.0, %v1197
      %v1199 = vpop.f32.mrf.mxu0
      %1200 = vdwg.mxu0
      %v1209 = vunpack.c.l.b16 %v1059
      %v1210 = vunpack.c.l.b16 %v1060
      %v1211 = vunpack.c.l.b16 %v1061
      %v1212 = vunpack.c.l.b16 %v1062
      %v1213 = vunpack.c.l.b16 %v1063
      %v1214 = vunpack.c.l.b16 %v1064
      %v1215 = vunpack.c.l.b16 %v1065
      %v1216 = vunpack.c.l.b16 %v1066
      %v1217 = vpack.c.b16 %v1210, %v1209
      %v1218 = vpack.c.b16 %v1212, %v1211
      %v1219 = vpack.c.b16 %v1214, %v1213
      %v1220 = vpack.c.b16 %v1216, %v1215
      %v1224 = vunpack.c.l.b16 %v1071
      %v1225 = vunpack.c.l.b16 %v1072
      %v1226 = vunpack.c.l.b16 %v1073
      %v1227 = vpack.c.b16 %v1225, %v1224
      %v1228 = vpack.c.b16 %v1226, %v1226
      %v1231 = vsel %vm1119, %v1217, 0
      %v1234 = vsel %vm1119, %v1218, 0
      %v1237 = vsel %vm1119, %v1219, 0
      %v1240 = vsel %vm1119, %v1220, 0
      %v1243 = vsel %vm1132, %v1228, 0
      %1245 = vmatprep.subr.bf16.mxu0 0
      %1246 = vmatpush1.bf16.msra.mxu0 0
      %1247 = vmatprep.subr.bf16.mxu0 0
      %1248 = vmatpush1.bf16.msra.mxu0 0
      %1249 = vmatprep.subr.bf16.mxu0 0
      %1250 = vmatpush1.bf16.msra.mxu0 0
      %1251 = vmatprep.subr.bf16.mxu0 0
      %1252 = vmatpush1.bf16.msra.mxu0 0
      %1253 = vmatprep.subr.bf16.mxu0 0
      %1254 = vmatpush1.bf16.msra.mxu0 0
      %1255 = vmatprep.subr.bf16.mxu0 0
      %1256 = vmatpush1.bf16.msra.mxu0 0
      %1257 = vmatprep.subr.bf16.mxu0 0
      %1258 = vmatpush1.bf16.msra.mxu0 %v1243
      %1259 = vmatprep.subr.bf16.mxu0 0
      %1260 = vmatpush1.bf16.msra.mxu0 %v1227
      %1261 = vmatprep.subr.bf16.mxu0 0
      %1262 = vmatpush2.bf16.msra.mxu0 0
      %1263 = vmatprep.subr.bf16.mxu0 0
      %1264 = vmatpush2.bf16.msra.mxu0 0
      %1265 = vmatprep.subr.bf16.mxu0 0
      %1266 = vmatpush2.bf16.msra.mxu0 0
      %1267 = vmatprep.subr.bf16.mxu0 0
      %1268 = vmatpush2.bf16.msra.mxu0 0
      %1269 = vmatprep.subr.bf16.mxu0 0
      %1270 = vmatpush2.bf16.msra.mxu0 0
      %1271 = vmatprep.subr.bf16.mxu0 0
      %1272 = vmatpush2.bf16.msra.mxu0 0
      %1273 = vmatprep.subr.bf16.mxu0 0
      %1274 = vmatpush2.bf16.msra.mxu0 0
      %1275 = vmatprep.subr.bf16.mxu0 0
      %1276 = vmatpush2.bf16.msra.mxu0 0
      %1277 = vmatprep.mubr.bf16.mxu0 0
      %1278 = vmatmul.mubr.bf16.gmra.mxu0 %v1231
      %v1279 = vpop.f32.mrf.mxu0
      %v1280 = vadd.f32 %v1171, %v1279
      %v1281 = vpop.f32.mrf.mxu0
      %v1282 = vpop.f32.mrf.mxu0
      %v1283 = vadd.f32 %v1174, %v1282
      %v1284 = vpop.f32.mrf.mxu0
      %1285 = vmatprep.mubr.bf16.mxu0 0
      %1286 = vmatmul.mubr.bf16.gmra.mxu0 %v1234
      %v1287 = vpop.f32.mrf.mxu0
      %v1288 = vadd.f32 %v1179, %v1287
      %v1289 = vpop.f32.mrf.mxu0
      %v1290 = vpop.f32.mrf.mxu0
      %v1291 = vadd.f32 %v1182, %v1290
      %v1292 = vpop.f32.mrf.mxu0
      %1293 = vmatprep.mubr.bf16.mxu0 0
      %1294 = vmatmul.mubr.bf16.gmra.mxu0 %v1237
      %v1295 = vpop.f32.mrf.mxu0
      %v1296 = vadd.f32 %v1187, %v1295
      %v1297 = vpop.f32.mrf.mxu0
      %v1298 = vpop.f32.mrf.mxu0
      %v1299 = vadd.f32 %v1190, %v1298
      %v1300 = vpop.f32.mrf.mxu0
      %1301 = vmatprep.mubr.bf16.mxu0 0
      %1302 = vmatmul.mubr.bf16.gmra.mxu0 %v1240
      %v1303 = vpop.f32.mrf.mxu0
      %v1304 = vadd.f32 %v1195, %v1303
      %v1305 = vpop.f32.mrf.mxu0
      %v1306 = vpop.f32.mrf.mxu0
      %v1307 = vadd.f32 %v1198, %v1306
      %v1308 = vpop.f32.mrf.mxu0
      %1309 = vdwg.mxu0
      %s1310 = scalar_lea.vmem [#allocation2], 64
      %v1311 = vld [vmem:[%s1310] sm:$0xf]
      %v1312 = vld [vmem:[%s1310 + $0x4] sm:$0xf]
      %v1313 = vld [vmem:[%s1310 + $0x8] sm:$0xf]
      %v1314 = vld [vmem:[%s1310 + $0xc] sm:$0xf]
      %v1315 = vld [vmem:[%s1310 + $0x10] sm:$0xf]
      %v1316 = vld [vmem:[%s1310 + $0x14] sm:$0xf]
      %v1317 = vld [vmem:[%s1310 + $0x18] sm:$0xf]
      %v1318 = vld [vmem:[%s1310 + $0x1c] sm:$0xf]
      %s1319 = sadd.s32 %s1067, 2
      %s1320 = smul.u32 %s1319, 3
      %s1321 = smul.addr %s1320, 4
      %s1322 = scalar_lea.vmem %s1, %s1321
      %v1323 = vld [vmem:[%s1322] sm:$0xf]
      %v1324 = vld [vmem:[%s1322 + $0x4] sm:$0xf]
      %v1325 = vld [vmem:[%s1322 + $0x8] sm:$0xf]
      %v1334 = vunpack.c.l.b16 %v1311
      %v1335 = vunpack.c.l.b16 %v1312
      %v1336 = vunpack.c.l.b16 %v1313
      %v1337 = vunpack.c.l.b16 %v1314
      %v1338 = vunpack.c.l.b16 %v1315
      %v1339 = vunpack.c.l.b16 %v1316
      %v1340 = vunpack.c.l.b16 %v1317
      %v1341 = vunpack.c.l.b16 %v1318
      %v1342 = vpack.c.b16 %v1335, %v1334
      %v1343 = vpack.c.b16 %v1337, %v1336
      %v1344 = vpack.c.b16 %v1339, %v1338
      %v1345 = vpack.c.b16 %v1341, %v1340
      %v1349 = vunpack.c.l.b16 %v1323
      %v1350 = vunpack.c.l.b16 %v1324
      %v1351 = vunpack.c.l.b16 %v1325
      %v1352 = vpack.c.b16 %v1350, %v1349
      %v1353 = vpack.c.b16 %v1351, %v1351
      %v1356 = vsel %vm1119, %v1342, 0
      %v1359 = vsel %vm1119, %v1343, 0
      %v1362 = vsel %vm1119, %v1344, 0
      %v1365 = vsel %vm1119, %v1345, 0
      %v1368 = vsel %vm1132, %v1353, 0
      %1370 = vmatprep.subr.bf16.mxu0 0
      %1371 = vmatpush1.bf16.msra.mxu0 0
      %1372 = vmatprep.subr.bf16.mxu0 0
      %1373 = vmatpush1.bf16.msra.mxu0 0
      %1374 = vmatprep.subr.bf16.mxu0 0
      %1375 = vmatpush1.bf16.msra.mxu0 0
      %1376 = vmatprep.subr.bf16.mxu0 0
      %1377 = vmatpush1.bf16.msra.mxu0 0
      %1378 = vmatprep.subr.bf16.mxu0 0
      %1379 = vmatpush1.bf16.msra.mxu0 0
      %1380 = vmatprep.subr.bf16.mxu0 0
      %1381 = vmatpush1.bf16.msra.mxu0 0
      %1382 = vmatprep.subr.bf16.mxu0 0
      %1383 = vmatpush1.bf16.msra.mxu0 %v1368
      %1384 = vmatprep.subr.bf16.mxu0 0
      %1385 = vmatpush1.bf16.msra.mxu0 %v1352
      %1386 = vmatprep.subr.bf16.mxu0 0
      %1387 = vmatpush2.bf16.msra.mxu0 0
      %1388 = vmatprep.subr.bf16.mxu0 0
      %1389 = vmatpush2.bf16.msra.mxu0 0
      %1390 = vmatprep.subr.bf16.mxu0 0
      %1391 = vmatpush2.bf16.msra.mxu0 0
      %1392 = vmatprep.subr.bf16.mxu0 0
      %1393 = vmatpush2.bf16.msra.mxu0 0
      %1394 = vmatprep.subr.bf16.mxu0 0
      %1395 = vmatpush2.bf16.msra.mxu0 0
      %1396 = vmatprep.subr.bf16.mxu0 0
      %1397 = vmatpush2.bf16.msra.mxu0 0
      %1398 = vmatprep.subr.bf16.mxu0 0
      %1399 = vmatpush2.bf16.msra.mxu0 0
      %1400 = vmatprep.subr.bf16.mxu0 0
      %1401 = vmatpush2.bf16.msra.mxu0 0
      %1402 = vmatprep.mubr.bf16.mxu0 0
      %1403 = vmatmul.mubr.bf16.gmra.mxu0 %v1356
      %v1404 = vpop.f32.mrf.mxu0
      %v1405 = vadd.f32 0.0, %v1404
      %v1406 = vpop.f32.mrf.mxu0
      %v1407 = vpop.f32.mrf.mxu0
      %v1408 = vadd.f32 0.0, %v1407
      %v1409 = vpop.f32.mrf.mxu0
      %1410 = vmatprep.mubr.bf16.mxu0 0
      %1411 = vmatmul.mubr.bf16.gmra.mxu0 %v1359
      %v1412 = vpop.f32.mrf.mxu0
      %v1413 = vadd.f32 0.0, %v1412
      %v1414 = vpop.f32.mrf.mxu0
      %v1415 = vpop.f32.mrf.mxu0
      %v1416 = vadd.f32 0.0, %v1415
      %v1417 = vpop.f32.mrf.mxu0
      %1418 = vmatprep.mubr.bf16.mxu0 0
      %1419 = vmatmul.mubr.bf16.gmra.mxu0 %v1362
      %v1420 = vpop.f32.mrf.mxu0
      %v1421 = vadd.f32 0.0, %v1420
      %v1422 = vpop.f32.mrf.mxu0
      %v1423 = vpop.f32.mrf.mxu0
      %v1424 = vadd.f32 0.0, %v1423
      %v1425 = vpop.f32.mrf.mxu0
      %1426 = vmatprep.mubr.bf16.mxu0 0
      %1427 = vmatmul.mubr.bf16.gmra.mxu0 %v1365
      %v1428 = vpop.f32.mrf.mxu0
      %v1429 = vadd.f32 0.0, %v1428
      %v1430 = vpop.f32.mrf.mxu0
      %v1431 = vpop.f32.mrf.mxu0
      %v1432 = vadd.f32 0.0, %v1431
      %v1433 = vpop.f32.mrf.mxu0
      %1434 = vdwg.mxu0
      %v1435 = vadd.f32 %v1280, %v1405
      %v1436 = vadd.f32 %v1283, %v1408
      %v1437 = vadd.f32 %v1288, %v1413
      %v1438 = vadd.f32 %v1291, %v1416
      %v1439 = vadd.f32 %v1296, %v1421
      %v1440 = vadd.f32 %v1299, %v1424
      %v1441 = vadd.f32 %v1304, %v1429
      %v1442 = vadd.f32 %v1307, %v1432
      %v1443 = vld [vmem:[%s214] sm:$0xff]
      %v1444 = vld [vmem:[%s214 + $0x8] sm:$0xff]
      %v1445 = vld [vmem:[%s214 + $0x10] sm:$0xff]
      %v1446 = vld [vmem:[%s214 + $0x18] sm:$0xff]
      %v1447 = vld [vmem:[%s214 + $0x20] sm:$0xff]
      %v1448 = vld [vmem:[%s214 + $0x28] sm:$0xff]
      %v1449 = vld [vmem:[%s214 + $0x30] sm:$0xff]
      %v1450 = vld [vmem:[%s214 + $0x38] sm:$0xff]
      %v1451 = vadd.f32 %v1435, %v1443
      %v1452 = vadd.f32 %v1436, %v1444
      %v1453 = vadd.f32 %v1437, %v1445
      %v1454 = vadd.f32 %v1438, %v1446
      %v1455 = vadd.f32 %v1439, %v1447
      %v1456 = vadd.f32 %v1440, %v1448
      %v1457 = vadd.f32 %v1441, %v1449
      %v1458 = vadd.f32 %v1442, %v1450
      %vm1459 = vcmask 64512
      %1460 = vst.msk [vmem:[%s223] sm:$0xff] %vm1459, %v1451
      %1461 = vst.msk [vmem:[%s223 + $0x8] sm:$0xff] %vm1459, %v1452
      %1462 = vst.msk [vmem:[%s223 + $0x10] sm:$0xff] %vm1459, %v1453
      %1463 = vst.msk [vmem:[%s223 + $0x18] sm:$0xff] %vm1459, %v1454
      %1464 = vst.msk [vmem:[%s223 + $0x20] sm:$0xff] %vm1459, %v1455
      %1465 = vst.msk [vmem:[%s223 + $0x28] sm:$0xff] %vm1459, %v1456
      %1466 = vst.msk [vmem:[%s223 + $0x30] sm:$0xff] %vm1459, %v1457
      %1467 = vst.msk [vmem:[%s223 + $0x38] sm:$0xff] %vm1459, %v1458
      %s1468 = smul.u32 8, %s18
      %p1469 = scmp.lt.s32.totalorder %s1468, 15
      %s1470 = scalar_select %p1469, %s1468, 15
      %p1471 = scmp.lt.s32.totalorder %s19, 0
      %s1472 = scalar_select %p1471, %s19, 0
      %s1473 = sadd.s32 %s1472, %s1470
      %s1474 = smul.addr %s1473, 8
      %s1475 = scalar_lea.vmem %s3, %s1474
      // Predicated region
      $region37: #{basic_block_forward.5} parent=31 // pred_check
        %p1476 = pneg %p121
      $region38: #{basic_block_forward.5} parent=31 // pred_check_branch
        %1478 = sbr.rel (%p1476) target = $region40
      $region39: #{basic_block_forward.5} parent=31 // pred_region
        %s1479 = smul.u32 8, %s18
      $region40: #{basic_block_forward.5} parent=31 // pred_fallthru
        _
    $region32: #{basic_block_forward.5} parent=5 // pred_fallthru
      _
    %p1480 = scmp.le.s32.totalorder 2, %s9
    // Predicated region
    $region41: #{basic_block_forward.5} parent=5 // pred_check
      %p1481 = pneg %p1480
    $region42: #{basic_block_forward.5} parent=5 // pred_check_branch
      %1483 = sbr.rel (%p1481) target = $region44
    $region43: #{basic_block_forward.5} parent=5 // pred_region
      %s1484 = ssub.s32 %s9, 2
      // Predicated region
      $region45: #{basic_block_forward.5} parent=43 // pred_check
        %p1485 = pneg %p127
      $region46: #{basic_block_forward.5} parent=43 // pred_check_branch
        %1487 = sbr.rel (%p1485) target = $region48
      $region47: #{basic_block_forward.5} parent=43 // pred_region
        %s1488 = smul.u32 8, %s20
        %p1489 = scmp.lt.s32.totalorder %s1488, 15
        %s1490 = scalar_select %p1489, %s1488, 15
        %p1491 = scmp.lt.s32.totalorder %s21, 0
        %s1492 = scalar_select %p1491, %s21, 0
        %s1493 = sadd.s32 %s1492, %s1490
        %s1494 = smul.addr %s1493, 8
        %s1495 = scalar_lea.vmem %s3, %s1494
      $region48: #{basic_block_forward.5} parent=43 // pred_fallthru
        _
    $region44: #{basic_block_forward.5} parent=5 // pred_fallthru
      _
  $region6: #{basic_block_forward.5} parent=0 // loop_footer
    %s13 = sadd.s32 1, %s9
  $region7: #{basic_block_forward.5} parent=0 // loop_footer_branch
    %8 = sbr.rel target = $region3
  $region8: #{basic_block_forward.5} parent=0 // loop_exit
    _

</llo_original>
